<compile_context>
chip_gen: v5e
topology: v5e:2x2
jax: 0.10.0
libtpu: 0.0.40
codegen_flags: <defaults>
</compile_context>

<pallas_src>
import functools

import jax
import jax.numpy as jnp
from jax import lax
from jax.experimental import pallas as pl
from jax.experimental.pallas import tpu as pltpu


# --------------------------------------------------------------------------------------
# Generation-aware VMEM helpers
# --------------------------------------------------------------------------------------
def _vmem_capacity():
    try:
        cap = int(pltpu.get_tpu_info().vmem_capacity_bytes)
    except Exception:
        cap = 64 * 1024 * 1024          # conservative (v7x per-TC) fallback
    return max(cap, 32 * 1024 * 1024)


def _vmem_limit_bytes(estimate, cap):
    # generous margin over the estimate, but always leave headroom under the capacity
    return int(max(24 << 20, min(cap - (4 << 20), int(estimate * 1.5) + (4 << 20))))


def _tree_reduce(op, xs):
    """Pairwise (log-depth) reduction instead of a serial V-deep VPU chain."""
    xs = list(xs)
    while len(xs) > 1:
        nxt = [op(xs[i], xs[i + 1]) for i in range(0, len(xs) - 1, 2)]
        if len(xs) % 2 == 1:
            nxt.append(xs[-1])
        xs = nxt
    return xs[0]


# --------------------------------------------------------------------------------------
# Time-chunked fused bidirectional LSTM kernel (one pallas_call per layer)
#
# Rows-not-lanes layout: per step the cell state is (2B, Hh) -- rows [0:B] forward,
# rows [B:2B] backward -- and the recurrent matmul is
#   [[h_f, 0], [0, h_b]] (2B, 2Hh)  @  [W_hh_f.T ; W_hh_b.T] (2Hh, 4Hh)
# Gate columns are PyTorch order [i | f | g | o], each Hh wide.
# --------------------------------------------------------------------------------------
def _bilstm_kernel(xf_ref, xb_ref, wihf_ref, wihb_ref, whh_ref, b_ref,
                   outf_ref, outb_ref,
                   h_ref, c_ref, gxf_ref, gxb_ref, *, T, B, Hh):
    # xf_ref / xb_ref : (T*B, D)  time-major chunk c / mirrored chunk C-1-c
    # wihf/wihb       : (D, 4*Hh) bf16 per-direction input->gate weights
    # whh_ref         : (2*Hh, 4*Hh) bf16 stacked recurrent weights
    # b_ref           : (2, 4*Hh) f32, row 0 = fwd (b_ih+b_hh), row 1 = bwd
    # outf/outb       : (T*B, Hh) f32 per-direction outputs for this chunk
    # h_ref/c_ref     : (2*B, Hh) f32 carries across chunks
    # gxf/gxb         : (T*B, 4*Hh) bf16 hoisted input-projection scratch

    @pl.when(pl.program_id(0) == 0)
    def _init():
        h_ref[...] = jnp.zeros_like(h_ref)
        c_ref[...] = jnp.zeros_like(c_ref)

    # Hoisted per-chunk input projections: two well-shaped MXU matmuls, bf16 scratch.
    gxf_ref[...] = jnp.dot(xf_ref[...].astype(jnp.bfloat16), wihf_ref[...],
                           preferred_element_type=jnp.float32).astype(jnp.bfloat16)
    gxb_ref[...] = jnp.dot(xb_ref[...].astype(jnp.bfloat16), wihb_ref[...],
                           preferred_element_type=jnp.float32).astype(jnp.bfloat16)

    whh = whh_ref[...]                                           # (2Hh, 4Hh) bf16

    # Hoisted per-direction bias broadcast and the static block-diagonal mask.
    bias = jnp.concatenate(
        [jnp.broadcast_to(b_ref[0:1, :], (B, 4 * Hh)),
         jnp.broadcast_to(b_ref[1:2, :], (B, 4 * Hh))], axis=0)  # (2B, 4Hh) f32
    row = lax.broadcasted_iota(jnp.int32, (2 * B, 2 * Hh), 0)
    col = lax.broadcasted_iota(jnp.int32, (2 * B, 2 * Hh), 1)
    diag_mask = (row < B) == (col < Hh)                          # (2B, 2Hh) bool

    h = h_ref[...]                                               # (2B, Hh) f32 carries
    c_t = c_ref[...]

    # Fully unrolled in-chunk recurrence (T is static and modest) -> static slices,
    # LLO scheduler can interleave the small matmul, EUP nonlinearities and stores.
    for tt in range(T):
        gxf = gxf_ref[pl.ds(tt * B, B), :]                       # fwd local time tt
        gxb = gxb_ref[pl.ds((T - 1 - tt) * B, B), :]             # bwd local time T-1-tt
        gx = jnp.concatenate([gxf, gxb], axis=0).astype(jnp.float32)   # (2B, 4Hh)

        # pack h into block-diagonal (2B, 2Hh) (pure VPU tile + select, no lane moves)
        hs = jnp.where(diag_mask, jnp.concatenate([h, h], axis=1), 0.0)
        gates = gx + bias + jnp.dot(hs.astype(jnp.bfloat16), whh,
                                    preferred_element_type=jnp.float32)  # (2B, 4Hh)

        i_g = jax.nn.sigmoid(gates[:, 0 * Hh:1 * Hh])
        f_g = jax.nn.sigmoid(gates[:, 1 * Hh:2 * Hh])
        g_g = jnp.tanh(gates[:, 2 * Hh:3 * Hh])
        o_g = jax.nn.sigmoid(gates[:, 3 * Hh:4 * Hh])

        c_t = f_g * c_t + i_g * g_g
        h = o_g * jnp.tanh(c_t)

        # forward half -> chunk-local time tt ; backward half -> chunk-local time T-1-tt
        outf_ref[pl.ds(tt * B, B), :] = h[0:B, :]
        outb_ref[pl.ds((T - 1 - tt) * B, B), :] = h[B:2 * B, :]

    h_ref[...] = h
    c_ref[...] = c_t


def _bilstm_vmem_bytes(T, B, D, Hh, x_itemsize):
    xblk = T * B * D * x_itemsize                                # one streamed x block
    oblk = T * B * Hh * 4                                        # one output block
    wts = 2 * (2 * D * 4 * Hh * 2 + 2 * Hh * 4 * Hh * 2 + 2 * 4 * Hh * 4)
    scr = 2 * T * B * 4 * Hh * 2 + 2 * 2 * B * Hh * 4
    return 2 * (2 * xblk) + 2 * (2 * oblk) + wts + scr           # double-buffered I/O


def _pick_time_chunk(L, B, D, Hh, x_itemsize, budget):
    """Largest time chunk T (divisor of L, (T*B)%8==0 block rule, bounded unroll) in budget."""
    cand = [t for t in range(1, L + 1)
            if L % t == 0 and ((t * B) % 8 == 0 or t == L)]
    fit = [t for t in cand if t <= 64 and
           _bilstm_vmem_bytes(t, B, D, Hh, x_itemsize) <= budget]
    return max(fit) if fit else min(cand)


def bilstm(x_lbd, p):
    """Bidirectional LSTM matching nn.LSTM(batch_first=True, bidirectional=True).

    x_lbd: (L, B, D) time-major input.  Returns (fwd, bwd) each (L, B, Hh) f32.
    """
    L, B, D = x_lbd.shape
    Hh = p["whh"].shape[0] // 2
    x2d = x_lbd.reshape(L * B, D)                                # free reshape (row-major)
    x_item = jnp.dtype(x2d.dtype).itemsize

    cap = _vmem_capacity()
    budget = min(int(cap * 0.5), 96 * 1024 * 1024)               # big chunks on v5e/v6e, v7x-safe
    T = _pick_time_chunk(L, B, D, Hh, x_item, budget)
    C = L // T
    vmem_limit = _vmem_limit_bytes(_bilstm_vmem_bytes(T, B, D, Hh, x_item), cap)

    out_f, out_b = pl.pallas_call(
        functools.partial(_bilstm_kernel, T=T, B=B, Hh=Hh),
        out_shape=(jax.ShapeDtypeStruct((L * B, Hh), jnp.float32),
                   jax.ShapeDtypeStruct((L * B, Hh), jnp.float32)),
        grid=(C,),
        in_specs=[
            pl.BlockSpec((T * B, D), lambda c: (c, 0)),              # x, forward chunk
            pl.BlockSpec((T * B, D), lambda c: (C - 1 - c, 0)),      # x, mirrored bwd chunk
            pl.BlockSpec((D, 4 * Hh), lambda c: (0, 0)),
            pl.BlockSpec((D, 4 * Hh), lambda c: (0, 0)),
            pl.BlockSpec((2 * Hh, 4 * Hh), lambda c: (0, 0)),
            pl.BlockSpec((2, 4 * Hh), lambda c: (0, 0)),
        ],
        out_specs=(pl.BlockSpec((T * B, Hh), lambda c: (c, 0)),
                   pl.BlockSpec((T * B, Hh), lambda c: (C - 1 - c, 0))),
        scratch_shapes=[
            pltpu.VMEM((2 * B, Hh), jnp.float32),                    # h carry
            pltpu.VMEM((2 * B, Hh), jnp.float32),                    # c carry
            pltpu.VMEM((T * B, 4 * Hh), jnp.bfloat16),               # gx fwd (bf16 scratch)
            pltpu.VMEM((T * B, 4 * Hh), jnp.bfloat16),               # gx bwd (bf16 scratch)
        ],
        compiler_params=pltpu.CompilerParams(
            dimension_semantics=("arbitrary",),                      # sequential recurrence
            vmem_limit_bytes=vmem_limit),
    )(x2d, x2d, p["wih_f"], p["wih_b"], p["whh"], p["b"])
    return out_f.reshape(L, B, Hh), out_b.reshape(L, B, Hh)


# --------------------------------------------------------------------------------------
# SoftDotAttention kernel: h_tilde = tanh(W_out @ [attn(ctx, h) ; h])
# ctx is consumed as a dense (rows, V*F) bf16 slab; per-view math uses static lane slices.
# --------------------------------------------------------------------------------------
def _attn_kernel(q_ref, ctx_ref, win_ref, wof_ref, woh_ref, out_ref, *, V, F):
    q = q_ref[...]                                               # (tn, HS) f32
    ctx = ctx_ref[...]                                           # (tn, V*F) bf16
    qb = q.astype(jnp.bfloat16)

    # target = linear_in(h)
    target = jnp.dot(qb, win_ref[...], preferred_element_type=jnp.float32)   # (tn, F)

    # Per-view logits + softmax with pairwise tree reductions (log-depth, not V-deep).
    views = [ctx[:, v * F:(v + 1) * F] for v in range(V)]        # static lane slices
    logits = [jnp.sum(cv * target, axis=-1, keepdims=True) for cv in views]  # V x (tn,1)

    m = _tree_reduce(jnp.maximum, logits)
    exps = [jnp.exp(lv - m) for lv in logits]
    denom = _tree_reduce(jnp.add, exps)
    weighted = _tree_reduce(jnp.add, [ev * cv for ev, cv in zip(exps, views)])  # (tn, F) f32
    weighted = weighted * pl.reciprocal(denom, approx=True)

    # h_tilde = tanh(linear_out([weighted ; q]))  (W_out split into feature / hidden halves)
    h_tilde = jnp.tanh(
        jnp.dot(weighted.astype(jnp.bfloat16), wof_ref[...],
                preferred_element_type=jnp.float32)
        + jnp.dot(qb, woh_ref[...], preferred_element_type=jnp.float32))      # (tn, HS)
    out_ref[...] = h_tilde.astype(out_ref.dtype)                 # bf16 store


def soft_dot_attention(q, ctx2d, ap, *, V, F):
    N, HS = q.shape
    cap = _vmem_capacity()
    budget = min(int(cap * 0.5), 96 * 1024 * 1024)               # larger tiles on 128 MiB parts
    ctx_item = jnp.dtype(ctx2d.dtype).itemsize                   # 2 with bf16 ctx streaming
    q_item = jnp.dtype(q.dtype).itemsize
    out_item = 2                                                 # bf16 h_tilde output

    # double-buffered inputs + double-buffered output, per row
    per_row = 2 * (ctx_item * V * F + q_item * HS) + 2 * out_item * HS
    tn = budget // max(per_row, 1)
    tn = max(8, min(4096, (tn // 8) * 8))
    if N > 8:
        # keep >=2 grid steps so v7x megacore can split the "parallel" axis across 2 TCs
        tn = min(tn, ((pl.cdiv(N, 2) + 7) // 8) * 8)
    tn = min(tn, ((N + 7) // 8) * 8)

    w_bytes = 2 * 2 * (HS * F + F * HS + HS * HS)
    vmem_limit = _vmem_limit_bytes(tn * per_row + w_bytes, cap)

    # No jnp.pad of ctx/q: pl.cdiv grid + Pallas ragged last block (rows are independent).
    out = pl.pallas_call(
        functools.partial(_attn_kernel, V=V, F=F),
        out_shape=jax.ShapeDtypeStruct((N, HS), jnp.bfloat16),
        grid=(pl.cdiv(N, tn),),
        in_specs=[
            pl.BlockSpec((tn, HS), lambda i: (i, 0)),
            pl.BlockSpec((tn, V * F), lambda i: (i, 0)),
            pl.BlockSpec((HS, F), lambda i: (0, 0)),
            pl.BlockSpec((F, HS), lambda i: (0, 0)),
            pl.BlockSpec((HS, HS), lambda i: (0, 0)),
        ],
        out_specs=pl.BlockSpec((tn, HS), lambda i: (i, 0)),
        compiler_params=pltpu.CompilerParams(
            dimension_semantics=("parallel",),
            vmem_limit_bytes=vmem_limit),
    )(q, ctx2d, ap["win_t"], ap["wof_t"], ap["woh_t"])
    return out


# --------------------------------------------------------------------------------------
# Full forward pass (dropouts are eval-mode identities, lengths unused as in PyTorch)
# --------------------------------------------------------------------------------------
def speaker_encoder_forward(feature, action_embeds, lengths, params):
    del lengths  # unused, as in the PyTorch module
    B, L, V, F = feature.shape
    HS = params["hidden_size"]

    # first bi-LSTM over action embeddings (kernel works time-major internally)
    x_lbd = jnp.transpose(action_embeds, (1, 0, 2))              # (L, B, F)   (1/V of feature)
    cf, cb = bilstm(x_lbd, params["lstm"])                       # 2 x (L, B, Hh)
    ctx_blh = jnp.transpose(jnp.concatenate([cf, cb], axis=-1), (1, 0, 2))  # (B, L, HS) small

    # attention runs batch-major so the big `feature` tensor is a free reshape (never moved)
    q = ctx_blh.reshape(B * L, HS)
    c2d = feature.reshape(B * L, V * F)
    if c2d.dtype != jnp.bfloat16:
        # TODO(synk): store/emit `feature` in bf16 upstream to avoid this conversion pass.
        c2d = c2d.astype(jnp.bfloat16)
    att = soft_dot_attention(q, c2d, params["attn"], V=V, F=F)   # (B*L, HS) bf16

    # second bi-LSTM over h_tilde
    x2_lbh = jnp.transpose(att.reshape(B, L, HS), (1, 0, 2))     # (L, B, HS)  (small)
    of, ob = bilstm(x2_lbh, params["post_lstm"])                 # 2 x (L, B, Hh)
    return jnp.transpose(jnp.concatenate([of, ob], axis=-1), (1, 0, 2))  # (B, L, HS) f32


# --------------------------------------------------------------------------------------
# Deterministic parameter initialization (PyTorch shapes, packed into kernel layout)
# --------------------------------------------------------------------------------------
def _make_lstm_params(key, d_in, hh):
    s = 1.0 / (hh ** 0.5)
    ks = jax.random.split(key, 8)

    def u(k, shape):
        return jax.random.uniform(k, shape, jnp.float32, -s, s)

    wih_f, whh_f = u(ks[0], (4 * hh, d_in)), u(ks[1], (4 * hh, hh))
    bih_f, bhh_f = u(ks[2], (4 * hh,)), u(ks[3], (4 * hh,))
    wih_b, whh_b = u(ks[4], (4 * hh, d_in)), u(ks[5], (4 * hh, hh))
    bih_b, bhh_b = u(ks[6], (4 * hh,)), u(ks[7], (4 * hh,))

    return {
        "wih_f": wih_f.T.astype(jnp.bfloat16),                    # (D, 4*Hh)  cols [i|f|g|o]
        "wih_b": wih_b.T.astype(jnp.bfloat16),                    # (D, 4*Hh)
        "whh": jnp.concatenate([whh_f.T, whh_b.T], axis=0).astype(jnp.bfloat16),  # (2*Hh, 4*Hh)
        "b": jnp.stack([bih_f + bhh_f, bih_b + bhh_b], axis=0),   # (2, 4*Hh) f32
    }


def _make_attn_params(key, feat, hs):
    k1, k2 = jax.random.split(key)
    s1 = 1.0 / (hs ** 0.5)
    s2 = 1.0 / ((feat + hs) ** 0.5)
    w_in = jax.random.uniform(k1, (feat, hs), jnp.float32, -s1, s1)          # linear_in.weight
    w_out = jax.random.uniform(k2, (hs, feat + hs), jnp.float32, -s2, s2)    # linear_out.weight
    return {"win_t": w_in.T.astype(jnp.bfloat16),                # (HS, F)
            "wof_t": w_out[:, :feat].T.astype(jnp.bfloat16),     # (F, HS)
            "woh_t": w_out[:, feat:].T.astype(jnp.bfloat16)}     # (HS, HS)


def init_params(key, feature_size, hidden_size):
    hh = hidden_size // 2
    k1, k2, k3 = jax.random.split(key, 3)
    return {
        "hidden_size": hidden_size,
        "lstm": _make_lstm_params(k1, feature_size, hh),
        "post_lstm": _make_lstm_params(k2, hidden_size, hh),
        "attn": _make_attn_params(k3, feature_size, hidden_size),
    }


if __name__ == "__main__":
    B, L, V, F, HS = 2, 8, 4, 128, 64   # batch, seq length, views, feature_size, hidden_size

    key = jax.random.PRNGKey(0)
    kf, ka, kp = jax.random.split(key, 3)
    # feature stored bf16 (per perf review: stream the dominant ctx slab in bf16)
    feature = jax.random.normal(kf, (B, L, V, F), jnp.float32).astype(jnp.bfloat16)
    action_embeds = jax.random.normal(ka, (B, L, F), jnp.float32)    # (B, L, feature_size)
    lengths = jnp.full((B,), L, jnp.int32)                           # unused (matches torch signature)

    params = init_params(kp, F, HS)

    fwd = jax.jit(functools.partial(speaker_encoder_forward, params=params))
    out = fwd(feature, action_embeds, lengths)
    jax.block_until_ready(out)

    assert out.shape == (B, L, HS) and out.dtype == jnp.float32
    assert bool(jnp.all(jnp.isfinite(out)))
    print("KERNEL_OK")
</pallas_src>

<mosaic_0001>
module attributes {stable_mosaic.version = 11 : i64} {
  func.func @_bilstm_kernel(%arg0: i32, %arg1: memref<16x128xf32, #tpu.memory_space<vmem>>, %arg2: memref<16x128xf32, #tpu.memory_space<vmem>>, %arg3: memref<128x128xbf16, #tpu.memory_space<vmem>>, %arg4: memref<128x128xbf16, #tpu.memory_space<vmem>>, %arg5: memref<64x128xbf16, #tpu.memory_space<vmem>>, %arg6: memref<2x128xf32, #tpu.memory_space<vmem>>, %arg7: memref<16x32xf32, #tpu.memory_space<vmem>>, %arg8: memref<16x32xf32, #tpu.memory_space<vmem>>, %arg9: memref<4x32xf32, #tpu.memory_space<vmem>>, %arg10: memref<4x32xf32, #tpu.memory_space<vmem>>, %arg11: memref<16x128xbf16, #tpu.memory_space<vmem>>, %arg12: memref<16x128xbf16, #tpu.memory_space<vmem>>) attributes {dimension_semantics = [#tpu.dimension_semantics<arbitrary>], iteration_bounds = array<i64: 1>, scalar_prefetch = 0 : i64, scratch_operands = 4 : i64, tpu.core_type = #tpu.core_type<tc>, window_params = [{transform_indices = @transform_0, window_bounds = array<i64: 16, 128>}, {transform_indices = @transform_1, window_bounds = array<i64: 16, 128>}, {pipeline_mode = #tpu.pipeline_mode<synchronous>, transform_indices = @transform_2, window_bounds = array<i64: 128, 128>}, {pipeline_mode = #tpu.pipeline_mode<synchronous>, transform_indices = @transform_3, window_bounds = array<i64: 128, 128>}, {pipeline_mode = #tpu.pipeline_mode<synchronous>, transform_indices = @transform_4, window_bounds = array<i64: 64, 128>}, {pipeline_mode = #tpu.pipeline_mode<synchronous>, transform_indices = @transform_5, window_bounds = array<i64: 2, 128>}, {transform_indices = @transform_6, window_bounds = array<i64: 16, 32>}, {transform_indices = @transform_7, window_bounds = array<i64: 16, 32>}]} {
    %c0_i32 = arith.constant 0 : i32
    %0 = arith.cmpi eq, %arg0, %c0_i32 : i32
    %1 = arith.extui %0 : i1 to i32
    %c0_i32_0 = arith.constant 0 : i32
    %2 = arith.cmpi ne, %1, %c0_i32_0 : i32
    scf.if %2 {
      %cst_124 = arith.constant 0.000000e+00 : f32
      %355 = vector.broadcast %cst_124 : f32 to vector<4x32xf32>
      %c0_125 = arith.constant 0 : index
      %c0_126 = arith.constant 0 : index
      %356 = vector.load %arg9[%c0_125, %c0_126] : memref<4x32xf32, #tpu.memory_space<vmem>>, vector<4x32xf32>
      tpu.vector_store %arg9[%c0_125, %c0_126], %355 {strides = array<i32>} : memref<4x32xf32, #tpu.memory_space<vmem>>, vector<4x32xf32>,
      %cst_127 = arith.constant 0.000000e+00 : f32
      %357 = vector.broadcast %cst_127 : f32 to vector<4x32xf32>
      %c0_128 = arith.constant 0 : index
      %c0_129 = arith.constant 0 : index
      %358 = vector.load %arg10[%c0_128, %c0_129] : memref<4x32xf32, #tpu.memory_space<vmem>>, vector<4x32xf32>
      tpu.vector_store %arg10[%c0_128, %c0_129], %357 {strides = array<i32>} : memref<4x32xf32, #tpu.memory_space<vmem>>, vector<4x32xf32>,
    } else {
    }
    %c0 = arith.constant 0 : index
    %c0_1 = arith.constant 0 : index
    %3 = vector.load %arg1[%c0, %c0_1] : memref<16x128xf32, #tpu.memory_space<vmem>>, vector<16x128xf32>
    %4 = arith.truncf %3 : vector<16x128xf32> to vector<16x128xbf16>
    %c0_2 = arith.constant 0 : index
    %c0_3 = arith.constant 0 : index
    %5 = vector.load %arg3[%c0_2, %c0_3] : memref<128x128xbf16, #tpu.memory_space<vmem>>, vector<128x128xbf16>
    %cst = arith.constant dense<0.000000e+00> : vector<16x128xf32>
    %6 = tpu.matmul %4, %5, %cst {dimension_numbers = #tpu.dot_dimension_numbers<[1], [0], [0], [1], [0, 0, 1, 1], [], []>} : vector<16x128xbf16>, vector<128x128xbf16>, vector<16x128xf32> -> vector<16x128xf32>
    %7 = arith.truncf %6 : vector<16x128xf32> to vector<16x128xbf16>
    %c0_4 = arith.constant 0 : index
    %c0_5 = arith.constant 0 : index
    %8 = vector.load %arg11[%c0_4, %c0_5] : memref<16x128xbf16, #tpu.memory_space<vmem>>, vector<16x128xbf16>
    tpu.vector_store %arg11[%c0_4, %c0_5], %7 {strides = array<i32>} : memref<16x128xbf16, #tpu.memory_space<vmem>>, vector<16x128xbf16>,
    %c0_6 = arith.constant 0 : index
    %c0_7 = arith.constant 0 : index
    %9 = vector.load %arg2[%c0_6, %c0_7] : memref<16x128xf32, #tpu.memory_space<vmem>>, vector<16x128xf32>
    %10 = arith.truncf %9 : vector<16x128xf32> to vector<16x128xbf16>
    %c0_8 = arith.constant 0 : index
    %c0_9 = arith.constant 0 : index
    %11 = vector.load %arg4[%c0_8, %c0_9] : memref<128x128xbf16, #tpu.memory_space<vmem>>, vector<128x128xbf16>
    %cst_10 = arith.constant dense<0.000000e+00> : vector<16x128xf32>
    %12 = tpu.matmul %10, %11, %cst_10 {dimension_numbers = #tpu.dot_dimension_numbers<[1], [0], [0], [1], [0, 0, 1, 1], [], []>} : vector<16x128xbf16>, vector<128x128xbf16>, vector<16x128xf32> -> vector<16x128xf32>
    %13 = arith.truncf %12 : vector<16x128xf32> to vector<16x128xbf16>
    %c0_11 = arith.constant 0 : index
    %c0_12 = arith.constant 0 : index
    %14 = vector.load %arg12[%c0_11, %c0_12] : memref<16x128xbf16, #tpu.memory_space<vmem>>, vector<16x128xbf16>
    tpu.vector_store %arg12[%c0_11, %c0_12], %13 {strides = array<i32>} : memref<16x128xbf16, #tpu.memory_space<vmem>>, vector<16x128xbf16>,
    %c0_13 = arith.constant 0 : index
    %c0_14 = arith.constant 0 : index
    %15 = vector.load %arg5[%c0_13, %c0_14] : memref<64x128xbf16, #tpu.memory_space<vmem>>, vector<64x128xbf16>
    %c0_15 = arith.constant 0 : index
    %c0_16 = arith.constant 0 : index
    %16 = vector.load %arg6[%c0_15, %c0_16] : memref<2x128xf32, #tpu.memory_space<vmem>>, vector<1x128xf32>
    %17 = vector.shape_cast %16 : vector<1x128xf32> to vector<1x128xf32>
    %18 = vector.broadcast %17 : vector<1x128xf32> to vector<2x128xf32>
    %c1 = arith.constant 1 : index
    %c0_17 = arith.constant 0 : index
    %19 = vector.load %arg6[%c1, %c0_17] : memref<2x128xf32, #tpu.memory_space<vmem>>, vector<1x128xf32>
    %20 = vector.shape_cast %19 : vector<1x128xf32> to vector<1x128xf32>
    %21 = vector.broadcast %20 : vector<1x128xf32> to vector<2x128xf32>
    %22 = tpu.concatenate %18, %21 in 0 : vector<2x128xf32>, vector<2x128xf32> -> vector<4x128xf32>
    %23 = tpu.iota {dimensions = array<i32: 0>} : vector<4x64xi32>
    %24 = tpu.iota {dimensions = array<i32: 1>} : vector<4x64xi32>
    %c2_i32 = arith.constant 2 : i32
    %25 = vector.broadcast %c2_i32 : i32 to vector<4x64xi32>
    %26 = arith.cmpi slt, %23, %25 : vector<4x64xi32>
    %c32_i32 = arith.constant 32 : i32
    %27 = vector.broadcast %c32_i32 : i32 to vector<4x64xi32>
    %28 = arith.cmpi slt, %24, %27 : vector<4x64xi32>
    %29 = arith.xori %26, %28 : vector<4x64xi1>
    %cst_18 = arith.constant dense<true> : vector<4x64xi1>
    %30 = arith.xori %29, %cst_18 : vector<4x64xi1>
    %c0_19 = arith.constant 0 : index
    %c0_20 = arith.constant 0 : index
    %31 = vector.load %arg9[%c0_19, %c0_20] : memref<4x32xf32, #tpu.memory_space<vmem>>, vector<4x32xf32>
    %c0_21 = arith.constant 0 : index
    %c0_22 = arith.constant 0 : index
    %32 = vector.load %arg10[%c0_21, %c0_22] : memref<4x32xf32, #tpu.memory_space<vmem>>, vector<4x32xf32>
    %c0_23 = arith.constant 0 : index
    %c0_24 = arith.constant 0 : index
    %33 = vector.load %arg11[%c0_23, %c0_24] : memref<16x128xbf16, #tpu.memory_space<vmem>>, vector<2x128xbf16>
    %c14 = arith.constant 14 : index
    %c0_25 = arith.constant 0 : index
    %34 = vector.load %arg12[%c14, %c0_25] : memref<16x128xbf16, #tpu.memory_space<vmem>>, vector<2x128xbf16>
    %35 = tpu.concatenate %33, %34 in 0 : vector<2x128xbf16>, vector<2x128xbf16> -> vector<4x128xbf16>
    %36 = arith.extf %35 : vector<4x128xbf16> to vector<4x128xf32>
    %37 = tpu.concatenate %31, %31 in 1 : vector<4x32xf32>, vector<4x32xf32> -> vector<4x64xf32>
    %cst_26 = arith.constant 0.000000e+00 : f32
    %38 = vector.broadcast %cst_26 : f32 to vector<4x64xf32>
    %39 = arith.select %30, %37, %38 : vector<4x64xi1>, vector<4x64xf32>
    %40 = arith.addf %36, %22 : vector<4x128xf32>
    %41 = arith.truncf %39 : vector<4x64xf32> to vector<4x64xbf16>
    %cst_27 = arith.constant dense<0.000000e+00> : vector<4x128xf32>
    %42 = tpu.matmul %41, %15, %cst_27 {dimension_numbers = #tpu.dot_dimension_numbers<[1], [0], [0], [1], [0, 0, 1, 1], [], []>} : vector<4x64xbf16>, vector<64x128xbf16>, vector<4x128xf32> -> vector<4x128xf32>
    %43 = arith.addf %40, %42 : vector<4x128xf32>
    %44 = vector.extract_strided_slice %43 {offsets = [0, 0], sizes = [4, 32], strides = [1, 1]} : vector<4x128xf32> to vector<4x32xf32>
    %45 = arith.negf %44 : vector<4x32xf32>
    %46 = math.exp %45 : vector<4x32xf32>
    %cst_28 = arith.constant 1.000000e+00 : f32
    %47 = vector.broadcast %cst_28 : f32 to vector<4x32xf32>
    %48 = arith.addf %47, %46 : vector<4x32xf32>
    %49 = arith.divf %47, %48 : vector<4x32xf32>
    %50 = vector.extract_strided_slice %43 {offsets = [0, 32], sizes = [4, 32], strides = [1, 1]} : vector<4x128xf32> to vector<4x32xf32>
    %51 = arith.negf %50 : vector<4x32xf32>
    %52 = math.exp %51 : vector<4x32xf32>
    %cst_29 = arith.constant 1.000000e+00 : f32
    %53 = vector.broadcast %cst_29 : f32 to vector<4x32xf32>
    %54 = arith.addf %53, %52 : vector<4x32xf32>
    %55 = arith.divf %53, %54 : vector<4x32xf32>
    %56 = vector.extract_strided_slice %43 {offsets = [0, 64], sizes = [4, 32], strides = [1, 1]} : vector<4x128xf32> to vector<4x32xf32>
    %57 = math.tanh %56 : vector<4x32xf32>
    %58 = vector.extract_strided_slice %43 {offsets = [0, 96], sizes = [4, 32], strides = [1, 1]} : vector<4x128xf32> to vector<4x32xf32>
    %59 = arith.negf %58 : vector<4x32xf32>
    %60 = math.exp %59 : vector<4x32xf32>
    %cst_30 = arith.constant 1.000000e+00 : f32
    %61 = vector.broadcast %cst_30 : f32 to vector<4x32xf32>
    %62 = arith.addf %61, %60 : vector<4x32xf32>
    %63 = arith.divf %61, %62 : vector<4x32xf32>
    %64 = arith.mulf %55, %32 : vector<4x32xf32>
    %65 = arith.mulf %49, %57 : vector<4x32xf32>
    %66 = arith.addf %64, %65 : vector<4x32xf32>
    %67 = math.tanh %66 : vector<4x32xf32>
    %68 = arith.mulf %63, %67 : vector<4x32xf32>
    %69 = vector.extract_strided_slice %68 {offsets = [0, 0], sizes = [2, 32], strides = [1, 1]} : vector<4x32xf32> to vector<2x32xf32>
    %c0_31 = arith.constant 0 : index
    %c0_32 = arith.constant 0 : index
    %70 = vector.load %arg7[%c0_31, %c0_32] : memref<16x32xf32, #tpu.memory_space<vmem>>, vector<2x32xf32>
    tpu.vector_store %arg7[%c0_31, %c0_32], %69 {strides = array<i32>} : memref<16x32xf32, #tpu.memory_space<vmem>>, vector<2x32xf32>,
    %71 = vector.extract_strided_slice %68 {offsets = [2, 0], sizes = [2, 32], strides = [1, 1]} : vector<4x32xf32> to vector<2x32xf32>
    %c14_33 = arith.constant 14 : index
    %c0_34 = arith.constant 0 : index
    %72 = vector.load %arg8[%c14_33, %c0_34] : memref<16x32xf32, #tpu.memory_space<vmem>>, vector<2x32xf32>
    tpu.vector_store %arg8[%c14_33, %c0_34], %71 {strides = array<i32>} : memref<16x32xf32, #tpu.memory_space<vmem>>, vector<2x32xf32>,
    %c2 = arith.constant 2 : index
    %c0_35 = arith.constant 0 : index
    %73 = vector.load %arg11[%c2, %c0_35] : memref<16x128xbf16, #tpu.memory_space<vmem>>, vector<2x128xbf16>
    %c12 = arith.constant 12 : index
    %c0_36 = arith.constant 0 : index
    %74 = vector.load %arg12[%c12, %c0_36] : memref<16x128xbf16, #tpu.memory_space<vmem>>, vector<2x128xbf16>
    %75 = tpu.concatenate %73, %74 in 0 : vector<2x128xbf16>, vector<2x128xbf16> -> vector<4x128xbf16>
    %76 = arith.extf %75 : vector<4x128xbf16> to vector<4x128xf32>
    %77 = tpu.concatenate %68, %68 in 1 : vector<4x32xf32>, vector<4x32xf32> -> vector<4x64xf32>
    %cst_37 = arith.constant 0.000000e+00 : f32
    %78 = vector.broadcast %cst_37 : f32 to vector<4x64xf32>
    %79 = arith.select %30, %77, %78 : vector<4x64xi1>, vector<4x64xf32>
    %80 = arith.addf %76, %22 : vector<4x128xf32>
    %81 = arith.truncf %79 : vector<4x64xf32> to vector<4x64xbf16>
    %cst_38 = arith.constant dense<0.000000e+00> : vector<4x128xf32>
    %82 = tpu.matmul %81, %15, %cst_38 {dimension_numbers = #tpu.dot_dimension_numbers<[1], [0], [0], [1], [0, 0, 1, 1], [], []>} : vector<4x64xbf16>, vector<64x128xbf16>, vector<4x128xf32> -> vector<4x128xf32>
    %83 = arith.addf %80, %82 : vector<4x128xf32>
    %84 = vector.extract_strided_slice %83 {offsets = [0, 0], sizes = [4, 32], strides = [1, 1]} : vector<4x128xf32> to vector<4x32xf32>
    %85 = arith.negf %84 : vector<4x32xf32>
    %86 = math.exp %85 : vector<4x32xf32>
    %cst_39 = arith.constant 1.000000e+00 : f32
    %87 = vector.broadcast %cst_39 : f32 to vector<4x32xf32>
    %88 = arith.addf %87, %86 : vector<4x32xf32>
    %89 = arith.divf %87, %88 : vector<4x32xf32>
    %90 = vector.extract_strided_slice %83 {offsets = [0, 32], sizes = [4, 32], strides = [1, 1]} : vector<4x128xf32> to vector<4x32xf32>
    %91 = arith.negf %90 : vector<4x32xf32>
    %92 = math.exp %91 : vector<4x32xf32>
    %cst_40 = arith.constant 1.000000e+00 : f32
    %93 = vector.broadcast %cst_40 : f32 to vector<4x32xf32>
    %94 = arith.addf %93, %92 : vector<4x32xf32>
    %95 = arith.divf %93, %94 : vector<4x32xf32>
    %96 = vector.extract_strided_slice %83 {offsets = [0, 64], sizes = [4, 32], strides = [1, 1]} : vector<4x128xf32> to vector<4x32xf32>
    %97 = math.tanh %96 : vector<4x32xf32>
    %98 = vector.extract_strided_slice %83 {offsets = [0, 96], sizes = [4, 32], strides = [1, 1]} : vector<4x128xf32> to vector<4x32xf32>
    %99 = arith.negf %98 : vector<4x32xf32>
    %100 = math.exp %99 : vector<4x32xf32>
    %cst_41 = arith.constant 1.000000e+00 : f32
    %101 = vector.broadcast %cst_41 : f32 to vector<4x32xf32>
    %102 = arith.addf %101, %100 : vector<4x32xf32>
    %103 = arith.divf %101, %102 : vector<4x32xf32>
    %104 = arith.mulf %95, %66 : vector<4x32xf32>
    %105 = arith.mulf %89, %97 : vector<4x32xf32>
    %106 = arith.addf %104, %105 : vector<4x32xf32>
    %107 = math.tanh %106 : vector<4x32xf32>
    %108 = arith.mulf %103, %107 : vector<4x32xf32>
    %109 = vector.extract_strided_slice %108 {offsets = [0, 0], sizes = [2, 32], strides = [1, 1]} : vector<4x32xf32> to vector<2x32xf32>
    %c2_42 = arith.constant 2 : index
    %c0_43 = arith.constant 0 : index
    %110 = vector.load %arg7[%c2_42, %c0_43] : memref<16x32xf32, #tpu.memory_space<vmem>>, vector<2x32xf32>
    tpu.vector_store %arg7[%c2_42, %c0_43], %109 {strides = array<i32>} : memref<16x32xf32, #tpu.memory_space<vmem>>, vector<2x32xf32>,
    %111 = vector.extract_strided_slice %108 {offsets = [2, 0], sizes = [2, 32], strides = [1, 1]} : vector<4x32xf32> to vector<2x32xf32>
    %c12_44 = arith.constant 12 : index
    %c0_45 = arith.constant 0 : index
    %112 = vector.load %arg8[%c12_44, %c0_45] : memref<16x32xf32, #tpu.memory_space<vmem>>, vector<2x32xf32>
    tpu.vector_store %arg8[%c12_44, %c0_45], %111 {strides = array<i32>} : memref<16x32xf32, #tpu.memory_space<vmem>>, vector<2x32xf32>,
    %c4 = arith.constant 4 : index
    %c0_46 = arith.constant 0 : index
    %113 = vector.load %arg11[%c4, %c0_46] : memref<16x128xbf16, #tpu.memory_space<vmem>>, vector<2x128xbf16>
    %c10 = arith.constant 10 : index
    %c0_47 = arith.constant 0 : index
    %114 = vector.load %arg12[%c10, %c0_47] : memref<16x128xbf16, #tpu.memory_space<vmem>>, vector<2x128xbf16>
    %115 = tpu.concatenate %113, %114 in 0 : vector<2x128xbf16>, vector<2x128xbf16> -> vector<4x128xbf16>
    %116 = arith.extf %115 : vector<4x128xbf16> to vector<4x128xf32>
    %117 = tpu.concatenate %108, %108 in 1 : vector<4x32xf32>, vector<4x32xf32> -> vector<4x64xf32>
    %cst_48 = arith.constant 0.000000e+00 : f32
    %118 = vector.broadcast %cst_48 : f32 to vector<4x64xf32>
    %119 = arith.select %30, %117, %118 : vector<4x64xi1>, vector<4x64xf32>
    %120 = arith.addf %116, %22 : vector<4x128xf32>
    %121 = arith.truncf %119 : vector<4x64xf32> to vector<4x64xbf16>
    %cst_49 = arith.constant dense<0.000000e+00> : vector<4x128xf32>
    %122 = tpu.matmul %121, %15, %cst_49 {dimension_numbers = #tpu.dot_dimension_numbers<[1], [0], [0], [1], [0, 0, 1, 1], [], []>} : vector<4x64xbf16>, vector<64x128xbf16>, vector<4x128xf32> -> vector<4x128xf32>
    %123 = arith.addf %120, %122 : vector<4x128xf32>
    %124 = vector.extract_strided_slice %123 {offsets = [0, 0], sizes = [4, 32], strides = [1, 1]} : vector<4x128xf32> to vector<4x32xf32>
    %125 = arith.negf %124 : vector<4x32xf32>
    %126 = math.exp %125 : vector<4x32xf32>
    %cst_50 = arith.constant 1.000000e+00 : f32
    %127 = vector.broadcast %cst_50 : f32 to vector<4x32xf32>
    %128 = arith.addf %127, %126 : vector<4x32xf32>
    %129 = arith.divf %127, %128 : vector<4x32xf32>
    %130 = vector.extract_strided_slice %123 {offsets = [0, 32], sizes = [4, 32], strides = [1, 1]} : vector<4x128xf32> to vector<4x32xf32>
    %131 = arith.negf %130 : vector<4x32xf32>
    %132 = math.exp %131 : vector<4x32xf32>
    %cst_51 = arith.constant 1.000000e+00 : f32
    %133 = vector.broadcast %cst_51 : f32 to vector<4x32xf32>
    %134 = arith.addf %133, %132 : vector<4x32xf32>
    %135 = arith.divf %133, %134 : vector<4x32xf32>
    %136 = vector.extract_strided_slice %123 {offsets = [0, 64], sizes = [4, 32], strides = [1, 1]} : vector<4x128xf32> to vector<4x32xf32>
    %137 = math.tanh %136 : vector<4x32xf32>
    %138 = vector.extract_strided_slice %123 {offsets = [0, 96], sizes = [4, 32], strides = [1, 1]} : vector<4x128xf32> to vector<4x32xf32>
    %139 = arith.negf %138 : vector<4x32xf32>
    %140 = math.exp %139 : vector<4x32xf32>
    %cst_52 = arith.constant 1.000000e+00 : f32
    %141 = vector.broadcast %cst_52 : f32 to vector<4x32xf32>
    %142 = arith.addf %141, %140 : vector<4x32xf32>
    %143 = arith.divf %141, %142 : vector<4x32xf32>
    %144 = arith.mulf %135, %106 : vector<4x32xf32>
    %145 = arith.mulf %129, %137 : vector<4x32xf32>
    %146 = arith.addf %144, %145 : vector<4x32xf32>
    %147 = math.tanh %146 : vector<4x32xf32>
    %148 = arith.mulf %143, %147 : vector<4x32xf32>
    %149 = vector.extract_strided_slice %148 {offsets = [0, 0], sizes = [2, 32], strides = [1, 1]} : vector<4x32xf32> to vector<2x32xf32>
    %c4_53 = arith.constant 4 : index
    %c0_54 = arith.constant 0 : index
    %150 = vector.load %arg7[%c4_53, %c0_54] : memref<16x32xf32, #tpu.memory_space<vmem>>, vector<2x32xf32>
    tpu.vector_store %arg7[%c4_53, %c0_54], %149 {strides = array<i32>} : memref<16x32xf32, #tpu.memory_space<vmem>>, vector<2x32xf32>,
    %151 = vector.extract_strided_slice %148 {offsets = [2, 0], sizes = [2, 32], strides = [1, 1]} : vector<4x32xf32> to vector<2x32xf32>
    %c10_55 = arith.constant 10 : index
    %c0_56 = arith.constant 0 : index
    %152 = vector.load %arg8[%c10_55, %c0_56] : memref<16x32xf32, #tpu.memory_space<vmem>>, vector<2x32xf32>
    tpu.vector_store %arg8[%c10_55, %c0_56], %151 {strides = array<i32>} : memref<16x32xf32, #tpu.memory_space<vmem>>, vector<2x32xf32>,
    %c6 = arith.constant 6 : index
    %c0_57 = arith.constant 0 : index
    %153 = vector.load %arg11[%c6, %c0_57] : memref<16x128xbf16, #tpu.memory_space<vmem>>, vector<2x128xbf16>
    %c8 = arith.constant 8 : index
    %c0_58 = arith.constant 0 : index
    %154 = vector.load %arg12[%c8, %c0_58] : memref<16x128xbf16, #tpu.memory_space<vmem>>, vector<2x128xbf16>
    %155 = tpu.concatenate %153, %154 in 0 : vector<2x128xbf16>, vector<2x128xbf16> -> vector<4x128xbf16>
    %156 = arith.extf %155 : vector<4x128xbf16> to vector<4x128xf32>
    %157 = tpu.concatenate %148, %148 in 1 : vector<4x32xf32>, vector<4x32xf32> -> vector<4x64xf32>
    %cst_59 = arith.constant 0.000000e+00 : f32
    %158 = vector.broadcast %cst_59 : f32 to vector<4x64xf32>
    %159 = arith.select %30, %157, %158 : vector<4x64xi1>, vector<4x64xf32>
    %160 = arith.addf %156, %22 : vector<4x128xf32>
    %161 = arith.truncf %159 : vector<4x64xf32> to vector<4x64xbf16>
    %cst_60 = arith.constant dense<0.000000e+00> : vector<4x128xf32>
    %162 = tpu.matmul %161, %15, %cst_60 {dimension_numbers = #tpu.dot_dimension_numbers<[1], [0], [0], [1], [0, 0, 1, 1], [], []>} : vector<4x64xbf16>, vector<64x128xbf16>, vector<4x128xf32> -> vector<4x128xf32>
    %163 = arith.addf %160, %162 : vector<4x128xf32>
    %164 = vector.extract_strided_slice %163 {offsets = [0, 0], sizes = [4, 32], strides = [1, 1]} : vector<4x128xf32> to vector<4x32xf32>
    %165 = arith.negf %164 : vector<4x32xf32>
    %166 = math.exp %165 : vector<4x32xf32>
    %cst_61 = arith.constant 1.000000e+00 : f32
    %167 = vector.broadcast %cst_61 : f32 to vector<4x32xf32>
    %168 = arith.addf %167, %166 : vector<4x32xf32>
    %169 = arith.divf %167, %168 : vector<4x32xf32>
    %170 = vector.extract_strided_slice %163 {offsets = [0, 32], sizes = [4, 32], strides = [1, 1]} : vector<4x128xf32> to vector<4x32xf32>
    %171 = arith.negf %170 : vector<4x32xf32>
    %172 = math.exp %171 : vector<4x32xf32>
    %cst_62 = arith.constant 1.000000e+00 : f32
    %173 = vector.broadcast %cst_62 : f32 to vector<4x32xf32>
    %174 = arith.addf %173, %172 : vector<4x32xf32>
    %175 = arith.divf %173, %174 : vector<4x32xf32>
    %176 = vector.extract_strided_slice %163 {offsets = [0, 64], sizes = [4, 32], strides = [1, 1]} : vector<4x128xf32> to vector<4x32xf32>
    %177 = math.tanh %176 : vector<4x32xf32>
    %178 = vector.extract_strided_slice %163 {offsets = [0, 96], sizes = [4, 32], strides = [1, 1]} : vector<4x128xf32> to vector<4x32xf32>
    %179 = arith.negf %178 : vector<4x32xf32>
    %180 = math.exp %179 : vector<4x32xf32>
    %cst_63 = arith.constant 1.000000e+00 : f32
    %181 = vector.broadcast %cst_63 : f32 to vector<4x32xf32>
    %182 = arith.addf %181, %180 : vector<4x32xf32>
    %183 = arith.divf %181, %182 : vector<4x32xf32>
    %184 = arith.mulf %175, %146 : vector<4x32xf32>
    %185 = arith.mulf %169, %177 : vector<4x32xf32>
    %186 = arith.addf %184, %185 : vector<4x32xf32>
    %187 = math.tanh %186 : vector<4x32xf32>
    %188 = arith.mulf %183, %187 : vector<4x32xf32>
    %189 = vector.extract_strided_slice %188 {offsets = [0, 0], sizes = [2, 32], strides = [1, 1]} : vector<4x32xf32> to vector<2x32xf32>
    %c6_64 = arith.constant 6 : index
    %c0_65 = arith.constant 0 : index
    %190 = vector.load %arg7[%c6_64, %c0_65] : memref<16x32xf32, #tpu.memory_space<vmem>>, vector<2x32xf32>
    tpu.vector_store %arg7[%c6_64, %c0_65], %189 {strides = array<i32>} : memref<16x32xf32, #tpu.memory_space<vmem>>, vector<2x32xf32>,
    %191 = vector.extract_strided_slice %188 {offsets = [2, 0], sizes = [2, 32], strides = [1, 1]} : vector<4x32xf32> to vector<2x32xf32>
    %c8_66 = arith.constant 8 : index
    %c0_67 = arith.constant 0 : index
    %192 = vector.load %arg8[%c8_66, %c0_67] : memref<16x32xf32, #tpu.memory_space<vmem>>, vector<2x32xf32>
    tpu.vector_store %arg8[%c8_66, %c0_67], %191 {strides = array<i32>} : memref<16x32xf32, #tpu.memory_space<vmem>>, vector<2x32xf32>,
    %c8_68 = arith.constant 8 : index
    %c0_69 = arith.constant 0 : index
    %193 = vector.load %arg11[%c8_68, %c0_69] : memref<16x128xbf16, #tpu.memory_space<vmem>>, vector<2x128xbf16>
    %c6_70 = arith.constant 6 : index
    %c0_71 = arith.constant 0 : index
    %194 = vector.load %arg12[%c6_70, %c0_71] : memref<16x128xbf16, #tpu.memory_space<vmem>>, vector<2x128xbf16>
    %195 = tpu.concatenate %193, %194 in 0 : vector<2x128xbf16>, vector<2x128xbf16> -> vector<4x128xbf16>
    %196 = arith.extf %195 : vector<4x128xbf16> to vector<4x128xf32>
    %197 = tpu.concatenate %188, %188 in 1 : vector<4x32xf32>, vector<4x32xf32> -> vector<4x64xf32>
    %cst_72 = arith.constant 0.000000e+00 : f32
    %198 = vector.broadcast %cst_72 : f32 to vector<4x64xf32>
    %199 = arith.select %30, %197, %198 : vector<4x64xi1>, vector<4x64xf32>
    %200 = arith.addf %196, %22 : vector<4x128xf32>
    %201 = arith.truncf %199 : vector<4x64xf32> to vector<4x64xbf16>
    %cst_73 = arith.constant dense<0.000000e+00> : vector<4x128xf32>
    %202 = tpu.matmul %201, %15, %cst_73 {dimension_numbers = #tpu.dot_dimension_numbers<[1], [0], [0], [1], [0, 0, 1, 1], [], []>} : vector<4x64xbf16>, vector<64x128xbf16>, vector<4x128xf32> -> vector<4x128xf32>
    %203 = arith.addf %200, %202 : vector<4x128xf32>
    %204 = vector.extract_strided_slice %203 {offsets = [0, 0], sizes = [4, 32], strides = [1, 1]} : vector<4x128xf32> to vector<4x32xf32>
    %205 = arith.negf %204 : vector<4x32xf32>
    %206 = math.exp %205 : vector<4x32xf32>
    %cst_74 = arith.constant 1.000000e+00 : f32
    %207 = vector.broadcast %cst_74 : f32 to vector<4x32xf32>
    %208 = arith.addf %207, %206 : vector<4x32xf32>
    %209 = arith.divf %207, %208 : vector<4x32xf32>
    %210 = vector.extract_strided_slice %203 {offsets = [0, 32], sizes = [4, 32], strides = [1, 1]} : vector<4x128xf32> to vector<4x32xf32>
    %211 = arith.negf %210 : vector<4x32xf32>
    %212 = math.exp %211 : vector<4x32xf32>
    %cst_75 = arith.constant 1.000000e+00 : f32
    %213 = vector.broadcast %cst_75 : f32 to vector<4x32xf32>
    %214 = arith.addf %213, %212 : vector<4x32xf32>
    %215 = arith.divf %213, %214 : vector<4x32xf32>
    %216 = vector.extract_strided_slice %203 {offsets = [0, 64], sizes = [4, 32], strides = [1, 1]} : vector<4x128xf32> to vector<4x32xf32>
    %217 = math.tanh %216 : vector<4x32xf32>
    %218 = vector.extract_strided_slice %203 {offsets = [0, 96], sizes = [4, 32], strides = [1, 1]} : vector<4x128xf32> to vector<4x32xf32>
    %219 = arith.negf %218 : vector<4x32xf32>
    %220 = math.exp %219 : vector<4x32xf32>
    %cst_76 = arith.constant 1.000000e+00 : f32
    %221 = vector.broadcast %cst_76 : f32 to vector<4x32xf32>
    %222 = arith.addf %221, %220 : vector<4x32xf32>
    %223 = arith.divf %221, %222 : vector<4x32xf32>
    %224 = arith.mulf %215, %186 : vector<4x32xf32>
    %225 = arith.mulf %209, %217 : vector<4x32xf32>
    %226 = arith.addf %224, %225 : vector<4x32xf32>
    %227 = math.tanh %226 : vector<4x32xf32>
    %228 = arith.mulf %223, %227 : vector<4x32xf32>
    %229 = vector.extract_strided_slice %228 {offsets = [0, 0], sizes = [2, 32], strides = [1, 1]} : vector<4x32xf32> to vector<2x32xf32>
    %c8_77 = arith.constant 8 : index
    %c0_78 = arith.constant 0 : index
    %230 = vector.load %arg7[%c8_77, %c0_78] : memref<16x32xf32, #tpu.memory_space<vmem>>, vector<2x32xf32>
    tpu.vector_store %arg7[%c8_77, %c0_78], %229 {strides = array<i32>} : memref<16x32xf32, #tpu.memory_space<vmem>>, vector<2x32xf32>,
    %231 = vector.extract_strided_slice %228 {offsets = [2, 0], sizes = [2, 32], strides = [1, 1]} : vector<4x32xf32> to vector<2x32xf32>
    %c6_79 = arith.constant 6 : index
    %c0_80 = arith.constant 0 : index
    %232 = vector.load %arg8[%c6_79, %c0_80] : memref<16x32xf32, #tpu.memory_space<vmem>>, vector<2x32xf32>
    tpu.vector_store %arg8[%c6_79, %c0_80], %231 {strides = array<i32>} : memref<16x32xf32, #tpu.memory_space<vmem>>, vector<2x32xf32>,
    %c10_81 = arith.constant 10 : index
    %c0_82 = arith.constant 0 : index
    %233 = vector.load %arg11[%c10_81, %c0_82] : memref<16x128xbf16, #tpu.memory_space<vmem>>, vector<2x128xbf16>
    %c4_83 = arith.constant 4 : index
    %c0_84 = arith.constant 0 : index
    %234 = vector.load %arg12[%c4_83, %c0_84] : memref<16x128xbf16, #tpu.memory_space<vmem>>, vector<2x128xbf16>
    %235 = tpu.concatenate %233, %234 in 0 : vector<2x128xbf16>, vector<2x128xbf16> -> vector<4x128xbf16>
    %236 = arith.extf %235 : vector<4x128xbf16> to vector<4x128xf32>
    %237 = tpu.concatenate %228, %228 in 1 : vector<4x32xf32>, vector<4x32xf32> -> vector<4x64xf32>
    %cst_85 = arith.constant 0.000000e+00 : f32
    %238 = vector.broadcast %cst_85 : f32 to vector<4x64xf32>
    %239 = arith.select %30, %237, %238 : vector<4x64xi1>, vector<4x64xf32>
    %240 = arith.addf %236, %22 : vector<4x128xf32>
    %241 = arith.truncf %239 : vector<4x64xf32> to vector<4x64xbf16>
    %cst_86 = arith.constant dense<0.000000e+00> : vector<4x128xf32>
    %242 = tpu.matmul %241, %15, %cst_86 {dimension_numbers = #tpu.dot_dimension_numbers<[1], [0], [0], [1], [0, 0, 1, 1], [], []>} : vector<4x64xbf16>, vector<64x128xbf16>, vector<4x128xf32> -> vector<4x128xf32>
    %243 = arith.addf %240, %242 : vector<4x128xf32>
    %244 = vector.extract_strided_slice %243 {offsets = [0, 0], sizes = [4, 32], strides = [1, 1]} : vector<4x128xf32> to vector<4x32xf32>
    %245 = arith.negf %244 : vector<4x32xf32>
    %246 = math.exp %245 : vector<4x32xf32>
    %cst_87 = arith.constant 1.000000e+00 : f32
    %247 = vector.broadcast %cst_87 : f32 to vector<4x32xf32>
    %248 = arith.addf %247, %246 : vector<4x32xf32>
    %249 = arith.divf %247, %248 : vector<4x32xf32>
    %250 = vector.extract_strided_slice %243 {offsets = [0, 32], sizes = [4, 32], strides = [1, 1]} : vector<4x128xf32> to vector<4x32xf32>
    %251 = arith.negf %250 : vector<4x32xf32>
    %252 = math.exp %251 : vector<4x32xf32>
    %cst_88 = arith.constant 1.000000e+00 : f32
    %253 = vector.broadcast %cst_88 : f32 to vector<4x32xf32>
    %254 = arith.addf %253, %252 : vector<4x32xf32>
    %255 = arith.divf %253, %254 : vector<4x32xf32>
    %256 = vector.extract_strided_slice %243 {offsets = [0, 64], sizes = [4, 32], strides = [1, 1]} : vector<4x128xf32> to vector<4x32xf32>
    %257 = math.tanh %256 : vector<4x32xf32>
    %258 = vector.extract_strided_slice %243 {offsets = [0, 96], sizes = [4, 32], strides = [1, 1]} : vector<4x128xf32> to vector<4x32xf32>
    %259 = arith.negf %258 : vector<4x32xf32>
    %260 = math.exp %259 : vector<4x32xf32>
    %cst_89 = arith.constant 1.000000e+00 : f32
    %261 = vector.broadcast %cst_89 : f32 to vector<4x32xf32>
    %262 = arith.addf %261, %260 : vector<4x32xf32>
    %263 = arith.divf %261, %262 : vector<4x32xf32>
    %264 = arith.mulf %255, %226 : vector<4x32xf32>
    %265 = arith.mulf %249, %257 : vector<4x32xf32>
    %266 = arith.addf %264, %265 : vector<4x32xf32>
    %267 = math.tanh %266 : vector<4x32xf32>
    %268 = arith.mulf %263, %267 : vector<4x32xf32>
    %269 = vector.extract_strided_slice %268 {offsets = [0, 0], sizes = [2, 32], strides = [1, 1]} : vector<4x32xf32> to vector<2x32xf32>
    %c10_90 = arith.constant 10 : index
    %c0_91 = arith.constant 0 : index
    %270 = vector.load %arg7[%c10_90, %c0_91] : memref<16x32xf32, #tpu.memory_space<vmem>>, vector<2x32xf32>
    tpu.vector_store %arg7[%c10_90, %c0_91], %269 {strides = array<i32>} : memref<16x32xf32, #tpu.memory_space<vmem>>, vector<2x32xf32>,
    %271 = vector.extract_strided_slice %268 {offsets = [2, 0], sizes = [2, 32], strides = [1, 1]} : vector<4x32xf32> to vector<2x32xf32>
    %c4_92 = arith.constant 4 : index
    %c0_93 = arith.constant 0 : index
    %272 = vector.load %arg8[%c4_92, %c0_93] : memref<16x32xf32, #tpu.memory_space<vmem>>, vector<2x32xf32>
    tpu.vector_store %arg8[%c4_92, %c0_93], %271 {strides = array<i32>} : memref<16x32xf32, #tpu.memory_space<vmem>>, vector<2x32xf32>,
    %c12_94 = arith.constant 12 : index
    %c0_95 = arith.constant 0 : index
    %273 = vector.load %arg11[%c12_94, %c0_95] : memref<16x128xbf16, #tpu.memory_space<vmem>>, vector<2x128xbf16>
    %c2_96 = arith.constant 2 : index
    %c0_97 = arith.constant 0 : index
    %274 = vector.load %arg12[%c2_96, %c0_97] : memref<16x128xbf16, #tpu.memory_space<vmem>>, vector<2x128xbf16>
    %275 = tpu.concatenate %273, %274 in 0 : vector<2x128xbf16>, vector<2x128xbf16> -> vector<4x128xbf16>
    %276 = arith.extf %275 : vector<4x128xbf16> to vector<4x128xf32>
    %277 = tpu.concatenate %268, %268 in 1 : vector<4x32xf32>, vector<4x32xf32> -> vector<4x64xf32>
    %cst_98 = arith.constant 0.000000e+00 : f32
    %278 = vector.broadcast %cst_98 : f32 to vector<4x64xf32>
    %279 = arith.select %30, %277, %278 : vector<4x64xi1>, vector<4x64xf32>
    %280 = arith.addf %276, %22 : vector<4x128xf32>
    %281 = arith.truncf %279 : vector<4x64xf32> to vector<4x64xbf16>
    %cst_99 = arith.constant dense<0.000000e+00> : vector<4x128xf32>
    %282 = tpu.matmul %281, %15, %cst_99 {dimension_numbers = #tpu.dot_dimension_numbers<[1], [0], [0], [1], [0, 0, 1, 1], [], []>} : vector<4x64xbf16>, vector<64x128xbf16>, vector<4x128xf32> -> vector<4x128xf32>
    %283 = arith.addf %280, %282 : vector<4x128xf32>
    %284 = vector.extract_strided_slice %283 {offsets = [0, 0], sizes = [4, 32], strides = [1, 1]} : vector<4x128xf32> to vector<4x32xf32>
    %285 = arith.negf %284 : vector<4x32xf32>
    %286 = math.exp %285 : vector<4x32xf32>
    %cst_100 = arith.constant 1.000000e+00 : f32
    %287 = vector.broadcast %cst_100 : f32 to vector<4x32xf32>
    %288 = arith.addf %287, %286 : vector<4x32xf32>
    %289 = arith.divf %287, %288 : vector<4x32xf32>
    %290 = vector.extract_strided_slice %283 {offsets = [0, 32], sizes = [4, 32], strides = [1, 1]} : vector<4x128xf32> to vector<4x32xf32>
    %291 = arith.negf %290 : vector<4x32xf32>
    %292 = math.exp %291 : vector<4x32xf32>
    %cst_101 = arith.constant 1.000000e+00 : f32
    %293 = vector.broadcast %cst_101 : f32 to vector<4x32xf32>
    %294 = arith.addf %293, %292 : vector<4x32xf32>
    %295 = arith.divf %293, %294 : vector<4x32xf32>
    %296 = vector.extract_strided_slice %283 {offsets = [0, 64], sizes = [4, 32], strides = [1, 1]} : vector<4x128xf32> to vector<4x32xf32>
    %297 = math.tanh %296 : vector<4x32xf32>
    %298 = vector.extract_strided_slice %283 {offsets = [0, 96], sizes = [4, 32], strides = [1, 1]} : vector<4x128xf32> to vector<4x32xf32>
    %299 = arith.negf %298 : vector<4x32xf32>
    %300 = math.exp %299 : vector<4x32xf32>
    %cst_102 = arith.constant 1.000000e+00 : f32
    %301 = vector.broadcast %cst_102 : f32 to vector<4x32xf32>
    %302 = arith.addf %301, %300 : vector<4x32xf32>
    %303 = arith.divf %301, %302 : vector<4x32xf32>
    %304 = arith.mulf %295, %266 : vector<4x32xf32>
    %305 = arith.mulf %289, %297 : vector<4x32xf32>
    %306 = arith.addf %304, %305 : vector<4x32xf32>
    %307 = math.tanh %306 : vector<4x32xf32>
    %308 = arith.mulf %303, %307 : vector<4x32xf32>
    %309 = vector.extract_strided_slice %308 {offsets = [0, 0], sizes = [2, 32], strides = [1, 1]} : vector<4x32xf32> to vector<2x32xf32>
    %c12_103 = arith.constant 12 : index
    %c0_104 = arith.constant 0 : index
    %310 = vector.load %arg7[%c12_103, %c0_104] : memref<16x32xf32, #tpu.memory_space<vmem>>, vector<2x32xf32>
    tpu.vector_store %arg7[%c12_103, %c0_104], %309 {strides = array<i32>} : memref<16x32xf32, #tpu.memory_space<vmem>>, vector<2x32xf32>,
    %311 = vector.extract_strided_slice %308 {offsets = [2, 0], sizes = [2, 32], strides = [1, 1]} : vector<4x32xf32> to vector<2x32xf32>
    %c2_105 = arith.constant 2 : index
    %c0_106 = arith.constant 0 : index
    %312 = vector.load %arg8[%c2_105, %c0_106] : memref<16x32xf32, #tpu.memory_space<vmem>>, vector<2x32xf32>
    tpu.vector_store %arg8[%c2_105, %c0_106], %311 {strides = array<i32>} : memref<16x32xf32, #tpu.memory_space<vmem>>, vector<2x32xf32>,
    %c14_107 = arith.constant 14 : index
    %c0_108 = arith.constant 0 : index
    %313 = vector.load %arg11[%c14_107, %c0_108] : memref<16x128xbf16, #tpu.memory_space<vmem>>, vector<2x128xbf16>
    %c0_109 = arith.constant 0 : index
    %c0_110 = arith.constant 0 : index
    %314 = vector.load %arg12[%c0_109, %c0_110] : memref<16x128xbf16, #tpu.memory_space<vmem>>, vector<2x128xbf16>
    %315 = tpu.concatenate %313, %314 in 0 : vector<2x128xbf16>, vector<2x128xbf16> -> vector<4x128xbf16>
    %316 = arith.extf %315 : vector<4x128xbf16> to vector<4x128xf32>
    %317 = tpu.concatenate %308, %308 in 1 : vector<4x32xf32>, vector<4x32xf32> -> vector<4x64xf32>
    %cst_111 = arith.constant 0.000000e+00 : f32
    %318 = vector.broadcast %cst_111 : f32 to vector<4x64xf32>
    %319 = arith.select %30, %317, %318 : vector<4x64xi1>, vector<4x64xf32>
    %320 = arith.addf %316, %22 : vector<4x128xf32>
    %321 = arith.truncf %319 : vector<4x64xf32> to vector<4x64xbf16>
    %cst_112 = arith.constant dense<0.000000e+00> : vector<4x128xf32>
    %322 = tpu.matmul %321, %15, %cst_112 {dimension_numbers = #tpu.dot_dimension_numbers<[1], [0], [0], [1], [0, 0, 1, 1], [], []>} : vector<4x64xbf16>, vector<64x128xbf16>, vector<4x128xf32> -> vector<4x128xf32>
    %323 = arith.addf %320, %322 : vector<4x128xf32>
    %324 = vector.extract_strided_slice %323 {offsets = [0, 0], sizes = [4, 32], strides = [1, 1]} : vector<4x128xf32> to vector<4x32xf32>
    %325 = arith.negf %324 : vector<4x32xf32>
    %326 = math.exp %325 : vector<4x32xf32>
    %cst_113 = arith.constant 1.000000e+00 : f32
    %327 = vector.broadcast %cst_113 : f32 to vector<4x32xf32>
    %328 = arith.addf %327, %326 : vector<4x32xf32>
    %329 = arith.divf %327, %328 : vector<4x32xf32>
    %330 = vector.extract_strided_slice %323 {offsets = [0, 32], sizes = [4, 32], strides = [1, 1]} : vector<4x128xf32> to vector<4x32xf32>
    %331 = arith.negf %330 : vector<4x32xf32>
    %332 = math.exp %331 : vector<4x32xf32>
    %cst_114 = arith.constant 1.000000e+00 : f32
    %333 = vector.broadcast %cst_114 : f32 to vector<4x32xf32>
    %334 = arith.addf %333, %332 : vector<4x32xf32>
    %335 = arith.divf %333, %334 : vector<4x32xf32>
    %336 = vector.extract_strided_slice %323 {offsets = [0, 64], sizes = [4, 32], strides = [1, 1]} : vector<4x128xf32> to vector<4x32xf32>
    %337 = math.tanh %336 : vector<4x32xf32>
    %338 = vector.extract_strided_slice %323 {offsets = [0, 96], sizes = [4, 32], strides = [1, 1]} : vector<4x128xf32> to vector<4x32xf32>
    %339 = arith.negf %338 : vector<4x32xf32>
    %340 = math.exp %339 : vector<4x32xf32>
    %cst_115 = arith.constant 1.000000e+00 : f32
    %341 = vector.broadcast %cst_115 : f32 to vector<4x32xf32>
    %342 = arith.addf %341, %340 : vector<4x32xf32>
    %343 = arith.divf %341, %342 : vector<4x32xf32>
    %344 = arith.mulf %335, %306 : vector<4x32xf32>
    %345 = arith.mulf %329, %337 : vector<4x32xf32>
    %346 = arith.addf %344, %345 : vector<4x32xf32>
    %347 = math.tanh %346 : vector<4x32xf32>
    %348 = arith.mulf %343, %347 : vector<4x32xf32>
    %349 = vector.extract_strided_slice %348 {offsets = [0, 0], sizes = [2, 32], strides = [1, 1]} : vector<4x32xf32> to vector<2x32xf32>
    %c14_116 = arith.constant 14 : index
    %c0_117 = arith.constant 0 : index
    %350 = vector.load %arg7[%c14_116, %c0_117] : memref<16x32xf32, #tpu.memory_space<vmem>>, vector<2x32xf32>
    tpu.vector_store %arg7[%c14_116, %c0_117], %349 {strides = array<i32>} : memref<16x32xf32, #tpu.memory_space<vmem>>, vector<2x32xf32>,
    %351 = vector.extract_strided_slice %348 {offsets = [2, 0], sizes = [2, 32], strides = [1, 1]} : vector<4x32xf32> to vector<2x32xf32>
    %c0_118 = arith.constant 0 : index
    %c0_119 = arith.constant 0 : index
    %352 = vector.load %arg8[%c0_118, %c0_119] : memref<16x32xf32, #tpu.memory_space<vmem>>, vector<2x32xf32>
    tpu.vector_store %arg8[%c0_118, %c0_119], %351 {strides = array<i32>} : memref<16x32xf32, #tpu.memory_space<vmem>>, vector<2x32xf32>,
    %c0_120 = arith.constant 0 : index
    %c0_121 = arith.constant 0 : index
    %353 = vector.load %arg9[%c0_120, %c0_121] : memref<4x32xf32, #tpu.memory_space<vmem>>, vector<4x32xf32>
    tpu.vector_store %arg9[%c0_120, %c0_121], %348 {strides = array<i32>} : memref<4x32xf32, #tpu.memory_space<vmem>>, vector<4x32xf32>,
    %c0_122 = arith.constant 0 : index
    %c0_123 = arith.constant 0 : index
    %354 = vector.load %arg10[%c0_122, %c0_123] : memref<4x32xf32, #tpu.memory_space<vmem>>, vector<4x32xf32>
    tpu.vector_store %arg10[%c0_122, %c0_123], %346 {strides = array<i32>} : memref<4x32xf32, #tpu.memory_space<vmem>>, vector<4x32xf32>,
    return
  }
  func.func @transform_0(%arg0: i32) -> (i32, i32) {
    %c0_i32 = arith.constant 0 : i32
    %c0_i32_0 = arith.constant 0 : i32
    return %arg0, %c0_i32 : i32, i32
  }
  func.func @transform_1(%arg0: i32) -> (i32, i32) {
    %c0_i32 = arith.constant 0 : i32
    %0 = arith.subi %c0_i32, %arg0 : i32
    %c0_i32_0 = arith.constant 0 : i32
    %c0_i32_1 = arith.constant 0 : i32
    return %0, %c0_i32_0 : i32, i32
  }
  func.func @transform_2(%arg0: i32) -> (i32, i32) {
    %c0_i32 = arith.constant 0 : i32
    %c0_i32_0 = arith.constant 0 : i32
    %c0_i32_1 = arith.constant 0 : i32
    return %c0_i32, %c0_i32_0 : i32, i32
  }
  func.func @transform_3(%arg0: i32) -> (i32, i32) {
    %c0_i32 = arith.constant 0 : i32
    %c0_i32_0 = arith.constant 0 : i32
    %c0_i32_1 = arith.constant 0 : i32
    return %c0_i32, %c0_i32_0 : i32, i32
  }
  func.func @transform_4(%arg0: i32) -> (i32, i32) {
    %c0_i32 = arith.constant 0 : i32
    %c0_i32_0 = arith.constant 0 : i32
    %c0_i32_1 = arith.constant 0 : i32
    return %c0_i32, %c0_i32_0 : i32, i32
  }
  func.func @transform_5(%arg0: i32) -> (i32, i32) {
    %c0_i32 = arith.constant 0 : i32
    %c0_i32_0 = arith.constant 0 : i32
    %c0_i32_1 = arith.constant 0 : i32
    return %c0_i32, %c0_i32_0 : i32, i32
  }
  func.func @transform_6(%arg0: i32) -> (i32, i32) {
    %c0_i32 = arith.constant 0 : i32
    %c0_i32_0 = arith.constant 0 : i32
    return %arg0, %c0_i32 : i32, i32
  }
  func.func @transform_7(%arg0: i32) -> (i32, i32) {
    %c0_i32 = arith.constant 0 : i32
    %0 = arith.subi %c0_i32, %arg0 : i32
    %c0_i32_0 = arith.constant 0 : i32
    %c0_i32_1 = arith.constant 0 : i32
    return %0, %c0_i32_0 : i32, i32
  }
}

module attributes {stable_mosaic.version = 11 : i64} {
  func.func @_attn_kernel(%arg0: i32, %arg1: memref<8x64xf32, #tpu.memory_space<vmem>>, %arg2: memref<8x512xbf16, #tpu.memory_space<vmem>>, %arg3: memref<64x128xbf16, #tpu.memory_space<vmem>>, %arg4: memref<128x64xbf16, #tpu.memory_space<vmem>>, %arg5: memref<64x64xbf16, #tpu.memory_space<vmem>>, %arg6: memref<8x64xbf16, #tpu.memory_space<vmem>>) attributes {dimension_semantics = [#tpu.dimension_semantics<parallel>], iteration_bounds = array<i64: 2>, scalar_prefetch = 0 : i64, scratch_operands = 0 : i64, tpu.core_type = #tpu.core_type<tc>, window_params = [{transform_indices = @transform_0, window_bounds = array<i64: 8, 64>}, {transform_indices = @transform_1, window_bounds = array<i64: 8, 512>}, {pipeline_mode = #tpu.pipeline_mode<synchronous>, transform_indices = @transform_2, window_bounds = array<i64: 64, 128>}, {pipeline_mode = #tpu.pipeline_mode<synchronous>, transform_indices = @transform_3, window_bounds = array<i64: 128, 64>}, {pipeline_mode = #tpu.pipeline_mode<synchronous>, transform_indices = @transform_4, window_bounds = array<i64: 64, 64>}, {transform_indices = @transform_5, window_bounds = array<i64: 8, 64>}]} {
    %c0 = arith.constant 0 : index
    %c0_0 = arith.constant 0 : index
    %0 = vector.load %arg1[%c0, %c0_0] : memref<8x64xf32, #tpu.memory_space<vmem>>, vector<8x64xf32>
    %c0_1 = arith.constant 0 : index
    %c0_2 = arith.constant 0 : index
    %1 = vector.load %arg2[%c0_1, %c0_2] : memref<8x512xbf16, #tpu.memory_space<vmem>>, vector<8x512xbf16>
    %2 = arith.truncf %0 : vector<8x64xf32> to vector<8x64xbf16>
    %c0_3 = arith.constant 0 : index
    %c0_4 = arith.constant 0 : index
    %3 = vector.load %arg3[%c0_3, %c0_4] : memref<64x128xbf16, #tpu.memory_space<vmem>>, vector<64x128xbf16>
    %cst = arith.constant dense<0.000000e+00> : vector<8x128xf32>
    %4 = tpu.matmul %2, %3, %cst {dimension_numbers = #tpu.dot_dimension_numbers<[1], [0], [0], [1], [0, 0, 1, 1], [], []>} : vector<8x64xbf16>, vector<64x128xbf16>, vector<8x128xf32> -> vector<8x128xf32>
    %5 = vector.extract_strided_slice %1 {offsets = [0, 0], sizes = [8, 128], strides = [1, 1]} : vector<8x512xbf16> to vector<8x128xbf16>
    %6 = vector.extract_strided_slice %1 {offsets = [0, 128], sizes = [8, 128], strides = [1, 1]} : vector<8x512xbf16> to vector<8x128xbf16>
    %7 = vector.extract_strided_slice %1 {offsets = [0, 256], sizes = [8, 128], strides = [1, 1]} : vector<8x512xbf16> to vector<8x128xbf16>
    %8 = vector.extract_strided_slice %1 {offsets = [0, 384], sizes = [8, 128], strides = [1, 1]} : vector<8x512xbf16> to vector<8x128xbf16>
    %9 = arith.extf %5 : vector<8x128xbf16> to vector<8x128xf32>
    %10 = arith.mulf %9, %4 : vector<8x128xf32>
    %cst_5 = arith.constant dense<0.000000e+00> : vector<8xf32>
    %11 = vector.multi_reduction <add>, %10, %cst_5 [1] : vector<8x128xf32> to vector<8xf32>
    %12 = vector.shape_cast %11 : vector<8xf32> to vector<8x1xf32>
    %13 = arith.extf %6 : vector<8x128xbf16> to vector<8x128xf32>
    %14 = arith.mulf %13, %4 : vector<8x128xf32>
    %cst_6 = arith.constant dense<0.000000e+00> : vector<8xf32>
    %15 = vector.multi_reduction <add>, %14, %cst_6 [1] : vector<8x128xf32> to vector<8xf32>
    %16 = vector.shape_cast %15 : vector<8xf32> to vector<8x1xf32>
    %17 = arith.extf %7 : vector<8x128xbf16> to vector<8x128xf32>
    %18 = arith.mulf %17, %4 : vector<8x128xf32>
    %cst_7 = arith.constant dense<0.000000e+00> : vector<8xf32>
    %19 = vector.multi_reduction <add>, %18, %cst_7 [1] : vector<8x128xf32> to vector<8xf32>
    %20 = vector.shape_cast %19 : vector<8xf32> to vector<8x1xf32>
    %21 = arith.extf %8 : vector<8x128xbf16> to vector<8x128xf32>
    %22 = arith.mulf %21, %4 : vector<8x128xf32>
    %cst_8 = arith.constant dense<0.000000e+00> : vector<8xf32>
    %23 = vector.multi_reduction <add>, %22, %cst_8 [1] : vector<8x128xf32> to vector<8xf32>
    %24 = vector.shape_cast %23 : vector<8xf32> to vector<8x1xf32>
    %25 = arith.maximumf %12, %16 : vector<8x1xf32>
    %26 = arith.maximumf %20, %24 : vector<8x1xf32>
    %27 = arith.maximumf %25, %26 : vector<8x1xf32>
    %28 = arith.subf %12, %27 : vector<8x1xf32>
    %29 = math.exp %28 : vector<8x1xf32>
    %30 = arith.subf %16, %27 : vector<8x1xf32>
    %31 = math.exp %30 : vector<8x1xf32>
    %32 = arith.subf %20, %27 : vector<8x1xf32>
    %33 = math.exp %32 : vector<8x1xf32>
    %34 = arith.subf %24, %27 : vector<8x1xf32>
    %35 = math.exp %34 : vector<8x1xf32>
    %36 = arith.addf %29, %31 : vector<8x1xf32>
    %37 = arith.addf %33, %35 : vector<8x1xf32>
    %38 = arith.addf %36, %37 : vector<8x1xf32>
    %39 = arith.extf %5 : vector<8x128xbf16> to vector<8x128xf32>
    %40 = vector.broadcast %29 : vector<8x1xf32> to vector<8x128xf32>
    %41 = arith.mulf %40, %39 : vector<8x128xf32>
    %42 = arith.extf %6 : vector<8x128xbf16> to vector<8x128xf32>
    %43 = vector.broadcast %31 : vector<8x1xf32> to vector<8x128xf32>
    %44 = arith.mulf %43, %42 : vector<8x128xf32>
    %45 = arith.extf %7 : vector<8x128xbf16> to vector<8x128xf32>
    %46 = vector.broadcast %33 : vector<8x1xf32> to vector<8x128xf32>
    %47 = arith.mulf %46, %45 : vector<8x128xf32>
    %48 = arith.extf %8 : vector<8x128xbf16> to vector<8x128xf32>
    %49 = vector.broadcast %35 : vector<8x1xf32> to vector<8x128xf32>
    %50 = arith.mulf %49, %48 : vector<8x128xf32>
    %51 = arith.addf %41, %44 : vector<8x128xf32>
    %52 = arith.addf %47, %50 : vector<8x128xf32>
    %53 = arith.addf %51, %52 : vector<8x128xf32>
    %54 = tpu.reciprocal %38 {approx = true} : vector<8x1xf32> -> vector<8x1xf32>
    %55 = vector.broadcast %54 : vector<8x1xf32> to vector<8x128xf32>
    %56 = arith.mulf %53, %55 : vector<8x128xf32>
    %57 = arith.truncf %56 : vector<8x128xf32> to vector<8x128xbf16>
    %c0_9 = arith.constant 0 : index
    %c0_10 = arith.constant 0 : index
    %58 = vector.load %arg4[%c0_9, %c0_10] : memref<128x64xbf16, #tpu.memory_space<vmem>>, vector<128x64xbf16>
    %cst_11 = arith.constant dense<0.000000e+00> : vector<8x64xf32>
    %59 = tpu.matmul %57, %58, %cst_11 {dimension_numbers = #tpu.dot_dimension_numbers<[1], [0], [0], [1], [0, 0, 1, 1], [], []>} : vector<8x128xbf16>, vector<128x64xbf16>, vector<8x64xf32> -> vector<8x64xf32>
    %c0_12 = arith.constant 0 : index
    %c0_13 = arith.constant 0 : index
    %60 = vector.load %arg5[%c0_12, %c0_13] : memref<64x64xbf16, #tpu.memory_space<vmem>>, vector<64x64xbf16>
    %cst_14 = arith.constant dense<0.000000e+00> : vector<8x64xf32>
    %61 = tpu.matmul %2, %60, %cst_14 {dimension_numbers = #tpu.dot_dimension_numbers<[1], [0], [0], [1], [0, 0, 1, 1], [], []>} : vector<8x64xbf16>, vector<64x64xbf16>, vector<8x64xf32> -> vector<8x64xf32>
    %62 = arith.addf %59, %61 : vector<8x64xf32>
    %63 = math.tanh %62 : vector<8x64xf32>
    %64 = arith.truncf %63 : vector<8x64xf32> to vector<8x64xbf16>
    %c0_15 = arith.constant 0 : index
    %c0_16 = arith.constant 0 : index
    %65 = vector.load %arg6[%c0_15, %c0_16] : memref<8x64xbf16, #tpu.memory_space<vmem>>, vector<8x64xbf16>
    tpu.vector_store %arg6[%c0_15, %c0_16], %64 {strides = array<i32>} : memref<8x64xbf16, #tpu.memory_space<vmem>>, vector<8x64xbf16>,
    return
  }
  func.func @transform_0(%arg0: i32) -> (i32, i32) {
    %c0_i32 = arith.constant 0 : i32
    %c0_i32_0 = arith.constant 0 : i32
    return %arg0, %c0_i32 : i32, i32
  }
  func.func @transform_1(%arg0: i32) -> (i32, i32) {
    %c0_i32 = arith.constant 0 : i32
    %c0_i32_0 = arith.constant 0 : i32
    return %arg0, %c0_i32 : i32, i32
  }
  func.func @transform_2(%arg0: i32) -> (i32, i32) {
    %c0_i32 = arith.constant 0 : i32
    %c0_i32_0 = arith.constant 0 : i32
    %c0_i32_1 = arith.constant 0 : i32
    return %c0_i32, %c0_i32_0 : i32, i32
  }
  func.func @transform_3(%arg0: i32) -> (i32, i32) {
    %c0_i32 = arith.constant 0 : i32
    %c0_i32_0 = arith.constant 0 : i32
    %c0_i32_1 = arith.constant 0 : i32
    return %c0_i32, %c0_i32_0 : i32, i32
  }
  func.func @transform_4(%arg0: i32) -> (i32, i32) {
    %c0_i32 = arith.constant 0 : i32
    %c0_i32_0 = arith.constant 0 : i32
    %c0_i32_1 = arith.constant 0 : i32
    return %c0_i32, %c0_i32_0 : i32, i32
  }
  func.func @transform_5(%arg0: i32) -> (i32, i32) {
    %c0_i32 = arith.constant 0 : i32
    %c0_i32_0 = arith.constant 0 : i32
    return %arg0, %c0_i32 : i32, i32
  }
}

module attributes {stable_mosaic.version = 11 : i64} {
  func.func @_bilstm_kernel(%arg0: i32, %arg1: memref<16x64xbf16, #tpu.memory_space<vmem>>, %arg2: memref<16x64xbf16, #tpu.memory_space<vmem>>, %arg3: memref<64x128xbf16, #tpu.memory_space<vmem>>, %arg4: memref<64x128xbf16, #tpu.memory_space<vmem>>, %arg5: memref<64x128xbf16, #tpu.memory_space<vmem>>, %arg6: memref<2x128xf32, #tpu.memory_space<vmem>>, %arg7: memref<16x32xf32, #tpu.memory_space<vmem>>, %arg8: memref<16x32xf32, #tpu.memory_space<vmem>>, %arg9: memref<4x32xf32, #tpu.memory_space<vmem>>, %arg10: memref<4x32xf32, #tpu.memory_space<vmem>>, %arg11: memref<16x128xbf16, #tpu.memory_space<vmem>>, %arg12: memref<16x128xbf16, #tpu.memory_space<vmem>>) attributes {dimension_semantics = [#tpu.dimension_semantics<arbitrary>], iteration_bounds = array<i64: 1>, scalar_prefetch = 0 : i64, scratch_operands = 4 : i64, tpu.core_type = #tpu.core_type<tc>, window_params = [{transform_indices = @transform_0, window_bounds = array<i64: 16, 64>}, {transform_indices = @transform_1, window_bounds = array<i64: 16, 64>}, {pipeline_mode = #tpu.pipeline_mode<synchronous>, transform_indices = @transform_2, window_bounds = array<i64: 64, 128>}, {pipeline_mode = #tpu.pipeline_mode<synchronous>, transform_indices = @transform_3, window_bounds = array<i64: 64, 128>}, {pipeline_mode = #tpu.pipeline_mode<synchronous>, transform_indices = @transform_4, window_bounds = array<i64: 64, 128>}, {pipeline_mode = #tpu.pipeline_mode<synchronous>, transform_indices = @transform_5, window_bounds = array<i64: 2, 128>}, {transform_indices = @transform_6, window_bounds = array<i64: 16, 32>}, {transform_indices = @transform_7, window_bounds = array<i64: 16, 32>}]} {
    %c0_i32 = arith.constant 0 : i32
    %0 = arith.cmpi eq, %arg0, %c0_i32 : i32
    %1 = arith.extui %0 : i1 to i32
    %c0_i32_0 = arith.constant 0 : i32
    %2 = arith.cmpi ne, %1, %c0_i32_0 : i32
    scf.if %2 {
      %cst_124 = arith.constant 0.000000e+00 : f32
      %353 = vector.broadcast %cst_124 : f32 to vector<4x32xf32>
      %c0_125 = arith.constant 0 : index
      %c0_126 = arith.constant 0 : index
      %354 = vector.load %arg9[%c0_125, %c0_126] : memref<4x32xf32, #tpu.memory_space<vmem>>, vector<4x32xf32>
      tpu.vector_store %arg9[%c0_125, %c0_126], %353 {strides = array<i32>} : memref<4x32xf32, #tpu.memory_space<vmem>>, vector<4x32xf32>,
      %cst_127 = arith.constant 0.000000e+00 : f32
      %355 = vector.broadcast %cst_127 : f32 to vector<4x32xf32>
      %c0_128 = arith.constant 0 : index
      %c0_129 = arith.constant 0 : index
      %356 = vector.load %arg10[%c0_128, %c0_129] : memref<4x32xf32, #tpu.memory_space<vmem>>, vector<4x32xf32>
      tpu.vector_store %arg10[%c0_128, %c0_129], %355 {strides = array<i32>} : memref<4x32xf32, #tpu.memory_space<vmem>>, vector<4x32xf32>,
    } else {
    }
    %c0 = arith.constant 0 : index
    %c0_1 = arith.constant 0 : index
    %3 = vector.load %arg1[%c0, %c0_1] : memref<16x64xbf16, #tpu.memory_space<vmem>>, vector<16x64xbf16>
    %c0_2 = arith.constant 0 : index
    %c0_3 = arith.constant 0 : index
    %4 = vector.load %arg3[%c0_2, %c0_3] : memref<64x128xbf16, #tpu.memory_space<vmem>>, vector<64x128xbf16>
    %cst = arith.constant dense<0.000000e+00> : vector<16x128xf32>
    %5 = tpu.matmul %3, %4, %cst {dimension_numbers = #tpu.dot_dimension_numbers<[1], [0], [0], [1], [0, 0, 1, 1], [], []>} : vector<16x64xbf16>, vector<64x128xbf16>, vector<16x128xf32> -> vector<16x128xf32>
    %6 = arith.truncf %5 : vector<16x128xf32> to vector<16x128xbf16>
    %c0_4 = arith.constant 0 : index
    %c0_5 = arith.constant 0 : index
    %7 = vector.load %arg11[%c0_4, %c0_5] : memref<16x128xbf16, #tpu.memory_space<vmem>>, vector<16x128xbf16>
    tpu.vector_store %arg11[%c0_4, %c0_5], %6 {strides = array<i32>} : memref<16x128xbf16, #tpu.memory_space<vmem>>, vector<16x128xbf16>,
    %c0_6 = arith.constant 0 : index
    %c0_7 = arith.constant 0 : index
    %8 = vector.load %arg2[%c0_6, %c0_7] : memref<16x64xbf16, #tpu.memory_space<vmem>>, vector<16x64xbf16>
    %c0_8 = arith.constant 0 : index
    %c0_9 = arith.constant 0 : index
    %9 = vector.load %arg4[%c0_8, %c0_9] : memref<64x128xbf16, #tpu.memory_space<vmem>>, vector<64x128xbf16>
    %cst_10 = arith.constant dense<0.000000e+00> : vector<16x128xf32>
    %10 = tpu.matmul %8, %9, %cst_10 {dimension_numbers = #tpu.dot_dimension_numbers<[1], [0], [0], [1], [0, 0, 1, 1], [], []>} : vector<16x64xbf16>, vector<64x128xbf16>, vector<16x128xf32> -> vector<16x128xf32>
    %11 = arith.truncf %10 : vector<16x128xf32> to vector<16x128xbf16>
    %c0_11 = arith.constant 0 : index
    %c0_12 = arith.constant 0 : index
    %12 = vector.load %arg12[%c0_11, %c0_12] : memref<16x128xbf16, #tpu.memory_space<vmem>>, vector<16x128xbf16>
    tpu.vector_store %arg12[%c0_11, %c0_12], %11 {strides = array<i32>} : memref<16x128xbf16, #tpu.memory_space<vmem>>, vector<16x128xbf16>,
    %c0_13 = arith.constant 0 : index
    %c0_14 = arith.constant 0 : index
    %13 = vector.load %arg5[%c0_13, %c0_14] : memref<64x128xbf16, #tpu.memory_space<vmem>>, vector<64x128xbf16>
    %c0_15 = arith.constant 0 : index
    %c0_16 = arith.constant 0 : index
    %14 = vector.load %arg6[%c0_15, %c0_16] : memref<2x128xf32, #tpu.memory_space<vmem>>, vector<1x128xf32>
    %15 = vector.shape_cast %14 : vector<1x128xf32> to vector<1x128xf32>
    %16 = vector.broadcast %15 : vector<1x128xf32> to vector<2x128xf32>
    %c1 = arith.constant 1 : index
    %c0_17 = arith.constant 0 : index
    %17 = vector.load %arg6[%c1, %c0_17] : memref<2x128xf32, #tpu.memory_space<vmem>>, vector<1x128xf32>
    %18 = vector.shape_cast %17 : vector<1x128xf32> to vector<1x128xf32>
    %19 = vector.broadcast %18 : vector<1x128xf32> to vector<2x128xf32>
    %20 = tpu.concatenate %16, %19 in 0 : vector<2x128xf32>, vector<2x128xf32> -> vector<4x128xf32>
    %21 = tpu.iota {dimensions = array<i32: 0>} : vector<4x64xi32>
    %22 = tpu.iota {dimensions = array<i32: 1>} : vector<4x64xi32>
    %c2_i32 = arith.constant 2 : i32
    %23 = vector.broadcast %c2_i32 : i32 to vector<4x64xi32>
    %24 = arith.cmpi slt, %21, %23 : vector<4x64xi32>
    %c32_i32 = arith.constant 32 : i32
    %25 = vector.broadcast %c32_i32 : i32 to vector<4x64xi32>
    %26 = arith.cmpi slt, %22, %25 : vector<4x64xi32>
    %27 = arith.xori %24, %26 : vector<4x64xi1>
    %cst_18 = arith.constant dense<true> : vector<4x64xi1>
    %28 = arith.xori %27, %cst_18 : vector<4x64xi1>
    %c0_19 = arith.constant 0 : index
    %c0_20 = arith.constant 0 : index
    %29 = vector.load %arg9[%c0_19, %c0_20] : memref<4x32xf32, #tpu.memory_space<vmem>>, vector<4x32xf32>
    %c0_21 = arith.constant 0 : index
    %c0_22 = arith.constant 0 : index
    %30 = vector.load %arg10[%c0_21, %c0_22] : memref<4x32xf32, #tpu.memory_space<vmem>>, vector<4x32xf32>
    %c0_23 = arith.constant 0 : index
    %c0_24 = arith.constant 0 : index
    %31 = vector.load %arg11[%c0_23, %c0_24] : memref<16x128xbf16, #tpu.memory_space<vmem>>, vector<2x128xbf16>
    %c14 = arith.constant 14 : index
    %c0_25 = arith.constant 0 : index
    %32 = vector.load %arg12[%c14, %c0_25] : memref<16x128xbf16, #tpu.memory_space<vmem>>, vector<2x128xbf16>
    %33 = tpu.concatenate %31, %32 in 0 : vector<2x128xbf16>, vector<2x128xbf16> -> vector<4x128xbf16>
    %34 = arith.extf %33 : vector<4x128xbf16> to vector<4x128xf32>
    %35 = tpu.concatenate %29, %29 in 1 : vector<4x32xf32>, vector<4x32xf32> -> vector<4x64xf32>
    %cst_26 = arith.constant 0.000000e+00 : f32
    %36 = vector.broadcast %cst_26 : f32 to vector<4x64xf32>
    %37 = arith.select %28, %35, %36 : vector<4x64xi1>, vector<4x64xf32>
    %38 = arith.addf %34, %20 : vector<4x128xf32>
    %39 = arith.truncf %37 : vector<4x64xf32> to vector<4x64xbf16>
    %cst_27 = arith.constant dense<0.000000e+00> : vector<4x128xf32>
    %40 = tpu.matmul %39, %13, %cst_27 {dimension_numbers = #tpu.dot_dimension_numbers<[1], [0], [0], [1], [0, 0, 1, 1], [], []>} : vector<4x64xbf16>, vector<64x128xbf16>, vector<4x128xf32> -> vector<4x128xf32>
    %41 = arith.addf %38, %40 : vector<4x128xf32>
    %42 = vector.extract_strided_slice %41 {offsets = [0, 0], sizes = [4, 32], strides = [1, 1]} : vector<4x128xf32> to vector<4x32xf32>
    %43 = arith.negf %42 : vector<4x32xf32>
    %44 = math.exp %43 : vector<4x32xf32>
    %cst_28 = arith.constant 1.000000e+00 : f32
    %45 = vector.broadcast %cst_28 : f32 to vector<4x32xf32>
    %46 = arith.addf %45, %44 : vector<4x32xf32>
    %47 = arith.divf %45, %46 : vector<4x32xf32>
    %48 = vector.extract_strided_slice %41 {offsets = [0, 32], sizes = [4, 32], strides = [1, 1]} : vector<4x128xf32> to vector<4x32xf32>
    %49 = arith.negf %48 : vector<4x32xf32>
    %50 = math.exp %49 : vector<4x32xf32>
    %cst_29 = arith.constant 1.000000e+00 : f32
    %51 = vector.broadcast %cst_29 : f32 to vector<4x32xf32>
    %52 = arith.addf %51, %50 : vector<4x32xf32>
    %53 = arith.divf %51, %52 : vector<4x32xf32>
    %54 = vector.extract_strided_slice %41 {offsets = [0, 64], sizes = [4, 32], strides = [1, 1]} : vector<4x128xf32> to vector<4x32xf32>
    %55 = math.tanh %54 : vector<4x32xf32>
    %56 = vector.extract_strided_slice %41 {offsets = [0, 96], sizes = [4, 32], strides = [1, 1]} : vector<4x128xf32> to vector<4x32xf32>
    %57 = arith.negf %56 : vector<4x32xf32>
    %58 = math.exp %57 : vector<4x32xf32>
    %cst_30 = arith.constant 1.000000e+00 : f32
    %59 = vector.broadcast %cst_30 : f32 to vector<4x32xf32>
    %60 = arith.addf %59, %58 : vector<4x32xf32>
    %61 = arith.divf %59, %60 : vector<4x32xf32>
    %62 = arith.mulf %53, %30 : vector<4x32xf32>
    %63 = arith.mulf %47, %55 : vector<4x32xf32>
    %64 = arith.addf %62, %63 : vector<4x32xf32>
    %65 = math.tanh %64 : vector<4x32xf32>
    %66 = arith.mulf %61, %65 : vector<4x32xf32>
    %67 = vector.extract_strided_slice %66 {offsets = [0, 0], sizes = [2, 32], strides = [1, 1]} : vector<4x32xf32> to vector<2x32xf32>
    %c0_31 = arith.constant 0 : index
    %c0_32 = arith.constant 0 : index
    %68 = vector.load %arg7[%c0_31, %c0_32] : memref<16x32xf32, #tpu.memory_space<vmem>>, vector<2x32xf32>
    tpu.vector_store %arg7[%c0_31, %c0_32], %67 {strides = array<i32>} : memref<16x32xf32, #tpu.memory_space<vmem>>, vector<2x32xf32>,
    %69 = vector.extract_strided_slice %66 {offsets = [2, 0], sizes = [2, 32], strides = [1, 1]} : vector<4x32xf32> to vector<2x32xf32>
    %c14_33 = arith.constant 14 : index
    %c0_34 = arith.constant 0 : index
    %70 = vector.load %arg8[%c14_33, %c0_34] : memref<16x32xf32, #tpu.memory_space<vmem>>, vector<2x32xf32>
    tpu.vector_store %arg8[%c14_33, %c0_34], %69 {strides = array<i32>} : memref<16x32xf32, #tpu.memory_space<vmem>>, vector<2x32xf32>,
    %c2 = arith.constant 2 : index
    %c0_35 = arith.constant 0 : index
    %71 = vector.load %arg11[%c2, %c0_35] : memref<16x128xbf16, #tpu.memory_space<vmem>>, vector<2x128xbf16>
    %c12 = arith.constant 12 : index
    %c0_36 = arith.constant 0 : index
    %72 = vector.load %arg12[%c12, %c0_36] : memref<16x128xbf16, #tpu.memory_space<vmem>>, vector<2x128xbf16>
    %73 = tpu.concatenate %71, %72 in 0 : vector<2x128xbf16>, vector<2x128xbf16> -> vector<4x128xbf16>
    %74 = arith.extf %73 : vector<4x128xbf16> to vector<4x128xf32>
    %75 = tpu.concatenate %66, %66 in 1 : vector<4x32xf32>, vector<4x32xf32> -> vector<4x64xf32>
    %cst_37 = arith.constant 0.000000e+00 : f32
    %76 = vector.broadcast %cst_37 : f32 to vector<4x64xf32>
    %77 = arith.select %28, %75, %76 : vector<4x64xi1>, vector<4x64xf32>
    %78 = arith.addf %74, %20 : vector<4x128xf32>
    %79 = arith.truncf %77 : vector<4x64xf32> to vector<4x64xbf16>
    %cst_38 = arith.constant dense<0.000000e+00> : vector<4x128xf32>
    %80 = tpu.matmul %79, %13, %cst_38 {dimension_numbers = #tpu.dot_dimension_numbers<[1], [0], [0], [1], [0, 0, 1, 1], [], []>} : vector<4x64xbf16>, vector<64x128xbf16>, vector<4x128xf32> -> vector<4x128xf32>
    %81 = arith.addf %78, %80 : vector<4x128xf32>
    %82 = vector.extract_strided_slice %81 {offsets = [0, 0], sizes = [4, 32], strides = [1, 1]} : vector<4x128xf32> to vector<4x32xf32>
    %83 = arith.negf %82 : vector<4x32xf32>
    %84 = math.exp %83 : vector<4x32xf32>
    %cst_39 = arith.constant 1.000000e+00 : f32
    %85 = vector.broadcast %cst_39 : f32 to vector<4x32xf32>
    %86 = arith.addf %85, %84 : vector<4x32xf32>
    %87 = arith.divf %85, %86 : vector<4x32xf32>
    %88 = vector.extract_strided_slice %81 {offsets = [0, 32], sizes = [4, 32], strides = [1, 1]} : vector<4x128xf32> to vector<4x32xf32>
    %89 = arith.negf %88 : vector<4x32xf32>
    %90 = math.exp %89 : vector<4x32xf32>
    %cst_40 = arith.constant 1.000000e+00 : f32
    %91 = vector.broadcast %cst_40 : f32 to vector<4x32xf32>
    %92 = arith.addf %91, %90 : vector<4x32xf32>
    %93 = arith.divf %91, %92 : vector<4x32xf32>
    %94 = vector.extract_strided_slice %81 {offsets = [0, 64], sizes = [4, 32], strides = [1, 1]} : vector<4x128xf32> to vector<4x32xf32>
    %95 = math.tanh %94 : vector<4x32xf32>
    %96 = vector.extract_strided_slice %81 {offsets = [0, 96], sizes = [4, 32], strides = [1, 1]} : vector<4x128xf32> to vector<4x32xf32>
    %97 = arith.negf %96 : vector<4x32xf32>
    %98 = math.exp %97 : vector<4x32xf32>
    %cst_41 = arith.constant 1.000000e+00 : f32
    %99 = vector.broadcast %cst_41 : f32 to vector<4x32xf32>
    %100 = arith.addf %99, %98 : vector<4x32xf32>
    %101 = arith.divf %99, %100 : vector<4x32xf32>
    %102 = arith.mulf %93, %64 : vector<4x32xf32>
    %103 = arith.mulf %87, %95 : vector<4x32xf32>
    %104 = arith.addf %102, %103 : vector<4x32xf32>
    %105 = math.tanh %104 : vector<4x32xf32>
    %106 = arith.mulf %101, %105 : vector<4x32xf32>
    %107 = vector.extract_strided_slice %106 {offsets = [0, 0], sizes = [2, 32], strides = [1, 1]} : vector<4x32xf32> to vector<2x32xf32>
    %c2_42 = arith.constant 2 : index
    %c0_43 = arith.constant 0 : index
    %108 = vector.load %arg7[%c2_42, %c0_43] : memref<16x32xf32, #tpu.memory_space<vmem>>, vector<2x32xf32>
    tpu.vector_store %arg7[%c2_42, %c0_43], %107 {strides = array<i32>} : memref<16x32xf32, #tpu.memory_space<vmem>>, vector<2x32xf32>,
    %109 = vector.extract_strided_slice %106 {offsets = [2, 0], sizes = [2, 32], strides = [1, 1]} : vector<4x32xf32> to vector<2x32xf32>
    %c12_44 = arith.constant 12 : index
    %c0_45 = arith.constant 0 : index
    %110 = vector.load %arg8[%c12_44, %c0_45] : memref<16x32xf32, #tpu.memory_space<vmem>>, vector<2x32xf32>
    tpu.vector_store %arg8[%c12_44, %c0_45], %109 {strides = array<i32>} : memref<16x32xf32, #tpu.memory_space<vmem>>, vector<2x32xf32>,
    %c4 = arith.constant 4 : index
    %c0_46 = arith.constant 0 : index
    %111 = vector.load %arg11[%c4, %c0_46] : memref<16x128xbf16, #tpu.memory_space<vmem>>, vector<2x128xbf16>
    %c10 = arith.constant 10 : index
    %c0_47 = arith.constant 0 : index
    %112 = vector.load %arg12[%c10, %c0_47] : memref<16x128xbf16, #tpu.memory_space<vmem>>, vector<2x128xbf16>
    %113 = tpu.concatenate %111, %112 in 0 : vector<2x128xbf16>, vector<2x128xbf16> -> vector<4x128xbf16>
    %114 = arith.extf %113 : vector<4x128xbf16> to vector<4x128xf32>
    %115 = tpu.concatenate %106, %106 in 1 : vector<4x32xf32>, vector<4x32xf32> -> vector<4x64xf32>
    %cst_48 = arith.constant 0.000000e+00 : f32
    %116 = vector.broadcast %cst_48 : f32 to vector<4x64xf32>
    %117 = arith.select %28, %115, %116 : vector<4x64xi1>, vector<4x64xf32>
    %118 = arith.addf %114, %20 : vector<4x128xf32>
    %119 = arith.truncf %117 : vector<4x64xf32> to vector<4x64xbf16>
    %cst_49 = arith.constant dense<0.000000e+00> : vector<4x128xf32>
    %120 = tpu.matmul %119, %13, %cst_49 {dimension_numbers = #tpu.dot_dimension_numbers<[1], [0], [0], [1], [0, 0, 1, 1], [], []>} : vector<4x64xbf16>, vector<64x128xbf16>, vector<4x128xf32> -> vector<4x128xf32>
    %121 = arith.addf %118, %120 : vector<4x128xf32>
    %122 = vector.extract_strided_slice %121 {offsets = [0, 0], sizes = [4, 32], strides = [1, 1]} : vector<4x128xf32> to vector<4x32xf32>
    %123 = arith.negf %122 : vector<4x32xf32>
    %124 = math.exp %123 : vector<4x32xf32>
    %cst_50 = arith.constant 1.000000e+00 : f32
    %125 = vector.broadcast %cst_50 : f32 to vector<4x32xf32>
    %126 = arith.addf %125, %124 : vector<4x32xf32>
    %127 = arith.divf %125, %126 : vector<4x32xf32>
    %128 = vector.extract_strided_slice %121 {offsets = [0, 32], sizes = [4, 32], strides = [1, 1]} : vector<4x128xf32> to vector<4x32xf32>
    %129 = arith.negf %128 : vector<4x32xf32>
    %130 = math.exp %129 : vector<4x32xf32>
    %cst_51 = arith.constant 1.000000e+00 : f32
    %131 = vector.broadcast %cst_51 : f32 to vector<4x32xf32>
    %132 = arith.addf %131, %130 : vector<4x32xf32>
    %133 = arith.divf %131, %132 : vector<4x32xf32>
    %134 = vector.extract_strided_slice %121 {offsets = [0, 64], sizes = [4, 32], strides = [1, 1]} : vector<4x128xf32> to vector<4x32xf32>
    %135 = math.tanh %134 : vector<4x32xf32>
    %136 = vector.extract_strided_slice %121 {offsets = [0, 96], sizes = [4, 32], strides = [1, 1]} : vector<4x128xf32> to vector<4x32xf32>
    %137 = arith.negf %136 : vector<4x32xf32>
    %138 = math.exp %137 : vector<4x32xf32>
    %cst_52 = arith.constant 1.000000e+00 : f32
    %139 = vector.broadcast %cst_52 : f32 to vector<4x32xf32>
    %140 = arith.addf %139, %138 : vector<4x32xf32>
    %141 = arith.divf %139, %140 : vector<4x32xf32>
    %142 = arith.mulf %133, %104 : vector<4x32xf32>
    %143 = arith.mulf %127, %135 : vector<4x32xf32>
    %144 = arith.addf %142, %143 : vector<4x32xf32>
    %145 = math.tanh %144 : vector<4x32xf32>
    %146 = arith.mulf %141, %145 : vector<4x32xf32>
    %147 = vector.extract_strided_slice %146 {offsets = [0, 0], sizes = [2, 32], strides = [1, 1]} : vector<4x32xf32> to vector<2x32xf32>
    %c4_53 = arith.constant 4 : index
    %c0_54 = arith.constant 0 : index
    %148 = vector.load %arg7[%c4_53, %c0_54] : memref<16x32xf32, #tpu.memory_space<vmem>>, vector<2x32xf32>
    tpu.vector_store %arg7[%c4_53, %c0_54], %147 {strides = array<i32>} : memref<16x32xf32, #tpu.memory_space<vmem>>, vector<2x32xf32>,
    %149 = vector.extract_strided_slice %146 {offsets = [2, 0], sizes = [2, 32], strides = [1, 1]} : vector<4x32xf32> to vector<2x32xf32>
    %c10_55 = arith.constant 10 : index
    %c0_56 = arith.constant 0 : index
    %150 = vector.load %arg8[%c10_55, %c0_56] : memref<16x32xf32, #tpu.memory_space<vmem>>, vector<2x32xf32>
    tpu.vector_store %arg8[%c10_55, %c0_56], %149 {strides = array<i32>} : memref<16x32xf32, #tpu.memory_space<vmem>>, vector<2x32xf32>,
    %c6 = arith.constant 6 : index
    %c0_57 = arith.constant 0 : index
    %151 = vector.load %arg11[%c6, %c0_57] : memref<16x128xbf16, #tpu.memory_space<vmem>>, vector<2x128xbf16>
    %c8 = arith.constant 8 : index
    %c0_58 = arith.constant 0 : index
    %152 = vector.load %arg12[%c8, %c0_58] : memref<16x128xbf16, #tpu.memory_space<vmem>>, vector<2x128xbf16>
    %153 = tpu.concatenate %151, %152 in 0 : vector<2x128xbf16>, vector<2x128xbf16> -> vector<4x128xbf16>
    %154 = arith.extf %153 : vector<4x128xbf16> to vector<4x128xf32>
    %155 = tpu.concatenate %146, %146 in 1 : vector<4x32xf32>, vector<4x32xf32> -> vector<4x64xf32>
    %cst_59 = arith.constant 0.000000e+00 : f32
    %156 = vector.broadcast %cst_59 : f32 to vector<4x64xf32>
    %157 = arith.select %28, %155, %156 : vector<4x64xi1>, vector<4x64xf32>
    %158 = arith.addf %154, %20 : vector<4x128xf32>
    %159 = arith.truncf %157 : vector<4x64xf32> to vector<4x64xbf16>
    %cst_60 = arith.constant dense<0.000000e+00> : vector<4x128xf32>
    %160 = tpu.matmul %159, %13, %cst_60 {dimension_numbers = #tpu.dot_dimension_numbers<[1], [0], [0], [1], [0, 0, 1, 1], [], []>} : vector<4x64xbf16>, vector<64x128xbf16>, vector<4x128xf32> -> vector<4x128xf32>
    %161 = arith.addf %158, %160 : vector<4x128xf32>
    %162 = vector.extract_strided_slice %161 {offsets = [0, 0], sizes = [4, 32], strides = [1, 1]} : vector<4x128xf32> to vector<4x32xf32>
    %163 = arith.negf %162 : vector<4x32xf32>
    %164 = math.exp %163 : vector<4x32xf32>
    %cst_61 = arith.constant 1.000000e+00 : f32
    %165 = vector.broadcast %cst_61 : f32 to vector<4x32xf32>
    %166 = arith.addf %165, %164 : vector<4x32xf32>
    %167 = arith.divf %165, %166 : vector<4x32xf32>
    %168 = vector.extract_strided_slice %161 {offsets = [0, 32], sizes = [4, 32], strides = [1, 1]} : vector<4x128xf32> to vector<4x32xf32>
    %169 = arith.negf %168 : vector<4x32xf32>
    %170 = math.exp %169 : vector<4x32xf32>
    %cst_62 = arith.constant 1.000000e+00 : f32
    %171 = vector.broadcast %cst_62 : f32 to vector<4x32xf32>
    %172 = arith.addf %171, %170 : vector<4x32xf32>
    %173 = arith.divf %171, %172 : vector<4x32xf32>
    %174 = vector.extract_strided_slice %161 {offsets = [0, 64], sizes = [4, 32], strides = [1, 1]} : vector<4x128xf32> to vector<4x32xf32>
    %175 = math.tanh %174 : vector<4x32xf32>
    %176 = vector.extract_strided_slice %161 {offsets = [0, 96], sizes = [4, 32], strides = [1, 1]} : vector<4x128xf32> to vector<4x32xf32>
    %177 = arith.negf %176 : vector<4x32xf32>
    %178 = math.exp %177 : vector<4x32xf32>
    %cst_63 = arith.constant 1.000000e+00 : f32
    %179 = vector.broadcast %cst_63 : f32 to vector<4x32xf32>
    %180 = arith.addf %179, %178 : vector<4x32xf32>
    %181 = arith.divf %179, %180 : vector<4x32xf32>
    %182 = arith.mulf %173, %144 : vector<4x32xf32>
    %183 = arith.mulf %167, %175 : vector<4x32xf32>
    %184 = arith.addf %182, %183 : vector<4x32xf32>
    %185 = math.tanh %184 : vector<4x32xf32>
    %186 = arith.mulf %181, %185 : vector<4x32xf32>
    %187 = vector.extract_strided_slice %186 {offsets = [0, 0], sizes = [2, 32], strides = [1, 1]} : vector<4x32xf32> to vector<2x32xf32>
    %c6_64 = arith.constant 6 : index
    %c0_65 = arith.constant 0 : index
    %188 = vector.load %arg7[%c6_64, %c0_65] : memref<16x32xf32, #tpu.memory_space<vmem>>, vector<2x32xf32>
    tpu.vector_store %arg7[%c6_64, %c0_65], %187 {strides = array<i32>} : memref<16x32xf32, #tpu.memory_space<vmem>>, vector<2x32xf32>,
    %189 = vector.extract_strided_slice %186 {offsets = [2, 0], sizes = [2, 32], strides = [1, 1]} : vector<4x32xf32> to vector<2x32xf32>
    %c8_66 = arith.constant 8 : index
    %c0_67 = arith.constant 0 : index
    %190 = vector.load %arg8[%c8_66, %c0_67] : memref<16x32xf32, #tpu.memory_space<vmem>>, vector<2x32xf32>
    tpu.vector_store %arg8[%c8_66, %c0_67], %189 {strides = array<i32>} : memref<16x32xf32, #tpu.memory_space<vmem>>, vector<2x32xf32>,
    %c8_68 = arith.constant 8 : index
    %c0_69 = arith.constant 0 : index
    %191 = vector.load %arg11[%c8_68, %c0_69] : memref<16x128xbf16, #tpu.memory_space<vmem>>, vector<2x128xbf16>
    %c6_70 = arith.constant 6 : index
    %c0_71 = arith.constant 0 : index
    %192 = vector.load %arg12[%c6_70, %c0_71] : memref<16x128xbf16, #tpu.memory_space<vmem>>, vector<2x128xbf16>
    %193 = tpu.concatenate %191, %192 in 0 : vector<2x128xbf16>, vector<2x128xbf16> -> vector<4x128xbf16>
    %194 = arith.extf %193 : vector<4x128xbf16> to vector<4x128xf32>
    %195 = tpu.concatenate %186, %186 in 1 : vector<4x32xf32>, vector<4x32xf32> -> vector<4x64xf32>
    %cst_72 = arith.constant 0.000000e+00 : f32
    %196 = vector.broadcast %cst_72 : f32 to vector<4x64xf32>
    %197 = arith.select %28, %195, %196 : vector<4x64xi1>, vector<4x64xf32>
    %198 = arith.addf %194, %20 : vector<4x128xf32>
    %199 = arith.truncf %197 : vector<4x64xf32> to vector<4x64xbf16>
    %cst_73 = arith.constant dense<0.000000e+00> : vector<4x128xf32>
    %200 = tpu.matmul %199, %13, %cst_73 {dimension_numbers = #tpu.dot_dimension_numbers<[1], [0], [0], [1], [0, 0, 1, 1], [], []>} : vector<4x64xbf16>, vector<64x128xbf16>, vector<4x128xf32> -> vector<4x128xf32>
    %201 = arith.addf %198, %200 : vector<4x128xf32>
    %202 = vector.extract_strided_slice %201 {offsets = [0, 0], sizes = [4, 32], strides = [1, 1]} : vector<4x128xf32> to vector<4x32xf32>
    %203 = arith.negf %202 : vector<4x32xf32>
    %204 = math.exp %203 : vector<4x32xf32>
    %cst_74 = arith.constant 1.000000e+00 : f32
    %205 = vector.broadcast %cst_74 : f32 to vector<4x32xf32>
    %206 = arith.addf %205, %204 : vector<4x32xf32>
    %207 = arith.divf %205, %206 : vector<4x32xf32>
    %208 = vector.extract_strided_slice %201 {offsets = [0, 32], sizes = [4, 32], strides = [1, 1]} : vector<4x128xf32> to vector<4x32xf32>
    %209 = arith.negf %208 : vector<4x32xf32>
    %210 = math.exp %209 : vector<4x32xf32>
    %cst_75 = arith.constant 1.000000e+00 : f32
    %211 = vector.broadcast %cst_75 : f32 to vector<4x32xf32>
    %212 = arith.addf %211, %210 : vector<4x32xf32>
    %213 = arith.divf %211, %212 : vector<4x32xf32>
    %214 = vector.extract_strided_slice %201 {offsets = [0, 64], sizes = [4, 32], strides = [1, 1]} : vector<4x128xf32> to vector<4x32xf32>
    %215 = math.tanh %214 : vector<4x32xf32>
    %216 = vector.extract_strided_slice %201 {offsets = [0, 96], sizes = [4, 32], strides = [1, 1]} : vector<4x128xf32> to vector<4x32xf32>
    %217 = arith.negf %216 : vector<4x32xf32>
    %218 = math.exp %217 : vector<4x32xf32>
    %cst_76 = arith.constant 1.000000e+00 : f32
    %219 = vector.broadcast %cst_76 : f32 to vector<4x32xf32>
    %220 = arith.addf %219, %218 : vector<4x32xf32>
    %221 = arith.divf %219, %220 : vector<4x32xf32>
    %222 = arith.mulf %213, %184 : vector<4x32xf32>
    %223 = arith.mulf %207, %215 : vector<4x32xf32>
    %224 = arith.addf %222, %223 : vector<4x32xf32>
    %225 = math.tanh %224 : vector<4x32xf32>
    %226 = arith.mulf %221, %225 : vector<4x32xf32>
    %227 = vector.extract_strided_slice %226 {offsets = [0, 0], sizes = [2, 32], strides = [1, 1]} : vector<4x32xf32> to vector<2x32xf32>
    %c8_77 = arith.constant 8 : index
    %c0_78 = arith.constant 0 : index
    %228 = vector.load %arg7[%c8_77, %c0_78] : memref<16x32xf32, #tpu.memory_space<vmem>>, vector<2x32xf32>
    tpu.vector_store %arg7[%c8_77, %c0_78], %227 {strides = array<i32>} : memref<16x32xf32, #tpu.memory_space<vmem>>, vector<2x32xf32>,
    %229 = vector.extract_strided_slice %226 {offsets = [2, 0], sizes = [2, 32], strides = [1, 1]} : vector<4x32xf32> to vector<2x32xf32>
    %c6_79 = arith.constant 6 : index
    %c0_80 = arith.constant 0 : index
    %230 = vector.load %arg8[%c6_79, %c0_80] : memref<16x32xf32, #tpu.memory_space<vmem>>, vector<2x32xf32>
    tpu.vector_store %arg8[%c6_79, %c0_80], %229 {strides = array<i32>} : memref<16x32xf32, #tpu.memory_space<vmem>>, vector<2x32xf32>,
    %c10_81 = arith.constant 10 : index
    %c0_82 = arith.constant 0 : index
    %231 = vector.load %arg11[%c10_81, %c0_82] : memref<16x128xbf16, #tpu.memory_space<vmem>>, vector<2x128xbf16>
    %c4_83 = arith.constant 4 : index
    %c0_84 = arith.constant 0 : index
    %232 = vector.load %arg12[%c4_83, %c0_84] : memref<16x128xbf16, #tpu.memory_space<vmem>>, vector<2x128xbf16>
    %233 = tpu.concatenate %231, %232 in 0 : vector<2x128xbf16>, vector<2x128xbf16> -> vector<4x128xbf16>
    %234 = arith.extf %233 : vector<4x128xbf16> to vector<4x128xf32>
    %235 = tpu.concatenate %226, %226 in 1 : vector<4x32xf32>, vector<4x32xf32> -> vector<4x64xf32>
    %cst_85 = arith.constant 0.000000e+00 : f32
    %236 = vector.broadcast %cst_85 : f32 to vector<4x64xf32>
    %237 = arith.select %28, %235, %236 : vector<4x64xi1>, vector<4x64xf32>
    %238 = arith.addf %234, %20 : vector<4x128xf32>
    %239 = arith.truncf %237 : vector<4x64xf32> to vector<4x64xbf16>
    %cst_86 = arith.constant dense<0.000000e+00> : vector<4x128xf32>
    %240 = tpu.matmul %239, %13, %cst_86 {dimension_numbers = #tpu.dot_dimension_numbers<[1], [0], [0], [1], [0, 0, 1, 1], [], []>} : vector<4x64xbf16>, vector<64x128xbf16>, vector<4x128xf32> -> vector<4x128xf32>
    %241 = arith.addf %238, %240 : vector<4x128xf32>
    %242 = vector.extract_strided_slice %241 {offsets = [0, 0], sizes = [4, 32], strides = [1, 1]} : vector<4x128xf32> to vector<4x32xf32>
    %243 = arith.negf %242 : vector<4x32xf32>
    %244 = math.exp %243 : vector<4x32xf32>
    %cst_87 = arith.constant 1.000000e+00 : f32
    %245 = vector.broadcast %cst_87 : f32 to vector<4x32xf32>
    %246 = arith.addf %245, %244 : vector<4x32xf32>
    %247 = arith.divf %245, %246 : vector<4x32xf32>
    %248 = vector.extract_strided_slice %241 {offsets = [0, 32], sizes = [4, 32], strides = [1, 1]} : vector<4x128xf32> to vector<4x32xf32>
    %249 = arith.negf %248 : vector<4x32xf32>
    %250 = math.exp %249 : vector<4x32xf32>
    %cst_88 = arith.constant 1.000000e+00 : f32
    %251 = vector.broadcast %cst_88 : f32 to vector<4x32xf32>
    %252 = arith.addf %251, %250 : vector<4x32xf32>
    %253 = arith.divf %251, %252 : vector<4x32xf32>
    %254 = vector.extract_strided_slice %241 {offsets = [0, 64], sizes = [4, 32], strides = [1, 1]} : vector<4x128xf32> to vector<4x32xf32>
    %255 = math.tanh %254 : vector<4x32xf32>
    %256 = vector.extract_strided_slice %241 {offsets = [0, 96], sizes = [4, 32], strides = [1, 1]} : vector<4x128xf32> to vector<4x32xf32>
    %257 = arith.negf %256 : vector<4x32xf32>
    %258 = math.exp %257 : vector<4x32xf32>
    %cst_89 = arith.constant 1.000000e+00 : f32
    %259 = vector.broadcast %cst_89 : f32 to vector<4x32xf32>
    %260 = arith.addf %259, %258 : vector<4x32xf32>
    %261 = arith.divf %259, %260 : vector<4x32xf32>
    %262 = arith.mulf %253, %224 : vector<4x32xf32>
    %263 = arith.mulf %247, %255 : vector<4x32xf32>
    %264 = arith.addf %262, %263 : vector<4x32xf32>
    %265 = math.tanh %264 : vector<4x32xf32>
    %266 = arith.mulf %261, %265 : vector<4x32xf32>
    %267 = vector.extract_strided_slice %266 {offsets = [0, 0], sizes = [2, 32], strides = [1, 1]} : vector<4x32xf32> to vector<2x32xf32>
    %c10_90 = arith.constant 10 : index
    %c0_91 = arith.constant 0 : index
    %268 = vector.load %arg7[%c10_90, %c0_91] : memref<16x32xf32, #tpu.memory_space<vmem>>, vector<2x32xf32>
    tpu.vector_store %arg7[%c10_90, %c0_91], %267 {strides = array<i32>} : memref<16x32xf32, #tpu.memory_space<vmem>>, vector<2x32xf32>,
    %269 = vector.extract_strided_slice %266 {offsets = [2, 0], sizes = [2, 32], strides = [1, 1]} : vector<4x32xf32> to vector<2x32xf32>
    %c4_92 = arith.constant 4 : index
    %c0_93 = arith.constant 0 : index
    %270 = vector.load %arg8[%c4_92, %c0_93] : memref<16x32xf32, #tpu.memory_space<vmem>>, vector<2x32xf32>
    tpu.vector_store %arg8[%c4_92, %c0_93], %269 {strides = array<i32>} : memref<16x32xf32, #tpu.memory_space<vmem>>, vector<2x32xf32>,
    %c12_94 = arith.constant 12 : index
    %c0_95 = arith.constant 0 : index
    %271 = vector.load %arg11[%c12_94, %c0_95] : memref<16x128xbf16, #tpu.memory_space<vmem>>, vector<2x128xbf16>
    %c2_96 = arith.constant 2 : index
    %c0_97 = arith.constant 0 : index
    %272 = vector.load %arg12[%c2_96, %c0_97] : memref<16x128xbf16, #tpu.memory_space<vmem>>, vector<2x128xbf16>
    %273 = tpu.concatenate %271, %272 in 0 : vector<2x128xbf16>, vector<2x128xbf16> -> vector<4x128xbf16>
    %274 = arith.extf %273 : vector<4x128xbf16> to vector<4x128xf32>
    %275 = tpu.concatenate %266, %266 in 1 : vector<4x32xf32>, vector<4x32xf32> -> vector<4x64xf32>
    %cst_98 = arith.constant 0.000000e+00 : f32
    %276 = vector.broadcast %cst_98 : f32 to vector<4x64xf32>
    %277 = arith.select %28, %275, %276 : vector<4x64xi1>, vector<4x64xf32>
    %278 = arith.addf %274, %20 : vector<4x128xf32>
    %279 = arith.truncf %277 : vector<4x64xf32> to vector<4x64xbf16>
    %cst_99 = arith.constant dense<0.000000e+00> : vector<4x128xf32>
    %280 = tpu.matmul %279, %13, %cst_99 {dimension_numbers = #tpu.dot_dimension_numbers<[1], [0], [0], [1], [0, 0, 1, 1], [], []>} : vector<4x64xbf16>, vector<64x128xbf16>, vector<4x128xf32> -> vector<4x128xf32>
    %281 = arith.addf %278, %280 : vector<4x128xf32>
    %282 = vector.extract_strided_slice %281 {offsets = [0, 0], sizes = [4, 32], strides = [1, 1]} : vector<4x128xf32> to vector<4x32xf32>
    %283 = arith.negf %282 : vector<4x32xf32>
    %284 = math.exp %283 : vector<4x32xf32>
    %cst_100 = arith.constant 1.000000e+00 : f32
    %285 = vector.broadcast %cst_100 : f32 to vector<4x32xf32>
    %286 = arith.addf %285, %284 : vector<4x32xf32>
    %287 = arith.divf %285, %286 : vector<4x32xf32>
    %288 = vector.extract_strided_slice %281 {offsets = [0, 32], sizes = [4, 32], strides = [1, 1]} : vector<4x128xf32> to vector<4x32xf32>
    %289 = arith.negf %288 : vector<4x32xf32>
    %290 = math.exp %289 : vector<4x32xf32>
    %cst_101 = arith.constant 1.000000e+00 : f32
    %291 = vector.broadcast %cst_101 : f32 to vector<4x32xf32>
    %292 = arith.addf %291, %290 : vector<4x32xf32>
    %293 = arith.divf %291, %292 : vector<4x32xf32>
    %294 = vector.extract_strided_slice %281 {offsets = [0, 64], sizes = [4, 32], strides = [1, 1]} : vector<4x128xf32> to vector<4x32xf32>
    %295 = math.tanh %294 : vector<4x32xf32>
    %296 = vector.extract_strided_slice %281 {offsets = [0, 96], sizes = [4, 32], strides = [1, 1]} : vector<4x128xf32> to vector<4x32xf32>
    %297 = arith.negf %296 : vector<4x32xf32>
    %298 = math.exp %297 : vector<4x32xf32>
    %cst_102 = arith.constant 1.000000e+00 : f32
    %299 = vector.broadcast %cst_102 : f32 to vector<4x32xf32>
    %300 = arith.addf %299, %298 : vector<4x32xf32>
    %301 = arith.divf %299, %300 : vector<4x32xf32>
    %302 = arith.mulf %293, %264 : vector<4x32xf32>
    %303 = arith.mulf %287, %295 : vector<4x32xf32>
    %304 = arith.addf %302, %303 : vector<4x32xf32>
    %305 = math.tanh %304 : vector<4x32xf32>
    %306 = arith.mulf %301, %305 : vector<4x32xf32>
    %307 = vector.extract_strided_slice %306 {offsets = [0, 0], sizes = [2, 32], strides = [1, 1]} : vector<4x32xf32> to vector<2x32xf32>
    %c12_103 = arith.constant 12 : index
    %c0_104 = arith.constant 0 : index
    %308 = vector.load %arg7[%c12_103, %c0_104] : memref<16x32xf32, #tpu.memory_space<vmem>>, vector<2x32xf32>
    tpu.vector_store %arg7[%c12_103, %c0_104], %307 {strides = array<i32>} : memref<16x32xf32, #tpu.memory_space<vmem>>, vector<2x32xf32>,
    %309 = vector.extract_strided_slice %306 {offsets = [2, 0], sizes = [2, 32], strides = [1, 1]} : vector<4x32xf32> to vector<2x32xf32>
    %c2_105 = arith.constant 2 : index
    %c0_106 = arith.constant 0 : index
    %310 = vector.load %arg8[%c2_105, %c0_106] : memref<16x32xf32, #tpu.memory_space<vmem>>, vector<2x32xf32>
    tpu.vector_store %arg8[%c2_105, %c0_106], %309 {strides = array<i32>} : memref<16x32xf32, #tpu.memory_space<vmem>>, vector<2x32xf32>,
    %c14_107 = arith.constant 14 : index
    %c0_108 = arith.constant 0 : index
    %311 = vector.load %arg11[%c14_107, %c0_108] : memref<16x128xbf16, #tpu.memory_space<vmem>>, vector<2x128xbf16>
    %c0_109 = arith.constant 0 : index
    %c0_110 = arith.constant 0 : index
    %312 = vector.load %arg12[%c0_109, %c0_110] : memref<16x128xbf16, #tpu.memory_space<vmem>>, vector<2x128xbf16>
    %313 = tpu.concatenate %311, %312 in 0 : vector<2x128xbf16>, vector<2x128xbf16> -> vector<4x128xbf16>
    %314 = arith.extf %313 : vector<4x128xbf16> to vector<4x128xf32>
    %315 = tpu.concatenate %306, %306 in 1 : vector<4x32xf32>, vector<4x32xf32> -> vector<4x64xf32>
    %cst_111 = arith.constant 0.000000e+00 : f32
    %316 = vector.broadcast %cst_111 : f32 to vector<4x64xf32>
    %317 = arith.select %28, %315, %316 : vector<4x64xi1>, vector<4x64xf32>
    %318 = arith.addf %314, %20 : vector<4x128xf32>
    %319 = arith.truncf %317 : vector<4x64xf32> to vector<4x64xbf16>
    %cst_112 = arith.constant dense<0.000000e+00> : vector<4x128xf32>
    %320 = tpu.matmul %319, %13, %cst_112 {dimension_numbers = #tpu.dot_dimension_numbers<[1], [0], [0], [1], [0, 0, 1, 1], [], []>} : vector<4x64xbf16>, vector<64x128xbf16>, vector<4x128xf32> -> vector<4x128xf32>
    %321 = arith.addf %318, %320 : vector<4x128xf32>
    %322 = vector.extract_strided_slice %321 {offsets = [0, 0], sizes = [4, 32], strides = [1, 1]} : vector<4x128xf32> to vector<4x32xf32>
    %323 = arith.negf %322 : vector<4x32xf32>
    %324 = math.exp %323 : vector<4x32xf32>
    %cst_113 = arith.constant 1.000000e+00 : f32
    %325 = vector.broadcast %cst_113 : f32 to vector<4x32xf32>
    %326 = arith.addf %325, %324 : vector<4x32xf32>
    %327 = arith.divf %325, %326 : vector<4x32xf32>
    %328 = vector.extract_strided_slice %321 {offsets = [0, 32], sizes = [4, 32], strides = [1, 1]} : vector<4x128xf32> to vector<4x32xf32>
    %329 = arith.negf %328 : vector<4x32xf32>
    %330 = math.exp %329 : vector<4x32xf32>
    %cst_114 = arith.constant 1.000000e+00 : f32
    %331 = vector.broadcast %cst_114 : f32 to vector<4x32xf32>
    %332 = arith.addf %331, %330 : vector<4x32xf32>
    %333 = arith.divf %331, %332 : vector<4x32xf32>
    %334 = vector.extract_strided_slice %321 {offsets = [0, 64], sizes = [4, 32], strides = [1, 1]} : vector<4x128xf32> to vector<4x32xf32>
    %335 = math.tanh %334 : vector<4x32xf32>
    %336 = vector.extract_strided_slice %321 {offsets = [0, 96], sizes = [4, 32], strides = [1, 1]} : vector<4x128xf32> to vector<4x32xf32>
    %337 = arith.negf %336 : vector<4x32xf32>
    %338 = math.exp %337 : vector<4x32xf32>
    %cst_115 = arith.constant 1.000000e+00 : f32
    %339 = vector.broadcast %cst_115 : f32 to vector<4x32xf32>
    %340 = arith.addf %339, %338 : vector<4x32xf32>
    %341 = arith.divf %339, %340 : vector<4x32xf32>
    %342 = arith.mulf %333, %304 : vector<4x32xf32>
    %343 = arith.mulf %327, %335 : vector<4x32xf32>
    %344 = arith.addf %342, %343 : vector<4x32xf32>
    %345 = math.tanh %344 : vector<4x32xf32>
    %346 = arith.mulf %341, %345 : vector<4x32xf32>
    %347 = vector.extract_strided_slice %346 {offsets = [0, 0], sizes = [2, 32], strides = [1, 1]} : vector<4x32xf32> to vector<2x32xf32>
    %c14_116 = arith.constant 14 : index
    %c0_117 = arith.constant 0 : index
    %348 = vector.load %arg7[%c14_116, %c0_117] : memref<16x32xf32, #tpu.memory_space<vmem>>, vector<2x32xf32>
    tpu.vector_store %arg7[%c14_116, %c0_117], %347 {strides = array<i32>} : memref<16x32xf32, #tpu.memory_space<vmem>>, vector<2x32xf32>,
    %349 = vector.extract_strided_slice %346 {offsets = [2, 0], sizes = [2, 32], strides = [1, 1]} : vector<4x32xf32> to vector<2x32xf32>
    %c0_118 = arith.constant 0 : index
    %c0_119 = arith.constant 0 : index
    %350 = vector.load %arg8[%c0_118, %c0_119] : memref<16x32xf32, #tpu.memory_space<vmem>>, vector<2x32xf32>
    tpu.vector_store %arg8[%c0_118, %c0_119], %349 {strides = array<i32>} : memref<16x32xf32, #tpu.memory_space<vmem>>, vector<2x32xf32>,
    %c0_120 = arith.constant 0 : index
    %c0_121 = arith.constant 0 : index
    %351 = vector.load %arg9[%c0_120, %c0_121] : memref<4x32xf32, #tpu.memory_space<vmem>>, vector<4x32xf32>
    tpu.vector_store %arg9[%c0_120, %c0_121], %346 {strides = array<i32>} : memref<4x32xf32, #tpu.memory_space<vmem>>, vector<4x32xf32>,
    %c0_122 = arith.constant 0 : index
    %c0_123 = arith.constant 0 : index
    %352 = vector.load %arg10[%c0_122, %c0_123] : memref<4x32xf32, #tpu.memory_space<vmem>>, vector<4x32xf32>
    tpu.vector_store %arg10[%c0_122, %c0_123], %344 {strides = array<i32>} : memref<4x32xf32, #tpu.memory_space<vmem>>, vector<4x32xf32>,
    return
  }
  func.func @transform_0(%arg0: i32) -> (i32, i32) {
    %c0_i32 = arith.constant 0 : i32
    %c0_i32_0 = arith.constant 0 : i32
    return %arg0, %c0_i32 : i32, i32
  }
  func.func @transform_1(%arg0: i32) -> (i32, i32) {
    %c0_i32 = arith.constant 0 : i32
    %0 = arith.subi %c0_i32, %arg0 : i32
    %c0_i32_0 = arith.constant 0 : i32
    %c0_i32_1 = arith.constant 0 : i32
    return %0, %c0_i32_0 : i32, i32
  }
  func.func @transform_2(%arg0: i32) -> (i32, i32) {
    %c0_i32 = arith.constant 0 : i32
    %c0_i32_0 = arith.constant 0 : i32
    %c0_i32_1 = arith.constant 0 : i32
    return %c0_i32, %c0_i32_0 : i32, i32
  }
  func.func @transform_3(%arg0: i32) -> (i32, i32) {
    %c0_i32 = arith.constant 0 : i32
    %c0_i32_0 = arith.constant 0 : i32
    %c0_i32_1 = arith.constant 0 : i32
    return %c0_i32, %c0_i32_0 : i32, i32
  }
  func.func @transform_4(%arg0: i32) -> (i32, i32) {
    %c0_i32 = arith.constant 0 : i32
    %c0_i32_0 = arith.constant 0 : i32
    %c0_i32_1 = arith.constant 0 : i32
    return %c0_i32, %c0_i32_0 : i32, i32
  }
  func.func @transform_5(%arg0: i32) -> (i32, i32) {
    %c0_i32 = arith.constant 0 : i32
    %c0_i32_0 = arith.constant 0 : i32
    %c0_i32_1 = arith.constant 0 : i32
    return %c0_i32, %c0_i32_0 : i32, i32
  }
  func.func @transform_6(%arg0: i32) -> (i32, i32) {
    %c0_i32 = arith.constant 0 : i32
    %c0_i32_0 = arith.constant 0 : i32
    return %arg0, %c0_i32 : i32, i32
  }
  func.func @transform_7(%arg0: i32) -> (i32, i32) {
    %c0_i32 = arith.constant 0 : i32
    %0 = arith.subi %c0_i32, %arg0 : i32
    %c0_i32_0 = arith.constant 0 : i32
    %c0_i32_1 = arith.constant 0 : i32
    return %0, %c0_i32_0 : i32, i32
  }
}

</mosaic_0001>

<llo_original>
// kernel: speaker_encoder_forward.4
$region0: #{speaker_encoder_forward.4}
  #allocation0 [shape = 'u32[]', space=smem, size = 0x4, offset = 0x4, fixed_abs, tag = 'smem constant byte address 0x4 - core index']
  #allocation1 [shape = 'u32[72,128]{1,0:T(1,128)}', space=vmem, size = 0x9000, scoped, tag = 'internal scratch']
  %s0 = inlined_call_operand.vmem [shape: f32[16,64], index: 0, kind: input, shape index: {}]
  %s1 = inlined_call_operand.vmem [shape: bf16[16,512], index: 1, kind: input, shape index: {}]
  %s2 = inlined_call_operand.hbm [shape: bf16[64,128], index: 2, kind: input, shape index: {}]
  %s3 = inlined_call_operand.vmem [shape: bf16[128,64], index: 3, kind: input, shape index: {}]
  %s4 = inlined_call_operand.vmem [shape: bf16[64,64], index: 4, kind: input, shape index: {}]
  %s5 = inlined_call_operand.vmem [shape: bf16[16,64], index: 5, kind: output, shape index: {}]
  %s6 = sld [smem:[#allocation0]]
  $region57: #{speaker_encoder_forward.4} parent=0
    _
  %s8 = ssub.s32 1, %s6
  %s9 = scalar_select 0, %s8, %s6
  $region1: #{speaker_encoder_forward.4} parent=0
    #allocation2 [shape = 'u8[16384]{0}', space=vmem, size = 0x4000, scoped, tag = 'input window, operand 2, single buffered']
    #allocation3 [shape = 's32[2]{0}', space=sflag, size = 0x8, scoped, tag = 'scoped memory for speaker_encoder_forward.4']
    %10 = vsyncpa [#allocation3], 0
    loop: start=0, step=1, limit=4
    $region2: #{speaker_encoder_forward.4} parent=1 // loop_pre_header
      _
    $region3: #{speaker_encoder_forward.4} parent=1 // loop_header
      %s12 = sphi 0, %s16
      %p13 = scmp.ge.s32.totalorder %s12, 4
      %s22 = sphi 0, %s24
      %s25 = sphi 0, %s22
      %s26 = sphi 0, %s25
      %s42 = sphi 0, %s26
      %s48 = sphi 0, %s50
      %s51 = sphi 0, %s48
      %s52 = sphi 0, %s51
      %s68 = sphi 0, %s52
      %s72 = sphi 0, %s72
      %s74 = sphi 0, %s72
      %s75 = sphi 0, %s74
      %s89 = sphi 0, %s75
      %s93 = sphi 0, %s93
      %s95 = sphi 0, %s93
      %s96 = sphi 0, %s95
      %s110 = sphi 0, %s96
      %s114 = sphi 0, %s114
      %s116 = sphi 0, %s114
      %s117 = sphi 0, %s116
      %s131 = sphi 0, %s117
      %s137 = sphi 0, %s139
      %s140 = sphi 0, %s137
      %s141 = sphi 0, %s140
      %s157 = sphi 0, %s141
    $region4: #{speaker_encoder_forward.4} parent=1 // loop_header_branch
      %15 = sbr.rel (%p13) target = $region8
    $region5: #{speaker_encoder_forward.4} parent=1 // loop_body
      %s17 = ssub.s32 %s12, 1
      %s18 = ssub.s32 %s12, 2
      %s19 = sadd.s32 %s12, 1
      %s20 = ssub.s32 %s12, %s19
      %p21 = scmp.eq.s32.totalorder %s20, 0
      %s23 = sadd.s32 %s22, 1
      %s24 = scalar_select %p21, %s22, %s23
      %p27 = pneg %p21
      %p28 = scmp.eq.s32.totalorder %s12, 1
      %p29 = por %p27, %p28
      %p30 = scmp.ne.s32.totalorder %s22, %s25
      %p31 = scmp.eq.s32.totalorder %s12, 0
      %p32 = por %p30, %p31
      %p33 = scmp.ne.s32.totalorder %s22, %s25
      %p34 = scmp.eq.s32.totalorder %s17, 1
      %p35 = por %p33, %p34
      %p36 = scmp.ne.s32.totalorder %s25, %s26
      %p37 = scmp.eq.s32.totalorder %s17, 0
      %p38 = por %p36, %p37
      %p39 = scmp.ne.s32.totalorder %s25, %s26
      %p40 = scmp.eq.s32.totalorder %s18, 1
      %p41 = por %p39, %p40
      %p43 = scmp.ne.s32.totalorder %s26, %s42
      %p44 = scmp.eq.s32.totalorder %s18, 0
      %p45 = por %p43, %p44
      %s46 = ssub.s32 %s12, %s19
      %p47 = scmp.eq.s32.totalorder %s46, 0
      %s49 = sadd.s32 %s48, 1
      %s50 = scalar_select %p47, %s48, %s49
      %p53 = pneg %p47
      %p54 = scmp.eq.s32.totalorder %s12, 1
      %p55 = por %p53, %p54
      %p56 = scmp.ne.s32.totalorder %s48, %s51
      %p57 = scmp.eq.s32.totalorder %s12, 0
      %p58 = por %p56, %p57
      %p59 = scmp.ne.s32.totalorder %s48, %s51
      %p60 = scmp.eq.s32.totalorder %s17, 1
      %p61 = por %p59, %p60
      %p62 = scmp.ne.s32.totalorder %s51, %s52
      %p63 = scmp.eq.s32.totalorder %s17, 0
      %p64 = por %p62, %p63
      %p65 = scmp.ne.s32.totalorder %s51, %s52
      %p66 = scmp.eq.s32.totalorder %s18, 1
      %p67 = por %p65, %p66
      %p69 = scmp.ne.s32.totalorder %s52, %s68
      %p70 = scmp.eq.s32.totalorder %s18, 0
      %p71 = por %p69, %p70
      %s73 = sadd.s32 %s72, 1
      %p76 = scmp.eq.s32.totalorder %s12, 1
      %p77 = scmp.ne.s32.totalorder %s72, %s74
      %p78 = scmp.eq.s32.totalorder %s12, 0
      %p79 = por %p77, %p78
      %p80 = scmp.ne.s32.totalorder %s72, %s74
      %p81 = scmp.eq.s32.totalorder %s17, 1
      %p82 = por %p80, %p81
      %p83 = scmp.ne.s32.totalorder %s74, %s75
      %p84 = scmp.eq.s32.totalorder %s17, 0
      %p85 = por %p83, %p84
      %p86 = scmp.ne.s32.totalorder %s74, %s75
      %p87 = scmp.eq.s32.totalorder %s18, 1
      %p88 = por %p86, %p87
      %p90 = scmp.ne.s32.totalorder %s75, %s89
      %p91 = scmp.eq.s32.totalorder %s18, 0
      %p92 = por %p90, %p91
      %s94 = sadd.s32 %s93, 1
      %p97 = scmp.eq.s32.totalorder %s12, 1
      %p98 = scmp.ne.s32.totalorder %s93, %s95
      %p99 = scmp.eq.s32.totalorder %s12, 0
      %p100 = por %p98, %p99
      %p101 = scmp.ne.s32.totalorder %s93, %s95
      %p102 = scmp.eq.s32.totalorder %s17, 1
      %p103 = por %p101, %p102
      %p104 = scmp.ne.s32.totalorder %s95, %s96
      %p105 = scmp.eq.s32.totalorder %s17, 0
      %p106 = por %p104, %p105
      %p107 = scmp.ne.s32.totalorder %s95, %s96
      %p108 = scmp.eq.s32.totalorder %s18, 1
      %p109 = por %p107, %p108
      %p111 = scmp.ne.s32.totalorder %s96, %s110
      %p112 = scmp.eq.s32.totalorder %s18, 0
      %p113 = por %p111, %p112
      %s115 = sadd.s32 %s114, 1
      %p118 = scmp.eq.s32.totalorder %s12, 1
      %p119 = scmp.ne.s32.totalorder %s114, %s116
      %p120 = scmp.eq.s32.totalorder %s12, 0
      %p121 = por %p119, %p120
      %p122 = scmp.ne.s32.totalorder %s114, %s116
      %p123 = scmp.eq.s32.totalorder %s17, 1
      %p124 = por %p122, %p123
      %p125 = scmp.ne.s32.totalorder %s116, %s117
      %p126 = scmp.eq.s32.totalorder %s17, 0
      %p127 = por %p125, %p126
      %p128 = scmp.ne.s32.totalorder %s116, %s117
      %p129 = scmp.eq.s32.totalorder %s18, 1
      %p130 = por %p128, %p129
      %p132 = scmp.ne.s32.totalorder %s117, %s131
      %p133 = scmp.eq.s32.totalorder %s18, 0
      %p134 = por %p132, %p133
      %s135 = ssub.s32 %s12, %s19
      %p136 = scmp.eq.s32.totalorder %s135, 0
      %s138 = sadd.s32 %s137, 1
      %s139 = scalar_select %p136, %s137, %s138
      %p142 = pneg %p136
      %p143 = scmp.eq.s32.totalorder %s12, 1
      %p144 = por %p142, %p143
      %p145 = scmp.ne.s32.totalorder %s137, %s140
      %p146 = scmp.eq.s32.totalorder %s12, 0
      %p147 = por %p145, %p146
      %p148 = scmp.ne.s32.totalorder %s137, %s140
      %p149 = scmp.eq.s32.totalorder %s17, 1
      %p150 = por %p148, %p149
      %p151 = scmp.ne.s32.totalorder %s140, %s141
      %p152 = scmp.eq.s32.totalorder %s17, 0
      %p153 = por %p151, %p152
      %p154 = scmp.ne.s32.totalorder %s140, %s141
      %p155 = scmp.eq.s32.totalorder %s18, 1
      %p156 = por %p154, %p155
      %p158 = scmp.ne.s32.totalorder %s141, %s157
      %p159 = scmp.eq.s32.totalorder %s18, 0
      %p160 = por %p158, %p159
      %p161 = scmp.le.s32.totalorder 1, %s12
      %p162 = scmp.lt.s32.totalorder %s12, 3
      %p163 = pnand %p161, %p162
      %p164 = pneg %p163
      // Predicated region
      $region9: #{speaker_encoder_forward.4} parent=5 // pred_check
        _
      $region10: #{speaker_encoder_forward.4} parent=5 // pred_check_branch
        %166 = sbr.rel (%p163) target = $region12
      $region11: #{speaker_encoder_forward.4} parent=5 // pred_region
        %s167 = ssub.s32 %s12, 1
        // Predicated region
        $region13: #{speaker_encoder_forward.4} parent=11 // pred_check
          %p168 = pneg %p85
        $region14: #{speaker_encoder_forward.4} parent=11 // pred_check_branch
          %170 = sbr.rel (%p168) target = $region16
        $region15: #{speaker_encoder_forward.4} parent=11 // pred_region
          %172 = vsyncadd [#allocation3], 0
          %s173 = sshll.u32 %s2, 4
          %s174 = int_to_ptr.hbm [resolvable:$true] %s173
          %s175 = sshll.u32 [#allocation2], 4
          %s176 = int_to_ptr.vmem [resolvable:$true] %s175
          %181 = dma.hbm_to_vmem [thread:$0]  %s174, 512, %s176, [#allocation3], 64, 64, 4
        $region16: #{speaker_encoder_forward.4} parent=11 // pred_fallthru
          _
        // Predicated region
        $region17: #{speaker_encoder_forward.4} parent=11 // pred_check
          %p182 = pneg %p106
        $region18: #{speaker_encoder_forward.4} parent=11 // pred_check_branch
          %184 = sbr.rel (%p182) target = $region20
        $region19: #{speaker_encoder_forward.4} parent=11 // pred_region
          _
        $region20: #{speaker_encoder_forward.4} parent=11 // pred_fallthru
          _
        // Predicated region
        $region21: #{speaker_encoder_forward.4} parent=11 // pred_check
          %p185 = pneg %p127
        $region22: #{speaker_encoder_forward.4} parent=11 // pred_check_branch
          %187 = sbr.rel (%p185) target = $region24
        $region23: #{speaker_encoder_forward.4} parent=11 // pred_region
          _
        $region24: #{speaker_encoder_forward.4} parent=11 // pred_fallthru
          _
      $region12: #{speaker_encoder_forward.4} parent=5 // pred_fallthru
        _
      %p188 = scmp.lt.s32.totalorder %s12, 2
      // Predicated region
      $region25: #{speaker_encoder_forward.4} parent=5 // pred_check
        %p189 = pneg %p188
      $region26: #{speaker_encoder_forward.4} parent=5 // pred_check_branch
        %191 = sbr.rel (%p189) target = $region28
      $region27: #{speaker_encoder_forward.4} parent=5 // pred_region
        // Predicated region
        $region29: #{speaker_encoder_forward.4} parent=27 // pred_check
          %p192 = pneg %p32
        $region30: #{speaker_encoder_forward.4} parent=27 // pred_check_branch
          %194 = sbr.rel (%p192) target = $region32
        $region31: #{speaker_encoder_forward.4} parent=27 // pred_region
          %p195 = scmp.lt.s32.totalorder %s12, 1
          %s196 = scalar_select %p195, %s12, 1
          %s197 = smul.addr %s196, 8
          %s198 = scalar_lea.vmem %s0, %s197
        $region32: #{speaker_encoder_forward.4} parent=27 // pred_fallthru
          _
        // Predicated region
        $region33: #{speaker_encoder_forward.4} parent=27 // pred_check
          %p199 = pneg %p58
        $region34: #{speaker_encoder_forward.4} parent=27 // pred_check_branch
          %201 = sbr.rel (%p199) target = $region36
        $region35: #{speaker_encoder_forward.4} parent=27 // pred_region
          %p202 = scmp.lt.s32.totalorder %s12, 1
          %s203 = scalar_select %p202, %s12, 1
          %s204 = smul.addr %s203, 4
          %s205 = smul.addr %s204, 4
          %s206 = scalar_lea.vmem %s1, %s205
        $region36: #{speaker_encoder_forward.4} parent=27 // pred_fallthru
          _
      $region28: #{speaker_encoder_forward.4} parent=5 // pred_fallthru
        _
      %p207 = scmp.le.s32.totalorder 1, %s12
      %p208 = scmp.lt.s32.totalorder %s12, 3
      %p209 = pnand %p207, %p208
      %p210 = pneg %p209
      // Predicated region
      $region37: #{speaker_encoder_forward.4} parent=5 // pred_check
        _
      $region38: #{speaker_encoder_forward.4} parent=5 // pred_check_branch
        %212 = sbr.rel (%p209) target = $region40
      $region39: #{speaker_encoder_forward.4} parent=5 // pred_region
        %s213 = ssub.s32 %s12, 1
        // Predicated region
        $region41: #{speaker_encoder_forward.4} parent=39 // pred_check
          %p214 = pneg %p85
        $region42: #{speaker_encoder_forward.4} parent=39 // pred_check_branch
          %216 = sbr.rel (%p214) target = $region44
        $region43: #{speaker_encoder_forward.4} parent=39 // pred_region
          %218 = dma.done [#allocation3], 512
        $region44: #{speaker_encoder_forward.4} parent=39 // pred_fallthru
          _
        %p219 = scmp.lt.s32.totalorder %s17, 1
        %s220 = scalar_select %p219, %s17, 1
        %s221 = smul.addr %s220, 8
        %s222 = scalar_lea.vmem %s0, %s221
        %p223 = pneg %p38
        %p224 = pneg %p35
        %p225 = scmp.lt.s32.totalorder %s17, 1
        %s226 = scalar_select %p225, %s17, 1
        %s227 = smul.addr %s226, 4
        %s228 = smul.addr %s227, 4
        %s229 = scalar_lea.vmem %s1, %s228
        %p230 = pneg %p64
        %p231 = pneg %p61
        %p232 = pneg %p85
        %p233 = pneg %p82
        %p234 = pneg %p106
        %p235 = pneg %p103
        %p236 = pneg %p127
        %p237 = pneg %p124
        %p238 = pneg %p153
        %p239 = pneg %p150
        %p240 = scmp.lt.s32.totalorder %s17, 1
        %s241 = scalar_select %p240, %s17, 1
        %s242 = smul.addr %s241, 4
        %s243 = scalar_lea.vmem %s5, %s242
        %p244 = scmp.lt.s32.totalorder %s17, 1
        %s245 = scalar_select %p244, %s17, 1
        %s246 = smul.addr %s245, 8
        %s247 = scalar_lea.vmem %s0, %s246
        %p248 = scmp.lt.s32.totalorder %s17, 1
        %s249 = scalar_select %p248, %s17, 1
        %s250 = smul.addr %s249, 4
        %s251 = smul.addr %s250, 4
        %s252 = scalar_lea.vmem %s1, %s251
        %p253 = scmp.lt.s32.totalorder %s17, 1
        %s254 = scalar_select %p253, %s17, 1
        %s255 = smul.addr %s254, 4
        %s256 = scalar_lea.vmem %s5, %s255
        %v258 = vld [vmem:[%s247] sm:$0xff]
        %v259 = vld [vmem:[%s252] sm:$0xff]
        %v260 = vld [vmem:[%s252 + $0x8] sm:$0xff]
        %v261 = vpack.c.bf16 %v258, %v258
        %v262 = vld [vmem:[#allocation2] sm:$0xf]
        %v263 = vld [vmem:[#allocation2 + $0x4] sm:$0xf]
        %v264 = vld [vmem:[#allocation2 + $0x8] sm:$0xf]
        %v265 = vld [vmem:[#allocation2 + $0xc] sm:$0xf]
        %v266 = vld [vmem:[#allocation2 + $0x10] sm:$0xf]
        %v267 = vld [vmem:[#allocation2 + $0x14] sm:$0xf]
        %v268 = vld [vmem:[#allocation2 + $0x18] sm:$0xf]
        %v269 = vld [vmem:[#allocation2 + $0x1c] sm:$0xf]
        %v278 = vunpack.c.l.b16 %v262
        %v279 = vunpack.c.l.b16 %v263
        %v280 = vunpack.c.l.b16 %v264
        %v281 = vunpack.c.l.b16 %v265
        %v282 = vunpack.c.l.b16 %v266
        %v283 = vunpack.c.l.b16 %v267
        %v284 = vunpack.c.l.b16 %v268
        %v285 = vunpack.c.l.b16 %v269
        %v286 = vpack.c.b16 %v279, %v278
        %v287 = vpack.c.b16 %v281, %v280
        %v288 = vpack.c.b16 %v283, %v282
        %v289 = vpack.c.b16 %v285, %v284
        %vm294 = vcmask 523264
        %v296 = vsel %vm294, %v261, 0
        %298 = vmatpush.bf16.msra.mxu0 0
        %299 = vmatpush.bf16.msra.mxu0 0
        %300 = vmatpush.bf16.msra.mxu0 0
        %301 = vmatpush.bf16.msra.mxu0 0
        %302 = vmatpush.bf16.msra.mxu0 %v289
        %303 = vmatpush.bf16.msra.mxu0 %v288
        %304 = vmatpush.bf16.msra.mxu0 %v287
        %305 = vmatpush.bf16.msra.mxu0 %v286
        %306 = vmatmul.bf16.gmra.mxu0 %v296
        %v307 = vpop.f32.mrf.mxu0
        %v308 = vadd.f32 0.0, %v307
        %v309 = vpop.f32.mrf.mxu0
        %310 = vdwg.mxu0
        %v311 = vunpack.c.l.bf16 %v259
        %v312 = vmul.f32 %v311, %v308
        %313 = vadd.xlane.f32.xlu0 %v312
        %v314 = vpop.xlane.xlu0 %313
        %v316 = vrot.slane %v259, 4
        %v318 = vunpack.c.l.bf16 %v316
        %v319 = vmul.f32 %v318, %v308
        %320 = vadd.xlane.f32.xlu0 %v319
        %v321 = vpop.xlane.xlu0 %320
        %v322 = vunpack.c.l.bf16 %v260
        %v323 = vmul.f32 %v322, %v308
        %324 = vadd.xlane.f32.xlu0 %v323
        %v325 = vpop.xlane.xlu0 %324
        %v327 = vrot.slane %v260, 4
        %v329 = vunpack.c.l.bf16 %v327
        %v330 = vmul.f32 %v329, %v308
        %331 = vadd.xlane.f32.xlu0 %v330
        %v332 = vpop.xlane.xlu0 %331
        %v333 = vmax.f32 %v314, %v321
        %v334 = vmax.f32 %v325, %v332
        %v335 = vmax.f32 %v333, %v334
        %v336 = vsub.f32 %v314, %v335
        %v337 = vmul.f32 %v336, 1.442695
        %v338 = vpow.pop %v337
        %v339 = vsub.f32 %v321, %v335
        %v340 = vmul.f32 %v339, 1.442695
        %v341 = vpow.pop %v340
        %v342 = vsub.f32 %v325, %v335
        %v343 = vmul.f32 %v342, 1.442695
        %v344 = vpow.pop %v343
        %v345 = vsub.f32 %v332, %v335
        %v346 = vmul.f32 %v345, 1.442695
        %v347 = vpow.pop %v346
        %v348 = vadd.f32 %v338, %v341
        %v349 = vadd.f32 %v344, %v347
        %v350 = vadd.f32 %v348, %v349
        %v351 = vmul.f32 %v338, %v311
        %v352 = vmul.f32 %v341, %v318
        %v353 = vmul.f32 %v344, %v322
        %v354 = vmul.f32 %v347, %v329
        %v355 = vadd.f32 %v351, %v352
        %v356 = vadd.f32 %v353, %v354
        %v357 = vadd.f32 %v355, %v356
        %v358 = vrcp.pop %v350
        %v359 = vmul.f32 %v357, %v358
        %v360 = vpack.c.bf16 %v359, %v359
        %v361 = vld [vmem:[%s3] sm:$0xf]
        %v362 = vld [vmem:[%s3 + $0x4] sm:$0xf]
        %v363 = vld [vmem:[%s3 + $0x8] sm:$0xf]
        %v364 = vld [vmem:[%s3 + $0xc] sm:$0xf]
        %v365 = vld [vmem:[%s3 + $0x10] sm:$0xf]
        %v366 = vld [vmem:[%s3 + $0x14] sm:$0xf]
        %v367 = vld [vmem:[%s3 + $0x18] sm:$0xf]
        %v368 = vld [vmem:[%s3 + $0x1c] sm:$0xf]
        %v369 = vld [vmem:[%s3 + $0x20] sm:$0xf]
        %v370 = vld [vmem:[%s3 + $0x24] sm:$0xf]
        %v371 = vld [vmem:[%s3 + $0x28] sm:$0xf]
        %v372 = vld [vmem:[%s3 + $0x2c] sm:$0xf]
        %v373 = vld [vmem:[%s3 + $0x30] sm:$0xf]
        %v374 = vld [vmem:[%s3 + $0x34] sm:$0xf]
        %v375 = vld [vmem:[%s3 + $0x38] sm:$0xf]
        %v376 = vld [vmem:[%s3 + $0x3c] sm:$0xf]
        %v377 = vld [vmem:[%s4] sm:$0xf]
        %v378 = vld [vmem:[%s4 + $0x4] sm:$0xf]
        %v379 = vld [vmem:[%s4 + $0x8] sm:$0xf]
        %v380 = vld [vmem:[%s4 + $0xc] sm:$0xf]
        %v381 = vld [vmem:[%s4 + $0x10] sm:$0xf]
        %v382 = vld [vmem:[%s4 + $0x14] sm:$0xf]
        %v383 = vld [vmem:[%s4 + $0x18] sm:$0xf]
        %v384 = vld [vmem:[%s4 + $0x1c] sm:$0xf]
        %v393 = vunpack.c.l.b16 %v377
        %v394 = vunpack.c.l.b16 %v378
        %v395 = vunpack.c.l.b16 %v379
        %v396 = vunpack.c.l.b16 %v380
        %v397 = vunpack.c.l.b16 %v381
        %v398 = vunpack.c.l.b16 %v382
        %v399 = vunpack.c.l.b16 %v383
        %v400 = vunpack.c.l.b16 %v384
        %v401 = vpack.c.b16 %v394, %v393
        %v402 = vpack.c.b16 %v396, %v395
        %v403 = vpack.c.b16 %v398, %v397
        %v404 = vpack.c.b16 %v400, %v399
        %409 = vmatpush.bf16.msra.mxu0 0
        %410 = vmatpush.bf16.msra.mxu0 0
        %411 = vmatpush.bf16.msra.mxu0 0
        %412 = vmatpush.bf16.msra.mxu0 0
        %413 = vmatpush.bf16.msra.mxu0 %v404
        %414 = vmatpush.bf16.msra.mxu0 %v403
        %415 = vmatpush.bf16.msra.mxu0 %v402
        %416 = vmatpush.bf16.msra.mxu0 %v401
        %417 = vmatmul.bf16.gmra.mxu0 %v296
        %v418 = vpop.f32.mrf.mxu0
        %v419 = vadd.f32 0.0, %v418
        %v420 = vpop.f32.mrf.mxu0
        %421 = vdwg.mxu0
        %v438 = vunpack.c.l.b16 %v361
        %v439 = vunpack.c.l.b16 %v362
        %v440 = vunpack.c.l.b16 %v363
        %v441 = vunpack.c.l.b16 %v364
        %v442 = vunpack.c.l.b16 %v365
        %v443 = vunpack.c.l.b16 %v366
        %v444 = vunpack.c.l.b16 %v367
        %v445 = vunpack.c.l.b16 %v368
        %v446 = vunpack.c.l.b16 %v369
        %v447 = vunpack.c.l.b16 %v370
        %v448 = vunpack.c.l.b16 %v371
        %v449 = vunpack.c.l.b16 %v372
        %v450 = vunpack.c.l.b16 %v373
        %v451 = vunpack.c.l.b16 %v374
        %v452 = vunpack.c.l.b16 %v375
        %v453 = vunpack.c.l.b16 %v376
        %v454 = vpack.c.b16 %v439, %v438
        %v455 = vpack.c.b16 %v441, %v440
        %v456 = vpack.c.b16 %v443, %v442
        %v457 = vpack.c.b16 %v445, %v444
        %v458 = vpack.c.b16 %v447, %v446
        %v459 = vpack.c.b16 %v449, %v448
        %v460 = vpack.c.b16 %v451, %v450
        %v461 = vpack.c.b16 %v453, %v452
        %470 = vmatpush.bf16.msra.mxu0 %v461
        %471 = vmatpush.bf16.msra.mxu0 %v460
        %472 = vmatpush.bf16.msra.mxu0 %v459
        %473 = vmatpush.bf16.msra.mxu0 %v458
        %474 = vmatpush.bf16.msra.mxu0 %v457
        %475 = vmatpush.bf16.msra.mxu0 %v456
        %476 = vmatpush.bf16.msra.mxu0 %v455
        %477 = vmatpush.bf16.msra.mxu0 %v454
        %478 = vmatmul.bf16.gmra.mxu0 %v360
        %v479 = vpop.f32.mrf.mxu0
        %v480 = vadd.f32 %v419, %v479
        %v481 = vpop.f32.mrf.mxu0
        %482 = vdwg.mxu0
        %v483 = vtanh.pop %v480
        %v484 = vpack.c.bf16 %v483, %v483
        %vm485 = vcmask 519168
        %486 = vst.msk [vmem:[%s256] sm:$0xf] %vm485, %v484
        %p487 = scmp.lt.s32.totalorder %s17, 1
        %s488 = scalar_select %p487, %s17, 1
        %s489 = smul.addr %s488, 4
        %s490 = scalar_lea.vmem %s5, %s489
        // Predicated region
        $region45: #{speaker_encoder_forward.4} parent=39 // pred_check
          %p491 = pneg %p150
        $region46: #{speaker_encoder_forward.4} parent=39 // pred_check_branch
          %493 = sbr.rel (%p491) target = $region48
        $region47: #{speaker_encoder_forward.4} parent=39 // pred_region
          _
        $region48: #{speaker_encoder_forward.4} parent=39 // pred_fallthru
          _
      $region40: #{speaker_encoder_forward.4} parent=5 // pred_fallthru
        _
      %p494 = scmp.le.s32.totalorder 2, %s12
      // Predicated region
      $region49: #{speaker_encoder_forward.4} parent=5 // pred_check
        %p495 = pneg %p494
      $region50: #{speaker_encoder_forward.4} parent=5 // pred_check_branch
        %497 = sbr.rel (%p495) target = $region52
      $region51: #{speaker_encoder_forward.4} parent=5 // pred_region
        %s498 = ssub.s32 %s12, 2
        // Predicated region
        $region53: #{speaker_encoder_forward.4} parent=51 // pred_check
          %p499 = pneg %p156
        $region54: #{speaker_encoder_forward.4} parent=51 // pred_check_branch
          %501 = sbr.rel (%p499) target = $region56
        $region55: #{speaker_encoder_forward.4} parent=51 // pred_region
          %p502 = scmp.lt.s32.totalorder %s18, 1
          %s503 = scalar_select %p502, %s18, 1
          %s504 = smul.addr %s503, 4
          %s505 = scalar_lea.vmem %s5, %s504
        $region56: #{speaker_encoder_forward.4} parent=51 // pred_fallthru
          _
      $region52: #{speaker_encoder_forward.4} parent=5 // pred_fallthru
        _
    $region6: #{speaker_encoder_forward.4} parent=1 // loop_footer
      %s16 = sadd.s32 1, %s12
    $region7: #{speaker_encoder_forward.4} parent=1 // loop_footer_branch
      %11 = sbr.rel target = $region3
    $region8: #{speaker_encoder_forward.4} parent=1 // loop_exit
      _
    %506 = vsyncpa [#allocation3], 1
    %s507 = scalar_lea.sflag [#allocation3], 1
    %508 = vsyncpa %s507, 1

// kernel: speaker_encoder_forward.3
$region0: #{speaker_encoder_forward.3}
  #allocation0 [shape = 'u32[]', space=smem, size = 0x4, offset = 0x4, fixed_abs, tag = 'smem constant byte address 0x4 - core index']
  #allocation1 [shape = 'u32[72,128]{1,0:T(1,128)}', space=vmem, size = 0x9000, scoped, tag = 'internal scratch']
  #allocation2 [shape = 'f32[4,32]{1,0:T(4,128)}', space=vmem, size = 0x800, scoped, tag = 'scratch operand']
  #allocation3 [shape = 'f32[4,32]{1,0:T(4,128)}', space=vmem, size = 0x800, scoped, tag = 'scratch operand']
  #allocation4 [shape = 'bf16[16,128]{1,0:T(8,128)(2,1)}', space=vmem, size = 0x1000, scoped, tag = 'scratch operand']
  #allocation5 [shape = 'bf16[16,128]{1,0:T(8,128)(2,1)}', space=vmem, size = 0x1000, scoped, tag = 'scratch operand']
  %s0 = inlined_call_operand.vmem [shape: f32[16,128], index: 0, kind: input, shape index: {}, may-alias: {0,1}]
  %s1 = inlined_call_operand.vmem [shape: f32[16,128], index: 1, kind: input, shape index: {}, may-alias: {0,1}]
  %s2 = inlined_call_operand.hbm [shape: bf16[128,128], index: 2, kind: input, shape index: {}]
  %s3 = inlined_call_operand.hbm [shape: bf16[128,128], index: 3, kind: input, shape index: {}]
  %s4 = inlined_call_operand.hbm [shape: bf16[64,128], index: 4, kind: input, shape index: {}]
  %s5 = inlined_call_operand.vmem [shape: f32[2,128], index: 5, kind: input, shape index: {}]
  %s6 = inlined_call_operand.vmem [shape: f32[16,32], index: 6, kind: output, shape index: {0}]
  %s7 = inlined_call_operand.vmem [shape: f32[16,32], index: 7, kind: output, shape index: {1}]
  %8 = xla_tuple %s6, %s7
  %s9 = sld [smem:[#allocation0]]
  $region58: #{speaker_encoder_forward.3} parent=0
    _
  %s11 = ssub.s32 1, %s9
  %s12 = scalar_select 0, %s11, %s9
  $region1: #{speaker_encoder_forward.3} parent=0
    #allocation6 [shape = 'u8[32768]{0}', space=vmem, size = 0x8000, scoped, tag = 'input window, operand 2, single buffered']
    #allocation7 [shape = 's32[1]{0}', space=sflag, size = 0x4, scoped, tag = 'scoped memory for speaker_encoder_forward.3']
    #allocation8 [shape = 'u8[32768]{0}', space=vmem, size = 0x8000, scoped, tag = 'input window, operand 3, single buffered']
    #allocation9 [shape = 's32[1]{0}', space=sflag, size = 0x4, scoped, tag = 'scoped memory for speaker_encoder_forward.3']
    #allocation10 [shape = 'u8[16384]{0}', space=vmem, size = 0x4000, scoped, tag = 'input window, operand 4, single buffered']
    %13 = vsyncpa [#allocation7], 0
    %14 = vsyncpa [#allocation9], 0
    // Predicated region
    $region2: #{speaker_encoder_forward.3} parent=1 // pred_check
      _
    $region3: #{speaker_encoder_forward.3} parent=1 // pred_check_branch
      %16 = sbr.rel (0) target = $region5
    $region4: #{speaker_encoder_forward.3} parent=1 // pred_region
      _
    $region5: #{speaker_encoder_forward.3} parent=1 // pred_fallthru
      _
    // Predicated region
    $region6: #{speaker_encoder_forward.3} parent=1 // pred_check
      _
    $region7: #{speaker_encoder_forward.3} parent=1 // pred_check_branch
      %18 = sbr.rel (0) target = $region9
    $region8: #{speaker_encoder_forward.3} parent=1 // pred_region
      %s19 = ssub.s32 0, 0
      %s20 = smul.u32 2, %s19
      %p21 = scmp.lt.s32.totalorder %s20, 1
      %s22 = scalar_select %p21, %s20, 1
      %s23 = smul.addr %s22, 8
      %s24 = scalar_lea.vmem %s1, %s23
      %s25 = ssub.s32 0, 0
      %s26 = smul.u32 2, %s25
    $region9: #{speaker_encoder_forward.3} parent=1 // pred_fallthru
      _
    // Predicated region
    $region10: #{speaker_encoder_forward.3} parent=1 // pred_check
      _
    $region11: #{speaker_encoder_forward.3} parent=1 // pred_check_branch
      %28 = sbr.rel (0) target = $region13
    $region12: #{speaker_encoder_forward.3} parent=1 // pred_region
      %30 = vsyncadd [#allocation7], 0
      %s31 = sshll.u32 %s2, 4
      %s32 = int_to_ptr.hbm [resolvable:$true] %s31
      %s33 = sshll.u32 [#allocation6], 4
      %s34 = int_to_ptr.vmem [resolvable:$true] %s33
      %39 = dma.hbm_to_vmem [thread:$0]  %s32, 1024, %s34, [#allocation7], 64, 64, 4
    $region13: #{speaker_encoder_forward.3} parent=1 // pred_fallthru
      _
    // Predicated region
    $region14: #{speaker_encoder_forward.3} parent=1 // pred_check
      _
    $region15: #{speaker_encoder_forward.3} parent=1 // pred_check_branch
      %41 = sbr.rel (0) target = $region17
    $region16: #{speaker_encoder_forward.3} parent=1 // pred_region
      %43 = vsyncadd [#allocation9], 0
      %s44 = sshll.u32 %s3, 4
      %s45 = int_to_ptr.hbm [resolvable:$true] %s44
      %s46 = sshll.u32 [#allocation8], 4
      %s47 = int_to_ptr.vmem [resolvable:$true] %s46
      %52 = dma.hbm_to_vmem [thread:$0]  %s45, 1024, %s47, [#allocation9], 64, 64, 4
    $region17: #{speaker_encoder_forward.3} parent=1 // pred_fallthru
      _
    // Predicated region
    $region18: #{speaker_encoder_forward.3} parent=1 // pred_check
      _
    $region19: #{speaker_encoder_forward.3} parent=1 // pred_check_branch
      %54 = sbr.rel (0) target = $region21
    $region20: #{speaker_encoder_forward.3} parent=1 // pred_region
      %56 = vsyncadd [#allocation9], 0
      %s57 = sshll.u32 %s4, 4
      %s58 = int_to_ptr.hbm [resolvable:$true] %s57
      %s59 = sshll.u32 [#allocation10], 4
      %s60 = int_to_ptr.vmem [resolvable:$true] %s59
      %65 = dma.hbm_to_vmem [thread:$0]  %s58, 512, %s60, [#allocation9], 64, 64, 4
    $region21: #{speaker_encoder_forward.3} parent=1 // pred_fallthru
      _
    // Predicated region
    $region22: #{speaker_encoder_forward.3} parent=1 // pred_check
      _
    $region23: #{speaker_encoder_forward.3} parent=1 // pred_check_branch
      %67 = sbr.rel (0) target = $region25
    $region24: #{speaker_encoder_forward.3} parent=1 // pred_region
      _
    $region25: #{speaker_encoder_forward.3} parent=1 // pred_fallthru
      _
    // Predicated region
    $region26: #{speaker_encoder_forward.3} parent=1 // pred_check
      _
    $region27: #{speaker_encoder_forward.3} parent=1 // pred_check_branch
      %69 = sbr.rel (0) target = $region29
    $region28: #{speaker_encoder_forward.3} parent=1 // pred_region
      %71 = dma.done [#allocation7], 1024
    $region29: #{speaker_encoder_forward.3} parent=1 // pred_fallthru
      _
    // Predicated region
    $region30: #{speaker_encoder_forward.3} parent=1 // pred_check
      _
    $region31: #{speaker_encoder_forward.3} parent=1 // pred_check_branch
      %73 = sbr.rel (0) target = $region33
    $region32: #{speaker_encoder_forward.3} parent=1 // pred_region
      %75 = dma.done [#allocation9], 1024
    $region33: #{speaker_encoder_forward.3} parent=1 // pred_fallthru
      _
    // Predicated region
    $region34: #{speaker_encoder_forward.3} parent=1 // pred_check
      _
    $region35: #{speaker_encoder_forward.3} parent=1 // pred_check_branch
      %77 = sbr.rel (0) target = $region37
    $region36: #{speaker_encoder_forward.3} parent=1 // pred_region
      %79 = dma.done [#allocation9], 512
    $region37: #{speaker_encoder_forward.3} parent=1 // pred_fallthru
      _
    %s80 = ssub.s32 0, 0
    %s81 = smul.u32 2, %s80
    %p82 = scmp.lt.s32.totalorder %s81, 1
    %s83 = scalar_select %p82, %s81, 1
    %s84 = smul.addr %s83, 8
    %s85 = scalar_lea.vmem %s1, %s84
    %s86 = ssub.s32 0, 0
    %s87 = smul.u32 2, %s86
    %p88 = scmp.lt.s32.totalorder %s87, 1
    %s89 = scalar_select %p88, %s87, 1
    %s90 = smul.addr %s89, 8
    %s91 = scalar_lea.vmem %s7, %s90
    %s92 = ssub.s32 0, 0
    %s93 = smul.u32 2, %s92
    %p94 = scmp.lt.s32.totalorder %s93, 1
    %s95 = scalar_select %p94, %s93, 1
    %s96 = smul.addr %s95, 8
    %s97 = scalar_lea.vmem %s1, %s96
    %s98 = ssub.s32 0, 0
    %s99 = smul.u32 2, %s98
    %s100 = ssub.s32 0, 0
    %s101 = smul.u32 2, %s100
    %p102 = scmp.lt.s32.totalorder %s101, 1
    %s103 = scalar_select %p102, %s101, 1
    %s104 = smul.addr %s103, 8
    %s105 = scalar_lea.vmem %s7, %s104
    %s106 = ssub.s32 0, 0
    %s107 = smul.u32 2, %s106
    %p109 = scmp.eq.s32.totalorder 0, 0
    // Predicated region
    $region38: #{speaker_encoder_forward.3} parent=1 // pred_check
      %p110 = pneg %p109
    $region39: #{speaker_encoder_forward.3} parent=1 // pred_check_branch
      %112 = sbr.rel (%p110) target = $region41
    $region40: #{speaker_encoder_forward.3} parent=1 // pred_region
      %vm113 = vcmask 257024
      %114 = vst.msk [vmem:[#allocation2] sm:$0xf] %vm113, 0.0
      %115 = vst.msk [vmem:[#allocation3] sm:$0xf] %vm113, 0.0
    $region41: #{speaker_encoder_forward.3} parent=1 // pred_fallthru
      _
    %v116 = vld [vmem:[%s0] sm:$0xff]
    %v117 = vld [vmem:[%s0 + $0x8] sm:$0xff]
    %v118 = vpack.c.bf16 %v117, %v116
    %v119 = vld [vmem:[#allocation6] sm:$0xf]
    %v120 = vld [vmem:[#allocation6 + $0x4] sm:$0xf]
    %v121 = vld [vmem:[#allocation6 + $0x8] sm:$0xf]
    %v122 = vld [vmem:[#allocation6 + $0xc] sm:$0xf]
    %v123 = vld [vmem:[#allocation6 + $0x10] sm:$0xf]
    %v124 = vld [vmem:[#allocation6 + $0x14] sm:$0xf]
    %v125 = vld [vmem:[#allocation6 + $0x18] sm:$0xf]
    %v126 = vld [vmem:[#allocation6 + $0x1c] sm:$0xf]
    %v127 = vld [vmem:[#allocation6 + $0x20] sm:$0xf]
    %v128 = vld [vmem:[#allocation6 + $0x24] sm:$0xf]
    %v129 = vld [vmem:[#allocation6 + $0x28] sm:$0xf]
    %v130 = vld [vmem:[#allocation6 + $0x2c] sm:$0xf]
    %v131 = vld [vmem:[#allocation6 + $0x30] sm:$0xf]
    %v132 = vld [vmem:[#allocation6 + $0x34] sm:$0xf]
    %v133 = vld [vmem:[#allocation6 + $0x38] sm:$0xf]
    %v134 = vld [vmem:[#allocation6 + $0x3c] sm:$0xf]
    %v151 = vunpack.c.l.b16 %v119
    %v152 = vunpack.c.l.b16 %v120
    %v153 = vunpack.c.l.b16 %v121
    %v154 = vunpack.c.l.b16 %v122
    %v155 = vunpack.c.l.b16 %v123
    %v156 = vunpack.c.l.b16 %v124
    %v157 = vunpack.c.l.b16 %v125
    %v158 = vunpack.c.l.b16 %v126
    %v159 = vunpack.c.l.b16 %v127
    %v160 = vunpack.c.l.b16 %v128
    %v161 = vunpack.c.l.b16 %v129
    %v162 = vunpack.c.l.b16 %v130
    %v163 = vunpack.c.l.b16 %v131
    %v164 = vunpack.c.l.b16 %v132
    %v165 = vunpack.c.l.b16 %v133
    %v166 = vunpack.c.l.b16 %v134
    %v167 = vpack.c.b16 %v152, %v151
    %v168 = vpack.c.b16 %v154, %v153
    %v169 = vpack.c.b16 %v156, %v155
    %v170 = vpack.c.b16 %v158, %v157
    %v171 = vpack.c.b16 %v160, %v159
    %v172 = vpack.c.b16 %v162, %v161
    %v173 = vpack.c.b16 %v164, %v163
    %v174 = vpack.c.b16 %v166, %v165
    %183 = vmatpush.bf16.msra.mxu0 %v174
    %184 = vmatpush.bf16.msra.mxu0 %v173
    %185 = vmatpush.bf16.msra.mxu0 %v172
    %186 = vmatpush.bf16.msra.mxu0 %v171
    %187 = vmatpush.bf16.msra.mxu0 %v170
    %188 = vmatpush.bf16.msra.mxu0 %v169
    %189 = vmatpush.bf16.msra.mxu0 %v168
    %190 = vmatpush.bf16.msra.mxu0 %v167
    %191 = vmatmul.bf16.gmra.mxu0 %v118
    %v192 = vpop.f32.mrf.mxu0
    %v193 = vadd.f32 0.0, %v192
    %v194 = vpop.f32.mrf.mxu0
    %v195 = vadd.f32 0.0, %v194
    %196 = vdwg.mxu0
    %v197 = vpack.c.bf16 %v193, %v193
    %v198 = vpack.c.bf16 %v195, %v195
    %199 = vst [vmem:[#allocation4] sm:$0xf] %v197
    %200 = vst [vmem:[#allocation4 + $0x4] sm:$0xf] %v198
    %v201 = vld [vmem:[%s97] sm:$0xff]
    %v202 = vld [vmem:[%s97 + $0x8] sm:$0xff]
    %v203 = vpack.c.bf16 %v202, %v201
    %v204 = vld [vmem:[#allocation8] sm:$0xf]
    %v205 = vld [vmem:[#allocation8 + $0x4] sm:$0xf]
    %v206 = vld [vmem:[#allocation8 + $0x8] sm:$0xf]
    %v207 = vld [vmem:[#allocation8 + $0xc] sm:$0xf]
    %v208 = vld [vmem:[#allocation8 + $0x10] sm:$0xf]
    %v209 = vld [vmem:[#allocation8 + $0x14] sm:$0xf]
    %v210 = vld [vmem:[#allocation8 + $0x18] sm:$0xf]
    %v211 = vld [vmem:[#allocation8 + $0x1c] sm:$0xf]
    %v212 = vld [vmem:[#allocation8 + $0x20] sm:$0xf]
    %v213 = vld [vmem:[#allocation8 + $0x24] sm:$0xf]
    %v214 = vld [vmem:[#allocation8 + $0x28] sm:$0xf]
    %v215 = vld [vmem:[#allocation8 + $0x2c] sm:$0xf]
    %v216 = vld [vmem:[#allocation8 + $0x30] sm:$0xf]
    %v217 = vld [vmem:[#allocation8 + $0x34] sm:$0xf]
    %v218 = vld [vmem:[#allocation8 + $0x38] sm:$0xf]
    %v219 = vld [vmem:[#allocation8 + $0x3c] sm:$0xf]
    %v236 = vunpack.c.l.b16 %v204
    %v237 = vunpack.c.l.b16 %v205
    %v238 = vunpack.c.l.b16 %v206
    %v239 = vunpack.c.l.b16 %v207
    %v240 = vunpack.c.l.b16 %v208
    %v241 = vunpack.c.l.b16 %v209
    %v242 = vunpack.c.l.b16 %v210
    %v243 = vunpack.c.l.b16 %v211
    %v244 = vunpack.c.l.b16 %v212
    %v245 = vunpack.c.l.b16 %v213
    %v246 = vunpack.c.l.b16 %v214
    %v247 = vunpack.c.l.b16 %v215
    %v248 = vunpack.c.l.b16 %v216
    %v249 = vunpack.c.l.b16 %v217
    %v250 = vunpack.c.l.b16 %v218
    %v251 = vunpack.c.l.b16 %v219
    %v252 = vpack.c.b16 %v237, %v236
    %v253 = vpack.c.b16 %v239, %v238
    %v254 = vpack.c.b16 %v241, %v240
    %v255 = vpack.c.b16 %v243, %v242
    %v256 = vpack.c.b16 %v245, %v244
    %v257 = vpack.c.b16 %v247, %v246
    %v258 = vpack.c.b16 %v249, %v248
    %v259 = vpack.c.b16 %v251, %v250
    %268 = vmatpush.bf16.msra.mxu0 %v259
    %269 = vmatpush.bf16.msra.mxu0 %v258
    %270 = vmatpush.bf16.msra.mxu0 %v257
    %271 = vmatpush.bf16.msra.mxu0 %v256
    %272 = vmatpush.bf16.msra.mxu0 %v255
    %273 = vmatpush.bf16.msra.mxu0 %v254
    %274 = vmatpush.bf16.msra.mxu0 %v253
    %275 = vmatpush.bf16.msra.mxu0 %v252
    %276 = vmatmul.bf16.gmra.mxu0 %v203
    %v277 = vpop.f32.mrf.mxu0
    %v278 = vadd.f32 0.0, %v277
    %v279 = vpop.f32.mrf.mxu0
    %v280 = vadd.f32 0.0, %v279
    %281 = vdwg.mxu0
    %v282 = vpack.c.bf16 %v278, %v278
    %v283 = vpack.c.bf16 %v280, %v280
    %284 = vst [vmem:[#allocation5] sm:$0xf] %v282
    %285 = vst [vmem:[#allocation5 + $0x4] sm:$0xf] %v283
    %v286 = vld [vmem:[#allocation10] sm:$0xf]
    %v287 = vld [vmem:[#allocation10 + $0x4] sm:$0xf]
    %v288 = vld [vmem:[#allocation10 + $0x8] sm:$0xf]
    %v289 = vld [vmem:[#allocation10 + $0xc] sm:$0xf]
    %v290 = vld [vmem:[#allocation10 + $0x10] sm:$0xf]
    %v291 = vld [vmem:[#allocation10 + $0x14] sm:$0xf]
    %v292 = vld [vmem:[#allocation10 + $0x18] sm:$0xf]
    %v293 = vld [vmem:[#allocation10 + $0x1c] sm:$0xf]
    %v294 = vld [vmem:[%s5] sm:$0x1]
    %v295 = vperm.slane %v294, 0
    %v296 = vld [vmem:[%s5 + $0x1] sm:$0x1]
    %v297 = vperm.slane %v296, 0
    %vm298 = vcmask 1041408
    %v299 = vsel %vm298, %v295, %v297
    %v300 = vlaneseq
    %v301 = vshrl.u32 %v300, 7
    %v302 = vlaneseq
    %v303 = vand.u32 %v302, 127
    %vm304 = vcmp.lt.s32.totalorder %v301, 2
    %vm305 = vcmp.lt.s32.totalorder %v303, 32
    %vm306 = vmxor %vm304, %vm305
    %vm307 = vmxor %vm306, 1
    %v308 = vld [vmem:[#allocation2] sm:$0xf]
    %v309 = vld [vmem:[#allocation3] sm:$0xf]
    %v310 = vld [vmem:[#allocation4] sm:$0x1]
    %v311 = vld [vmem:[#allocation5 + $0x4] sm:$0x8]
    %v313 = vunpack.c.l.b16 %v311
    %v314 = vpack.c.b16 %v313, %v313
    %v315 = vrot.slane %v314, 2
    %vm316 = vcmask 1040384
    %v319 = vsel %vm316, %v310, %v315
    %v321 = vunpack.c.l.bf16 %v319
    %323 = vrot.lane.b32.xlu0 %v308, 32
    %v324 = vpop.permute.xlu0 %323
    %vm326 = vcmask 261120
    %v327 = vsel %vm326, %v308, %v324
    %v328 = vsel %vm307, %v327, 0.0
    %v329 = vadd.f32 %v321, %v299
    %v330 = vpack.c.bf16 %v328, %v328
    %v339 = vunpack.c.l.b16 %v286
    %v340 = vunpack.c.l.b16 %v287
    %v341 = vunpack.c.l.b16 %v288
    %v342 = vunpack.c.l.b16 %v289
    %v343 = vunpack.c.l.b16 %v290
    %v344 = vunpack.c.l.b16 %v291
    %v345 = vunpack.c.l.b16 %v292
    %v346 = vunpack.c.l.b16 %v293
    %v347 = vpack.c.b16 %v340, %v339
    %v348 = vpack.c.b16 %v342, %v341
    %v349 = vpack.c.b16 %v344, %v343
    %v350 = vpack.c.b16 %v346, %v345
    %vm355 = vcmask 523264
    %v357 = vsel %vm355, %v330, 0
    %359 = vmatpush.bf16.msra.mxu0 0
    %360 = vmatpush.bf16.msra.mxu0 0
    %361 = vmatpush.bf16.msra.mxu0 0
    %362 = vmatpush.bf16.msra.mxu0 0
    %363 = vmatpush.bf16.msra.mxu0 %v350
    %364 = vmatpush.bf16.msra.mxu0 %v349
    %365 = vmatpush.bf16.msra.mxu0 %v348
    %366 = vmatpush.bf16.msra.mxu0 %v347
    %367 = vmatmul.bf16.gmra.mxu0 %v357
    %v368 = vpop.f32.mrf.mxu0
    %v369 = vadd.f32 0.0, %v368
    %v370 = vpop.f32.mrf.mxu0
    %371 = vdwg.mxu0
    %v372 = vadd.f32 %v329, %v369
    %v373 = vxor.u32 %v372, 2147483648
    %v374 = vmul.f32 %v373, 1.442695
    %v375 = vpow.pop %v374
    %v376 = vadd.f32 %v375, 1.0
    %v377 = vrcp.pop %v376
    %v378 = vmul.f32 %v376, %v377
    %v379 = vsub.f32 1.0, %v378
    %v380 = vmul.f32 %v377, %v379
    %v381 = vadd.f32 %v377, %v380
    %vm382 = vweird.f32 %v376
    %vm383 = vweird.f32 %v377
    %vm384 = vmor %vm382, %vm383
    %v385 = vsel %vm384, %v377, %v381
    %v386 = vand.u32 2147483647, %v376
    %vm387 = vcmp.eq.f32.partialorder %v386, 8.507059e+37
    %v388 = vand.u32 %v376, 2147483648
    %v389 = vor.u32 1.1754944e-38, %v388
    %v390 = vsel %vm387, %v389, %v385
    %v391 = vmul.f32 1.0, %v390
    %v392 = vtanh.pop %v372
    %394 = vrot.lane.b32.xlu0 %v309, 32
    %v395 = vpop.permute.xlu0 %394
    %v397 = vmul.f32 %v391, %v395
    %399 = vrot.lane.b32.xlu0 %v392, 64
    %v400 = vpop.permute.xlu0 %399
    %v402 = vmul.f32 %v391, %v400
    %404 = vrot.lane.b32.xlu0 %v402, 32
    %v405 = vpop.permute.xlu0 %404
    %v407 = vadd.f32 %v397, %v405
    %v408 = vtanh.pop %v407
    %410 = vrot.lane.b32.xlu0 %v408, 64
    %v411 = vpop.permute.xlu0 %410
    %v413 = vmul.f32 %v391, %v411
    %415 = vrot.lane.b32.xlu0 %v413, 32
    %v416 = vpop.permute.xlu0 %415
    %vm418 = vcmask 254976
    %419 = vst.msk [vmem:[%s6] sm:$0x3] %vm418, %v416
    %vm420 = vcmask 257026
    %421 = vst.msk [vmem:[%s105 + $0xc] sm:$0xc] %vm420, %v416
    %v422 = vld [vmem:[#allocation4] sm:$0x2]
    %v423 = vld [vmem:[#allocation5 + $0x4] sm:$0x4]
    %v425 = vunpack.c.l.b16 %v422
    %v426 = vpack.c.b16 %v425, %v425
    %v427 = vrot.slane %v426, 1
    %v429 = vunpack.c.l.b16 %v423
    %v430 = vpack.c.b16 %v429, %v429
    %v431 = vrot.slane %v430, 1
    %v434 = vsel %vm316, %v427, %v431
    %v436 = vunpack.c.l.bf16 %v434
    %437 = vrot.lane.b32.xlu0 %v413, 64
    %v438 = vpop.permute.xlu0 %437
    %v440 = vsel %vm326, %v416, %v438
    %v441 = vsel %vm307, %v440, 0.0
    %v442 = vadd.f32 %v436, %v299
    %v443 = vpack.c.bf16 %v441, %v441
    %v445 = vsel %vm355, %v443, 0
    %447 = vmatpush.bf16.msra.mxu0 0
    %448 = vmatpush.bf16.msra.mxu0 0
    %449 = vmatpush.bf16.msra.mxu0 0
    %450 = vmatpush.bf16.msra.mxu0 0
    %451 = vmatpush.bf16.msra.mxu0 %v350
    %452 = vmatpush.bf16.msra.mxu0 %v349
    %453 = vmatpush.bf16.msra.mxu0 %v348
    %454 = vmatpush.bf16.msra.mxu0 %v347
    %455 = vmatmul.bf16.gmra.mxu0 %v445
    %v456 = vpop.f32.mrf.mxu0
    %v457 = vadd.f32 0.0, %v456
    %v458 = vpop.f32.mrf.mxu0
    %459 = vdwg.mxu0
    %v460 = vadd.f32 %v442, %v457
    %v461 = vxor.u32 %v460, 2147483648
    %v462 = vmul.f32 %v461, 1.442695
    %v463 = vpow.pop %v462
    %v464 = vadd.f32 %v463, 1.0
    %v465 = vrcp.pop %v464
    %v466 = vmul.f32 %v464, %v465
    %v467 = vsub.f32 1.0, %v466
    %v468 = vmul.f32 %v465, %v467
    %v469 = vadd.f32 %v465, %v468
    %vm470 = vweird.f32 %v464
    %vm471 = vweird.f32 %v465
    %vm472 = vmor %vm470, %vm471
    %v473 = vsel %vm472, %v465, %v469
    %v474 = vand.u32 2147483647, %v464
    %vm475 = vcmp.eq.f32.partialorder %v474, 8.507059e+37
    %v476 = vand.u32 %v464, 2147483648
    %v477 = vor.u32 1.1754944e-38, %v476
    %v478 = vsel %vm475, %v477, %v473
    %v479 = vmul.f32 1.0, %v478
    %v480 = vtanh.pop %v460
    %v481 = vmul.f32 %v479, %v407
    %483 = vrot.lane.b32.xlu0 %v480, 64
    %v484 = vpop.permute.xlu0 %483
    %v486 = vmul.f32 %v479, %v484
    %488 = vrot.lane.b32.xlu0 %v486, 32
    %v489 = vpop.permute.xlu0 %488
    %v491 = vadd.f32 %v481, %v489
    %v492 = vtanh.pop %v491
    %494 = vrot.lane.b32.xlu0 %v492, 64
    %v495 = vpop.permute.xlu0 %494
    %v497 = vmul.f32 %v479, %v495
    %499 = vrot.lane.b32.xlu0 %v497, 32
    %v500 = vpop.permute.xlu0 %499
    %502 = vst.msk [vmem:[%s6 + $0x2] sm:$0x3] %vm418, %v500
    %503 = vst.msk [vmem:[%s105 + $0xa] sm:$0xc] %vm420, %v500
    %v504 = vld [vmem:[#allocation4] sm:$0x4]
    %v505 = vld [vmem:[#allocation5 + $0x4] sm:$0x2]
    %v507 = vunpack.c.l.b16 %v504
    %v508 = vpack.c.b16 %v507, %v507
    %v509 = vrot.slane %v508, 2
    %v512 = vsel %vm316, %v509, %v505
    %v514 = vunpack.c.l.bf16 %v512
    %515 = vrot.lane.b32.xlu0 %v497, 64
    %v516 = vpop.permute.xlu0 %515
    %v518 = vsel %vm326, %v500, %v516
    %v519 = vsel %vm307, %v518, 0.0
    %v520 = vadd.f32 %v514, %v299
    %v521 = vpack.c.bf16 %v519, %v519
    %v523 = vsel %vm355, %v521, 0
    %525 = vmatpush.bf16.msra.mxu0 0
    %526 = vmatpush.bf16.msra.mxu0 0
    %527 = vmatpush.bf16.msra.mxu0 0
    %528 = vmatpush.bf16.msra.mxu0 0
    %529 = vmatpush.bf16.msra.mxu0 %v350
    %530 = vmatpush.bf16.msra.mxu0 %v349
    %531 = vmatpush.bf16.msra.mxu0 %v348
    %532 = vmatpush.bf16.msra.mxu0 %v347
    %533 = vmatmul.bf16.gmra.mxu0 %v523
    %v534 = vpop.f32.mrf.mxu0
    %v535 = vadd.f32 0.0, %v534
    %v536 = vpop.f32.mrf.mxu0
    %537 = vdwg.mxu0
    %v538 = vadd.f32 %v520, %v535
    %v539 = vxor.u32 %v538, 2147483648
    %v540 = vmul.f32 %v539, 1.442695
    %v541 = vpow.pop %v540
    %v542 = vadd.f32 %v541, 1.0
    %v543 = vrcp.pop %v542
    %v544 = vmul.f32 %v542, %v543
    %v545 = vsub.f32 1.0, %v544
    %v546 = vmul.f32 %v543, %v545
    %v547 = vadd.f32 %v543, %v546
    %vm548 = vweird.f32 %v542
    %vm549 = vweird.f32 %v543
    %vm550 = vmor %vm548, %vm549
    %v551 = vsel %vm550, %v543, %v547
    %v552 = vand.u32 2147483647, %v542
    %vm553 = vcmp.eq.f32.partialorder %v552, 8.507059e+37
    %v554 = vand.u32 %v542, 2147483648
    %v555 = vor.u32 1.1754944e-38, %v554
    %v556 = vsel %vm553, %v555, %v551
    %v557 = vmul.f32 1.0, %v556
    %v558 = vtanh.pop %v538
    %v559 = vmul.f32 %v557, %v491
    %561 = vrot.lane.b32.xlu0 %v558, 64
    %v562 = vpop.permute.xlu0 %561
    %v564 = vmul.f32 %v557, %v562
    %566 = vrot.lane.b32.xlu0 %v564, 32
    %v567 = vpop.permute.xlu0 %566
    %v569 = vadd.f32 %v559, %v567
    %v570 = vtanh.pop %v569
    %572 = vrot.lane.b32.xlu0 %v570, 64
    %v573 = vpop.permute.xlu0 %572
    %v575 = vmul.f32 %v557, %v573
    %577 = vrot.lane.b32.xlu0 %v575, 32
    %v578 = vpop.permute.xlu0 %577
    %580 = vst.msk [vmem:[%s6 + $0x4] sm:$0x3] %vm418, %v578
    %581 = vst.msk [vmem:[%s105 + $0x8] sm:$0xc] %vm420, %v578
    %v582 = vld [vmem:[#allocation4] sm:$0x8]
    %v583 = vld [vmem:[#allocation5 + $0x4] sm:$0x1]
    %v585 = vunpack.c.l.b16 %v582
    %v586 = vpack.c.b16 %v585, %v585
    %v587 = vrot.slane %v586, 3
    %v589 = vunpack.c.l.b16 %v583
    %v590 = vpack.c.b16 %v589, %v589
    %v591 = vrot.slane %v590, 7
    %v594 = vsel %vm316, %v587, %v591
    %v596 = vunpack.c.l.bf16 %v594
    %597 = vrot.lane.b32.xlu0 %v575, 64
    %v598 = vpop.permute.xlu0 %597
    %v600 = vsel %vm326, %v578, %v598
    %v601 = vsel %vm307, %v600, 0.0
    %v602 = vadd.f32 %v596, %v299
    %v603 = vpack.c.bf16 %v601, %v601
    %v605 = vsel %vm355, %v603, 0
    %607 = vmatpush.bf16.msra.mxu0 0
    %608 = vmatpush.bf16.msra.mxu0 0
    %609 = vmatpush.bf16.msra.mxu0 0
    %610 = vmatpush.bf16.msra.mxu0 0
    %611 = vmatpush.bf16.msra.mxu0 %v350
    %612 = vmatpush.bf16.msra.mxu0 %v349
    %613 = vmatpush.bf16.msra.mxu0 %v348
    %614 = vmatpush.bf16.msra.mxu0 %v347
    %615 = vmatmul.bf16.gmra.mxu0 %v605
    %v616 = vpop.f32.mrf.mxu0
    %v617 = vadd.f32 0.0, %v616
    %v618 = vpop.f32.mrf.mxu0
    %619 = vdwg.mxu0
    %v620 = vadd.f32 %v602, %v617
    %v621 = vxor.u32 %v620, 2147483648
    %v622 = vmul.f32 %v621, 1.442695
    %v623 = vpow.pop %v622
    %v624 = vadd.f32 %v623, 1.0
    %v625 = vrcp.pop %v624
    %v626 = vmul.f32 %v624, %v625
    %v627 = vsub.f32 1.0, %v626
    %v628 = vmul.f32 %v625, %v627
    %v629 = vadd.f32 %v625, %v628
    %vm630 = vweird.f32 %v624
    %vm631 = vweird.f32 %v625
    %vm632 = vmor %vm630, %vm631
    %v633 = vsel %vm632, %v625, %v629
    %v634 = vand.u32 2147483647, %v624
    %vm635 = vcmp.eq.f32.partialorder %v634, 8.507059e+37
    %v636 = vand.u32 %v624, 2147483648
    %v637 = vor.u32 1.1754944e-38, %v636
    %v638 = vsel %vm635, %v637, %v633
    %v639 = vmul.f32 1.0, %v638
    %v640 = vtanh.pop %v620
    %v641 = vmul.f32 %v639, %v569
    %643 = vrot.lane.b32.xlu0 %v640, 64
    %v644 = vpop.permute.xlu0 %643
    %v646 = vmul.f32 %v639, %v644
    %648 = vrot.lane.b32.xlu0 %v646, 32
    %v649 = vpop.permute.xlu0 %648
    %v651 = vadd.f32 %v641, %v649
    %v652 = vtanh.pop %v651
    %654 = vrot.lane.b32.xlu0 %v652, 64
    %v655 = vpop.permute.xlu0 %654
    %v657 = vmul.f32 %v639, %v655
    %659 = vrot.lane.b32.xlu0 %v657, 32
    %v660 = vpop.permute.xlu0 %659
    %662 = vst.msk [vmem:[%s6 + $0x6] sm:$0x3] %vm418, %v660
    %663 = vst.msk [vmem:[%s105 + $0x6] sm:$0xc] %vm420, %v660
    %v664 = vld [vmem:[#allocation4 + $0x4] sm:$0x1]
    %v665 = vld [vmem:[#allocation5] sm:$0x8]
    %v667 = vunpack.c.l.b16 %v665
    %v668 = vpack.c.b16 %v667, %v667
    %v669 = vrot.slane %v668, 2
    %v672 = vsel %vm316, %v664, %v669
    %v674 = vunpack.c.l.bf16 %v672
    %675 = vrot.lane.b32.xlu0 %v657, 64
    %v676 = vpop.permute.xlu0 %675
    %v678 = vsel %vm326, %v660, %v676
    %v679 = vsel %vm307, %v678, 0.0
    %v680 = vadd.f32 %v674, %v299
    %v681 = vpack.c.bf16 %v679, %v679
    %v683 = vsel %vm355, %v681, 0
    %685 = vmatpush.bf16.msra.mxu0 0
    %686 = vmatpush.bf16.msra.mxu0 0
    %687 = vmatpush.bf16.msra.mxu0 0
    %688 = vmatpush.bf16.msra.mxu0 0
    %689 = vmatpush.bf16.msra.mxu0 %v350
    %690 = vmatpush.bf16.msra.mxu0 %v349
    %691 = vmatpush.bf16.msra.mxu0 %v348
    %692 = vmatpush.bf16.msra.mxu0 %v347
    %693 = vmatmul.bf16.gmra.mxu0 %v683
    %v694 = vpop.f32.mrf.mxu0
    %v695 = vadd.f32 0.0, %v694
    %v696 = vpop.f32.mrf.mxu0
    %697 = vdwg.mxu0
    %v698 = vadd.f32 %v680, %v695
    %v699 = vxor.u32 %v698, 2147483648
    %v700 = vmul.f32 %v699, 1.442695
    %v701 = vpow.pop %v700
    %v702 = vadd.f32 %v701, 1.0
    %v703 = vrcp.pop %v702
    %v704 = vmul.f32 %v702, %v703
    %v705 = vsub.f32 1.0, %v704
    %v706 = vmul.f32 %v703, %v705
    %v707 = vadd.f32 %v703, %v706
    %vm708 = vweird.f32 %v702
    %vm709 = vweird.f32 %v703
    %vm710 = vmor %vm708, %vm709
    %v711 = vsel %vm710, %v703, %v707
    %v712 = vand.u32 2147483647, %v702
    %vm713 = vcmp.eq.f32.partialorder %v712, 8.507059e+37
    %v714 = vand.u32 %v702, 2147483648
    %v715 = vor.u32 1.1754944e-38, %v714
    %v716 = vsel %vm713, %v715, %v711
    %v717 = vmul.f32 1.0, %v716
    %v718 = vtanh.pop %v698
    %v719 = vmul.f32 %v717, %v651
    %721 = vrot.lane.b32.xlu0 %v718, 64
    %v722 = vpop.permute.xlu0 %721
    %v724 = vmul.f32 %v717, %v722
    %726 = vrot.lane.b32.xlu0 %v724, 32
    %v727 = vpop.permute.xlu0 %726
    %v729 = vadd.f32 %v719, %v727
    %v730 = vtanh.pop %v729
    %732 = vrot.lane.b32.xlu0 %v730, 64
    %v733 = vpop.permute.xlu0 %732
    %v735 = vmul.f32 %v717, %v733
    %737 = vrot.lane.b32.xlu0 %v735, 32
    %v738 = vpop.permute.xlu0 %737
    %740 = vst.msk [vmem:[%s6 + $0x8] sm:$0x3] %vm418, %v738
    %741 = vst.msk [vmem:[%s105 + $0x4] sm:$0xc] %vm420, %v738
    %v742 = vld [vmem:[#allocation4 + $0x4] sm:$0x2]
    %v743 = vld [vmem:[#allocation5] sm:$0x4]
    %v745 = vunpack.c.l.b16 %v742
    %v746 = vpack.c.b16 %v745, %v745
    %v747 = vrot.slane %v746, 1
    %v749 = vunpack.c.l.b16 %v743
    %v750 = vpack.c.b16 %v749, %v749
    %v751 = vrot.slane %v750, 1
    %v754 = vsel %vm316, %v747, %v751
    %v756 = vunpack.c.l.bf16 %v754
    %757 = vrot.lane.b32.xlu0 %v735, 64
    %v758 = vpop.permute.xlu0 %757
    %v760 = vsel %vm326, %v738, %v758
    %v761 = vsel %vm307, %v760, 0.0
    %v762 = vadd.f32 %v756, %v299
    %v763 = vpack.c.bf16 %v761, %v761
    %v765 = vsel %vm355, %v763, 0
    %767 = vmatpush.bf16.msra.mxu0 0
    %768 = vmatpush.bf16.msra.mxu0 0
    %769 = vmatpush.bf16.msra.mxu0 0
    %770 = vmatpush.bf16.msra.mxu0 0
    %771 = vmatpush.bf16.msra.mxu0 %v350
    %772 = vmatpush.bf16.msra.mxu0 %v349
    %773 = vmatpush.bf16.msra.mxu0 %v348
    %774 = vmatpush.bf16.msra.mxu0 %v347
    %775 = vmatmul.bf16.gmra.mxu0 %v765
    %v776 = vpop.f32.mrf.mxu0
    %v777 = vadd.f32 0.0, %v776
    %v778 = vpop.f32.mrf.mxu0
    %779 = vdwg.mxu0
    %v780 = vadd.f32 %v762, %v777
    %v781 = vxor.u32 %v780, 2147483648
    %v782 = vmul.f32 %v781, 1.442695
    %v783 = vpow.pop %v782
    %v784 = vadd.f32 %v783, 1.0
    %v785 = vrcp.pop %v784
    %v786 = vmul.f32 %v784, %v785
    %v787 = vsub.f32 1.0, %v786
    %v788 = vmul.f32 %v785, %v787
    %v789 = vadd.f32 %v785, %v788
    %vm790 = vweird.f32 %v784
    %vm791 = vweird.f32 %v785
    %vm792 = vmor %vm790, %vm791
    %v793 = vsel %vm792, %v785, %v789
    %v794 = vand.u32 2147483647, %v784
    %vm795 = vcmp.eq.f32.partialorder %v794, 8.507059e+37
    %v796 = vand.u32 %v784, 2147483648
    %v797 = vor.u32 1.1754944e-38, %v796
    %v798 = vsel %vm795, %v797, %v793
    %v799 = vmul.f32 1.0, %v798
    %v800 = vtanh.pop %v780
    %v801 = vmul.f32 %v799, %v729
    %803 = vrot.lane.b32.xlu0 %v800, 64
    %v804 = vpop.permute.xlu0 %803
    %v806 = vmul.f32 %v799, %v804
    %808 = vrot.lane.b32.xlu0 %v806, 32
    %v809 = vpop.permute.xlu0 %808
    %v811 = vadd.f32 %v801, %v809
    %v812 = vtanh.pop %v811
    %814 = vrot.lane.b32.xlu0 %v812, 64
    %v815 = vpop.permute.xlu0 %814
    %v817 = vmul.f32 %v799, %v815
    %819 = vrot.lane.b32.xlu0 %v817, 32
    %v820 = vpop.permute.xlu0 %819
    %822 = vst.msk [vmem:[%s6 + $0xa] sm:$0x3] %vm418, %v820
    %823 = vst.msk [vmem:[%s105 + $0x2] sm:$0xc] %vm420, %v820
    %v824 = vld [vmem:[#allocation4 + $0x4] sm:$0x4]
    %v825 = vld [vmem:[#allocation5] sm:$0x2]
    %v827 = vunpack.c.l.b16 %v824
    %v828 = vpack.c.b16 %v827, %v827
    %v829 = vrot.slane %v828, 2
    %v832 = vsel %vm316, %v829, %v825
    %v834 = vunpack.c.l.bf16 %v832
    %835 = vrot.lane.b32.xlu0 %v817, 64
    %v836 = vpop.permute.xlu0 %835
    %v838 = vsel %vm326, %v820, %v836
    %v839 = vsel %vm307, %v838, 0.0
    %v840 = vadd.f32 %v834, %v299
    %v841 = vpack.c.bf16 %v839, %v839
    %v843 = vsel %vm355, %v841, 0
    %845 = vmatpush.bf16.msra.mxu0 0
    %846 = vmatpush.bf16.msra.mxu0 0
    %847 = vmatpush.bf16.msra.mxu0 0
    %848 = vmatpush.bf16.msra.mxu0 0
    %849 = vmatpush.bf16.msra.mxu0 %v350
    %850 = vmatpush.bf16.msra.mxu0 %v349
    %851 = vmatpush.bf16.msra.mxu0 %v348
    %852 = vmatpush.bf16.msra.mxu0 %v347
    %853 = vmatmul.bf16.gmra.mxu0 %v843
    %v854 = vpop.f32.mrf.mxu0
    %v855 = vadd.f32 0.0, %v854
    %v856 = vpop.f32.mrf.mxu0
    %857 = vdwg.mxu0
    %v858 = vadd.f32 %v840, %v855
    %v859 = vxor.u32 %v858, 2147483648
    %v860 = vmul.f32 %v859, 1.442695
    %v861 = vpow.pop %v860
    %v862 = vadd.f32 %v861, 1.0
    %v863 = vrcp.pop %v862
    %v864 = vmul.f32 %v862, %v863
    %v865 = vsub.f32 1.0, %v864
    %v866 = vmul.f32 %v863, %v865
    %v867 = vadd.f32 %v863, %v866
    %vm868 = vweird.f32 %v862
    %vm869 = vweird.f32 %v863
    %vm870 = vmor %vm868, %vm869
    %v871 = vsel %vm870, %v863, %v867
    %v872 = vand.u32 2147483647, %v862
    %vm873 = vcmp.eq.f32.partialorder %v872, 8.507059e+37
    %v874 = vand.u32 %v862, 2147483648
    %v875 = vor.u32 1.1754944e-38, %v874
    %v876 = vsel %vm873, %v875, %v871
    %v877 = vmul.f32 1.0, %v876
    %v878 = vtanh.pop %v858
    %v879 = vmul.f32 %v877, %v811
    %881 = vrot.lane.b32.xlu0 %v878, 64
    %v882 = vpop.permute.xlu0 %881
    %v884 = vmul.f32 %v877, %v882
    %886 = vrot.lane.b32.xlu0 %v884, 32
    %v887 = vpop.permute.xlu0 %886
    %v889 = vadd.f32 %v879, %v887
    %v890 = vtanh.pop %v889
    %892 = vrot.lane.b32.xlu0 %v890, 64
    %v893 = vpop.permute.xlu0 %892
    %v895 = vmul.f32 %v877, %v893
    %897 = vrot.lane.b32.xlu0 %v895, 32
    %v898 = vpop.permute.xlu0 %897
    %900 = vst.msk [vmem:[%s6 + $0xc] sm:$0x3] %vm418, %v898
    %901 = vst.msk [vmem:[%s105] sm:$0xc] %vm420, %v898
    %v902 = vld [vmem:[#allocation4 + $0x4] sm:$0x8]
    %v903 = vld [vmem:[#allocation5] sm:$0x1]
    %v905 = vunpack.c.l.b16 %v902
    %v906 = vpack.c.b16 %v905, %v905
    %v907 = vrot.slane %v906, 3
    %v909 = vunpack.c.l.b16 %v903
    %v910 = vpack.c.b16 %v909, %v909
    %v911 = vrot.slane %v910, 7
    %v914 = vsel %vm316, %v907, %v911
    %v916 = vunpack.c.l.bf16 %v914
    %917 = vrot.lane.b32.xlu0 %v895, 64
    %v918 = vpop.permute.xlu0 %917
    %v920 = vsel %vm326, %v898, %v918
    %v921 = vsel %vm307, %v920, 0.0
    %v922 = vadd.f32 %v916, %v299
    %v923 = vpack.c.bf16 %v921, %v921
    %v925 = vsel %vm355, %v923, 0
    %927 = vmatpush.bf16.msra.mxu0 0
    %928 = vmatpush.bf16.msra.mxu0 0
    %929 = vmatpush.bf16.msra.mxu0 0
    %930 = vmatpush.bf16.msra.mxu0 0
    %931 = vmatpush.bf16.msra.mxu0 %v350
    %932 = vmatpush.bf16.msra.mxu0 %v349
    %933 = vmatpush.bf16.msra.mxu0 %v348
    %934 = vmatpush.bf16.msra.mxu0 %v347
    %935 = vmatmul.bf16.gmra.mxu0 %v925
    %v936 = vpop.f32.mrf.mxu0
    %v937 = vadd.f32 0.0, %v936
    %v938 = vpop.f32.mrf.mxu0
    %939 = vdwg.mxu0
    %v940 = vadd.f32 %v922, %v937
    %v941 = vxor.u32 %v940, 2147483648
    %v942 = vmul.f32 %v941, 1.442695
    %v943 = vpow.pop %v942
    %v944 = vadd.f32 %v943, 1.0
    %v945 = vrcp.pop %v944
    %v946 = vmul.f32 %v944, %v945
    %v947 = vsub.f32 1.0, %v946
    %v948 = vmul.f32 %v945, %v947
    %v949 = vadd.f32 %v945, %v948
    %vm950 = vweird.f32 %v944
    %vm951 = vweird.f32 %v945
    %vm952 = vmor %vm950, %vm951
    %v953 = vsel %vm952, %v945, %v949
    %v954 = vand.u32 2147483647, %v944
    %vm955 = vcmp.eq.f32.partialorder %v954, 8.507059e+37
    %v956 = vand.u32 %v944, 2147483648
    %v957 = vor.u32 1.1754944e-38, %v956
    %v958 = vsel %vm955, %v957, %v953
    %v959 = vmul.f32 1.0, %v958
    %v960 = vtanh.pop %v940
    %v961 = vmul.f32 %v959, %v889
    %963 = vrot.lane.b32.xlu0 %v960, 64
    %v964 = vpop.permute.xlu0 %963
    %v966 = vmul.f32 %v959, %v964
    %968 = vrot.lane.b32.xlu0 %v966, 32
    %v969 = vpop.permute.xlu0 %968
    %v971 = vadd.f32 %v961, %v969
    %v972 = vtanh.pop %v971
    %974 = vrot.lane.b32.xlu0 %v972, 64
    %v975 = vpop.permute.xlu0 %974
    %v977 = vmul.f32 %v959, %v975
    %979 = vrot.lane.b32.xlu0 %v977, 32
    %v980 = vpop.permute.xlu0 %979
    %982 = vst.msk [vmem:[%s6 + $0xe] sm:$0x3] %vm418, %v980
    %983 = vst.msk [vmem:[%s105 - $0x2] sm:$0xc] %vm420, %v980
    %vm984 = vcmask 257024
    %985 = vst.msk [vmem:[#allocation2] sm:$0xf] %vm984, %v980
    %987 = vrot.lane.b32.xlu0 %v971, 96
    %v988 = vpop.permute.xlu0 %987
    %990 = vst.msk [vmem:[#allocation3] sm:$0xf] %vm984, %v988
    %s991 = ssub.s32 0, 0
    %s992 = smul.u32 2, %s991
    %p993 = scmp.lt.s32.totalorder %s992, 1
    %s994 = scalar_select %p993, %s992, 1
    %s995 = smul.addr %s994, 8
    %s996 = scalar_lea.vmem %s7, %s995
    // Predicated region
    $region42: #{speaker_encoder_forward.3} parent=1 // pred_check
      _
    $region43: #{speaker_encoder_forward.3} parent=1 // pred_check_branch
      %998 = sbr.rel (0) target = $region45
    $region44: #{speaker_encoder_forward.3} parent=1 // pred_region
      _
    $region45: #{speaker_encoder_forward.3} parent=1 // pred_fallthru
      _
    // Predicated region
    $region46: #{speaker_encoder_forward.3} parent=1 // pred_check
      _
    $region47: #{speaker_encoder_forward.3} parent=1 // pred_check_branch
      %1000 = sbr.rel (0) target = $region49
    $region48: #{speaker_encoder_forward.3} parent=1 // pred_region
      %s1001 = ssub.s32 0, 0
      %s1002 = smul.u32 2, %s1001
    $region49: #{speaker_encoder_forward.3} parent=1 // pred_fallthru
      _
    // Predicated region
    $region50: #{speaker_encoder_forward.3} parent=1 // pred_check
      _
    $region51: #{speaker_encoder_forward.3} parent=1 // pred_check_branch
      %1004 = sbr.rel (0) target = $region53
    $region52: #{speaker_encoder_forward.3} parent=1 // pred_region
      _
    $region53: #{speaker_encoder_forward.3} parent=1 // pred_fallthru
      _
    // Predicated region
    $region54: #{speaker_encoder_forward.3} parent=1 // pred_check
      _
    $region55: #{speaker_encoder_forward.3} parent=1 // pred_check_branch
      %1006 = sbr.rel (0) target = $region57
    $region56: #{speaker_encoder_forward.3} parent=1 // pred_region
      %s1007 = ssub.s32 0, 0
      %s1008 = smul.u32 2, %s1007
      %p1009 = scmp.lt.s32.totalorder %s1008, 1
      %s1010 = scalar_select %p1009, %s1008, 1
      %s1011 = smul.addr %s1010, 8
      %s1012 = scalar_lea.vmem %s7, %s1011
    $region57: #{speaker_encoder_forward.3} parent=1 // pred_fallthru
      _
    %1013 = vsyncpa [#allocation7], 1
    %1014 = vsyncpa [#allocation9], 1

// kernel: speaker_encoder_forward.5
$region0: #{speaker_encoder_forward.5}
  #allocation0 [shape = 'u32[]', space=smem, size = 0x4, offset = 0x4, fixed_abs, tag = 'smem constant byte address 0x4 - core index']
  #allocation1 [shape = 'u32[72,128]{1,0:T(1,128)}', space=vmem, size = 0x9000, scoped, tag = 'internal scratch']
  #allocation2 [shape = 'f32[4,32]{1,0:T(4,128)}', space=vmem, size = 0x800, scoped, tag = 'scratch operand']
  #allocation3 [shape = 'f32[4,32]{1,0:T(4,128)}', space=vmem, size = 0x800, scoped, tag = 'scratch operand']
  #allocation4 [shape = 'bf16[16,128]{1,0:T(8,128)(2,1)}', space=vmem, size = 0x1000, scoped, tag = 'scratch operand']
  #allocation5 [shape = 'bf16[16,128]{1,0:T(8,128)(2,1)}', space=vmem, size = 0x1000, scoped, tag = 'scratch operand']
  %s0 = inlined_call_operand.vmem [shape: bf16[16,64], index: 0, kind: input, shape index: {}, may-alias: {0,1}]
  %s1 = inlined_call_operand.vmem [shape: bf16[16,64], index: 1, kind: input, shape index: {}, may-alias: {0,1}]
  %s2 = inlined_call_operand.vmem [shape: bf16[64,128], index: 2, kind: input, shape index: {}]
  %s3 = inlined_call_operand.vmem [shape: bf16[64,128], index: 3, kind: input, shape index: {}]
  %s4 = inlined_call_operand.vmem [shape: bf16[64,128], index: 4, kind: input, shape index: {}]
  %s5 = inlined_call_operand.vmem [shape: f32[2,128], index: 5, kind: input, shape index: {}]
  %s6 = inlined_call_operand.vmem [shape: f32[16,32], index: 6, kind: output, shape index: {0}]
  %s7 = inlined_call_operand.vmem [shape: f32[16,32], index: 7, kind: output, shape index: {1}]
  %8 = xla_tuple %s6, %s7
  %s9 = sld [smem:[#allocation0]]
  $region46: #{speaker_encoder_forward.5} parent=0
    _
  %s11 = ssub.s32 1, %s9
  %s12 = scalar_select 0, %s11, %s9
  // Predicated region
  $region2: #{speaker_encoder_forward.5} parent=0 // pred_check
    _
  $region3: #{speaker_encoder_forward.5} parent=0 // pred_check_branch
    %14 = sbr.rel (0) target = $region5
  $region4: #{speaker_encoder_forward.5} parent=0 // pred_region
    _
  $region5: #{speaker_encoder_forward.5} parent=0 // pred_fallthru
    _
  // Predicated region
  $region6: #{speaker_encoder_forward.5} parent=0 // pred_check
    _
  $region7: #{speaker_encoder_forward.5} parent=0 // pred_check_branch
    %16 = sbr.rel (0) target = $region9
  $region8: #{speaker_encoder_forward.5} parent=0 // pred_region
    %s17 = ssub.s32 0, 0
    %s18 = smul.u32 2, %s17
    %p19 = scmp.lt.s32.totalorder %s18, 1
    %s20 = scalar_select %p19, %s18, 1
    %s21 = smul.addr %s20, 4
    %s22 = scalar_lea.vmem %s1, %s21
    %s23 = ssub.s32 0, 0
    %s24 = smul.u32 2, %s23
  $region9: #{speaker_encoder_forward.5} parent=0 // pred_fallthru
    _
  // Predicated region
  $region10: #{speaker_encoder_forward.5} parent=0 // pred_check
    _
  $region11: #{speaker_encoder_forward.5} parent=0 // pred_check_branch
    %26 = sbr.rel (0) target = $region13
  $region12: #{speaker_encoder_forward.5} parent=0 // pred_region
    _
  $region13: #{speaker_encoder_forward.5} parent=0 // pred_fallthru
    _
  // Predicated region
  $region14: #{speaker_encoder_forward.5} parent=0 // pred_check
    _
  $region15: #{speaker_encoder_forward.5} parent=0 // pred_check_branch
    %28 = sbr.rel (0) target = $region17
  $region16: #{speaker_encoder_forward.5} parent=0 // pred_region
    _
  $region17: #{speaker_encoder_forward.5} parent=0 // pred_fallthru
    _
  // Predicated region
  $region18: #{speaker_encoder_forward.5} parent=0 // pred_check
    _
  $region19: #{speaker_encoder_forward.5} parent=0 // pred_check_branch
    %30 = sbr.rel (0) target = $region21
  $region20: #{speaker_encoder_forward.5} parent=0 // pred_region
    _
  $region21: #{speaker_encoder_forward.5} parent=0 // pred_fallthru
    _
  // Predicated region
  $region22: #{speaker_encoder_forward.5} parent=0 // pred_check
    _
  $region23: #{speaker_encoder_forward.5} parent=0 // pred_check_branch
    %32 = sbr.rel (0) target = $region25
  $region24: #{speaker_encoder_forward.5} parent=0 // pred_region
    _
  $region25: #{speaker_encoder_forward.5} parent=0 // pred_fallthru
    _
  %s33 = ssub.s32 0, 0
  %s34 = smul.u32 2, %s33
  %p35 = scmp.lt.s32.totalorder %s34, 1
  %s36 = scalar_select %p35, %s34, 1
  %s37 = smul.addr %s36, 4
  %s38 = scalar_lea.vmem %s1, %s37
  %s39 = ssub.s32 0, 0
  %s40 = smul.u32 2, %s39
  %p41 = scmp.lt.s32.totalorder %s40, 1
  %s42 = scalar_select %p41, %s40, 1
  %s43 = smul.addr %s42, 8
  %s44 = scalar_lea.vmem %s7, %s43
  %s45 = ssub.s32 0, 0
  %s46 = smul.u32 2, %s45
  %p47 = scmp.lt.s32.totalorder %s46, 1
  %s48 = scalar_select %p47, %s46, 1
  %s49 = smul.addr %s48, 4
  %s50 = scalar_lea.vmem %s1, %s49
  %s51 = ssub.s32 0, 0
  %s52 = smul.u32 2, %s51
  %s53 = ssub.s32 0, 0
  %s54 = smul.u32 2, %s53
  %p55 = scmp.lt.s32.totalorder %s54, 1
  %s56 = scalar_select %p55, %s54, 1
  %s57 = smul.addr %s56, 8
  %s58 = scalar_lea.vmem %s7, %s57
  %s59 = ssub.s32 0, 0
  %s60 = smul.u32 2, %s59
  %p62 = scmp.eq.s32.totalorder 0, 0
  // Predicated region
  $region26: #{speaker_encoder_forward.5} parent=0 // pred_check
    %p63 = pneg %p62
  $region27: #{speaker_encoder_forward.5} parent=0 // pred_check_branch
    %65 = sbr.rel (%p63) target = $region29
  $region28: #{speaker_encoder_forward.5} parent=0 // pred_region
    %vm66 = vcmask 257024
    %67 = vst.msk [vmem:[#allocation2] sm:$0xf] %vm66, 0.0
    %68 = vst.msk [vmem:[#allocation3] sm:$0xf] %vm66, 0.0
  $region29: #{speaker_encoder_forward.5} parent=0 // pred_fallthru
    _
  %v69 = vld [vmem:[%s0] sm:$0xf]
  %v70 = vld [vmem:[%s0 + $0x4] sm:$0xf]
  %v71 = vld [vmem:[%s2] sm:$0xf]
  %v72 = vld [vmem:[%s2 + $0x4] sm:$0xf]
  %v73 = vld [vmem:[%s2 + $0x8] sm:$0xf]
  %v74 = vld [vmem:[%s2 + $0xc] sm:$0xf]
  %v75 = vld [vmem:[%s2 + $0x10] sm:$0xf]
  %v76 = vld [vmem:[%s2 + $0x14] sm:$0xf]
  %v77 = vld [vmem:[%s2 + $0x18] sm:$0xf]
  %v78 = vld [vmem:[%s2 + $0x1c] sm:$0xf]
  %v81 = vunpack.c.l.b16 %v69
  %v82 = vunpack.c.l.b16 %v70
  %v83 = vpack.c.b16 %v82, %v81
  %v92 = vunpack.c.l.b16 %v71
  %v93 = vunpack.c.l.b16 %v72
  %v94 = vunpack.c.l.b16 %v73
  %v95 = vunpack.c.l.b16 %v74
  %v96 = vunpack.c.l.b16 %v75
  %v97 = vunpack.c.l.b16 %v76
  %v98 = vunpack.c.l.b16 %v77
  %v99 = vunpack.c.l.b16 %v78
  %v100 = vpack.c.b16 %v93, %v92
  %v101 = vpack.c.b16 %v95, %v94
  %v102 = vpack.c.b16 %v97, %v96
  %v103 = vpack.c.b16 %v99, %v98
  %vm108 = vcmask 523264
  %v110 = vsel %vm108, %v83, 0
  %112 = vmatpush.bf16.msra.mxu0 0
  %113 = vmatpush.bf16.msra.mxu0 0
  %114 = vmatpush.bf16.msra.mxu0 0
  %115 = vmatpush.bf16.msra.mxu0 0
  %116 = vmatpush.bf16.msra.mxu0 %v103
  %117 = vmatpush.bf16.msra.mxu0 %v102
  %118 = vmatpush.bf16.msra.mxu0 %v101
  %119 = vmatpush.bf16.msra.mxu0 %v100
  %120 = vmatmul.bf16.gmra.mxu0 %v110
  %v121 = vpop.f32.mrf.mxu0
  %v122 = vadd.f32 0.0, %v121
  %v123 = vpop.f32.mrf.mxu0
  %v124 = vadd.f32 0.0, %v123
  %125 = vdwg.mxu0
  %v126 = vpack.c.bf16 %v122, %v122
  %v127 = vpack.c.bf16 %v124, %v124
  %128 = vst [vmem:[#allocation4] sm:$0xf] %v126
  %129 = vst [vmem:[#allocation4 + $0x4] sm:$0xf] %v127
  %v130 = vld [vmem:[%s50] sm:$0xf]
  %v131 = vld [vmem:[%s50 + $0x4] sm:$0xf]
  %v132 = vld [vmem:[%s3] sm:$0xf]
  %v133 = vld [vmem:[%s3 + $0x4] sm:$0xf]
  %v134 = vld [vmem:[%s3 + $0x8] sm:$0xf]
  %v135 = vld [vmem:[%s3 + $0xc] sm:$0xf]
  %v136 = vld [vmem:[%s3 + $0x10] sm:$0xf]
  %v137 = vld [vmem:[%s3 + $0x14] sm:$0xf]
  %v138 = vld [vmem:[%s3 + $0x18] sm:$0xf]
  %v139 = vld [vmem:[%s3 + $0x1c] sm:$0xf]
  %v142 = vunpack.c.l.b16 %v130
  %v143 = vunpack.c.l.b16 %v131
  %v144 = vpack.c.b16 %v143, %v142
  %v153 = vunpack.c.l.b16 %v132
  %v154 = vunpack.c.l.b16 %v133
  %v155 = vunpack.c.l.b16 %v134
  %v156 = vunpack.c.l.b16 %v135
  %v157 = vunpack.c.l.b16 %v136
  %v158 = vunpack.c.l.b16 %v137
  %v159 = vunpack.c.l.b16 %v138
  %v160 = vunpack.c.l.b16 %v139
  %v161 = vpack.c.b16 %v154, %v153
  %v162 = vpack.c.b16 %v156, %v155
  %v163 = vpack.c.b16 %v158, %v157
  %v164 = vpack.c.b16 %v160, %v159
  %v170 = vsel %vm108, %v144, 0
  %172 = vmatpush.bf16.msra.mxu0 0
  %173 = vmatpush.bf16.msra.mxu0 0
  %174 = vmatpush.bf16.msra.mxu0 0
  %175 = vmatpush.bf16.msra.mxu0 0
  %176 = vmatpush.bf16.msra.mxu0 %v164
  %177 = vmatpush.bf16.msra.mxu0 %v163
  %178 = vmatpush.bf16.msra.mxu0 %v162
  %179 = vmatpush.bf16.msra.mxu0 %v161
  %180 = vmatmul.bf16.gmra.mxu0 %v170
  %v181 = vpop.f32.mrf.mxu0
  %v182 = vadd.f32 0.0, %v181
  %v183 = vpop.f32.mrf.mxu0
  %v184 = vadd.f32 0.0, %v183
  %185 = vdwg.mxu0
  %v186 = vpack.c.bf16 %v182, %v182
  %v187 = vpack.c.bf16 %v184, %v184
  %188 = vst [vmem:[#allocation5] sm:$0xf] %v186
  %189 = vst [vmem:[#allocation5 + $0x4] sm:$0xf] %v187
  %v190 = vld [vmem:[%s4] sm:$0xf]
  %v191 = vld [vmem:[%s4 + $0x4] sm:$0xf]
  %v192 = vld [vmem:[%s4 + $0x8] sm:$0xf]
  %v193 = vld [vmem:[%s4 + $0xc] sm:$0xf]
  %v194 = vld [vmem:[%s4 + $0x10] sm:$0xf]
  %v195 = vld [vmem:[%s4 + $0x14] sm:$0xf]
  %v196 = vld [vmem:[%s4 + $0x18] sm:$0xf]
  %v197 = vld [vmem:[%s4 + $0x1c] sm:$0xf]
  %v198 = vld [vmem:[%s5] sm:$0x1]
  %v199 = vperm.slane %v198, 0
  %v200 = vld [vmem:[%s5 + $0x1] sm:$0x1]
  %v201 = vperm.slane %v200, 0
  %vm202 = vcmask 1041408
  %v203 = vsel %vm202, %v199, %v201
  %v204 = vlaneseq
  %v205 = vshrl.u32 %v204, 7
  %v206 = vlaneseq
  %v207 = vand.u32 %v206, 127
  %vm208 = vcmp.lt.s32.totalorder %v205, 2
  %vm209 = vcmp.lt.s32.totalorder %v207, 32
  %vm210 = vmxor %vm208, %vm209
  %vm211 = vmxor %vm210, 1
  %v212 = vld [vmem:[#allocation2] sm:$0xf]
  %v213 = vld [vmem:[#allocation3] sm:$0xf]
  %v214 = vld [vmem:[#allocation4] sm:$0x1]
  %v215 = vld [vmem:[#allocation5 + $0x4] sm:$0x8]
  %v217 = vunpack.c.l.b16 %v215
  %v218 = vpack.c.b16 %v217, %v217
  %v219 = vrot.slane %v218, 2
  %vm220 = vcmask 1040384
  %v223 = vsel %vm220, %v214, %v219
  %v225 = vunpack.c.l.bf16 %v223
  %227 = vrot.lane.b32.xlu0 %v212, 32
  %v228 = vpop.permute.xlu0 %227
  %vm230 = vcmask 261120
  %v231 = vsel %vm230, %v212, %v228
  %v232 = vsel %vm211, %v231, 0.0
  %v233 = vadd.f32 %v225, %v203
  %v234 = vpack.c.bf16 %v232, %v232
  %v243 = vunpack.c.l.b16 %v190
  %v244 = vunpack.c.l.b16 %v191
  %v245 = vunpack.c.l.b16 %v192
  %v246 = vunpack.c.l.b16 %v193
  %v247 = vunpack.c.l.b16 %v194
  %v248 = vunpack.c.l.b16 %v195
  %v249 = vunpack.c.l.b16 %v196
  %v250 = vunpack.c.l.b16 %v197
  %v251 = vpack.c.b16 %v244, %v243
  %v252 = vpack.c.b16 %v246, %v245
  %v253 = vpack.c.b16 %v248, %v247
  %v254 = vpack.c.b16 %v250, %v249
  %v260 = vsel %vm108, %v234, 0
  %262 = vmatpush.bf16.msra.mxu0 0
  %263 = vmatpush.bf16.msra.mxu0 0
  %264 = vmatpush.bf16.msra.mxu0 0
  %265 = vmatpush.bf16.msra.mxu0 0
  %266 = vmatpush.bf16.msra.mxu0 %v254
  %267 = vmatpush.bf16.msra.mxu0 %v253
  %268 = vmatpush.bf16.msra.mxu0 %v252
  %269 = vmatpush.bf16.msra.mxu0 %v251
  %270 = vmatmul.bf16.gmra.mxu0 %v260
  %v271 = vpop.f32.mrf.mxu0
  %v272 = vadd.f32 0.0, %v271
  %v273 = vpop.f32.mrf.mxu0
  %274 = vdwg.mxu0
  %v275 = vadd.f32 %v233, %v272
  %v276 = vxor.u32 %v275, 2147483648
  %v277 = vmul.f32 %v276, 1.442695
  %v278 = vpow.pop %v277
  %v279 = vadd.f32 %v278, 1.0
  %v280 = vrcp.pop %v279
  %v281 = vmul.f32 %v279, %v280
  %v282 = vsub.f32 1.0, %v281
  %v283 = vmul.f32 %v280, %v282
  %v284 = vadd.f32 %v280, %v283
  %vm285 = vweird.f32 %v279
  %vm286 = vweird.f32 %v280
  %vm287 = vmor %vm285, %vm286
  %v288 = vsel %vm287, %v280, %v284
  %v289 = vand.u32 2147483647, %v279
  %vm290 = vcmp.eq.f32.partialorder %v289, 8.507059e+37
  %v291 = vand.u32 %v279, 2147483648
  %v292 = vor.u32 1.1754944e-38, %v291
  %v293 = vsel %vm290, %v292, %v288
  %v294 = vmul.f32 1.0, %v293
  %v295 = vtanh.pop %v275
  %297 = vrot.lane.b32.xlu0 %v213, 32
  %v298 = vpop.permute.xlu0 %297
  %v300 = vmul.f32 %v294, %v298
  %302 = vrot.lane.b32.xlu0 %v295, 64
  %v303 = vpop.permute.xlu0 %302
  %v305 = vmul.f32 %v294, %v303
  %307 = vrot.lane.b32.xlu0 %v305, 32
  %v308 = vpop.permute.xlu0 %307
  %v310 = vadd.f32 %v300, %v308
  %v311 = vtanh.pop %v310
  %313 = vrot.lane.b32.xlu0 %v311, 64
  %v314 = vpop.permute.xlu0 %313
  %v316 = vmul.f32 %v294, %v314
  %318 = vrot.lane.b32.xlu0 %v316, 32
  %v319 = vpop.permute.xlu0 %318
  %vm321 = vcmask 254976
  %322 = vst.msk [vmem:[%s6] sm:$0x3] %vm321, %v319
  %vm323 = vcmask 257026
  %324 = vst.msk [vmem:[%s58 + $0xc] sm:$0xc] %vm323, %v319
  %v325 = vld [vmem:[#allocation4] sm:$0x2]
  %v326 = vld [vmem:[#allocation5 + $0x4] sm:$0x4]
  %v328 = vunpack.c.l.b16 %v325
  %v329 = vpack.c.b16 %v328, %v328
  %v330 = vrot.slane %v329, 1
  %v332 = vunpack.c.l.b16 %v326
  %v333 = vpack.c.b16 %v332, %v332
  %v334 = vrot.slane %v333, 1
  %v337 = vsel %vm220, %v330, %v334
  %v339 = vunpack.c.l.bf16 %v337
  %340 = vrot.lane.b32.xlu0 %v316, 64
  %v341 = vpop.permute.xlu0 %340
  %v343 = vsel %vm230, %v319, %v341
  %v344 = vsel %vm211, %v343, 0.0
  %v345 = vadd.f32 %v339, %v203
  %v346 = vpack.c.bf16 %v344, %v344
  %v348 = vsel %vm108, %v346, 0
  %350 = vmatpush.bf16.msra.mxu0 0
  %351 = vmatpush.bf16.msra.mxu0 0
  %352 = vmatpush.bf16.msra.mxu0 0
  %353 = vmatpush.bf16.msra.mxu0 0
  %354 = vmatpush.bf16.msra.mxu0 %v254
  %355 = vmatpush.bf16.msra.mxu0 %v253
  %356 = vmatpush.bf16.msra.mxu0 %v252
  %357 = vmatpush.bf16.msra.mxu0 %v251
  %358 = vmatmul.bf16.gmra.mxu0 %v348
  %v359 = vpop.f32.mrf.mxu0
  %v360 = vadd.f32 0.0, %v359
  %v361 = vpop.f32.mrf.mxu0
  %362 = vdwg.mxu0
  %v363 = vadd.f32 %v345, %v360
  %v364 = vxor.u32 %v363, 2147483648
  %v365 = vmul.f32 %v364, 1.442695
  %v366 = vpow.pop %v365
  %v367 = vadd.f32 %v366, 1.0
  %v368 = vrcp.pop %v367
  %v369 = vmul.f32 %v367, %v368
  %v370 = vsub.f32 1.0, %v369
  %v371 = vmul.f32 %v368, %v370
  %v372 = vadd.f32 %v368, %v371
  %vm373 = vweird.f32 %v367
  %vm374 = vweird.f32 %v368
  %vm375 = vmor %vm373, %vm374
  %v376 = vsel %vm375, %v368, %v372
  %v377 = vand.u32 2147483647, %v367
  %vm378 = vcmp.eq.f32.partialorder %v377, 8.507059e+37
  %v379 = vand.u32 %v367, 2147483648
  %v380 = vor.u32 1.1754944e-38, %v379
  %v381 = vsel %vm378, %v380, %v376
  %v382 = vmul.f32 1.0, %v381
  %v383 = vtanh.pop %v363
  %v384 = vmul.f32 %v382, %v310
  %386 = vrot.lane.b32.xlu0 %v383, 64
  %v387 = vpop.permute.xlu0 %386
  %v389 = vmul.f32 %v382, %v387
  %391 = vrot.lane.b32.xlu0 %v389, 32
  %v392 = vpop.permute.xlu0 %391
  %v394 = vadd.f32 %v384, %v392
  %v395 = vtanh.pop %v394
  %397 = vrot.lane.b32.xlu0 %v395, 64
  %v398 = vpop.permute.xlu0 %397
  %v400 = vmul.f32 %v382, %v398
  %402 = vrot.lane.b32.xlu0 %v400, 32
  %v403 = vpop.permute.xlu0 %402
  %405 = vst.msk [vmem:[%s6 + $0x2] sm:$0x3] %vm321, %v403
  %406 = vst.msk [vmem:[%s58 + $0xa] sm:$0xc] %vm323, %v403
  %v407 = vld [vmem:[#allocation4] sm:$0x4]
  %v408 = vld [vmem:[#allocation5 + $0x4] sm:$0x2]
  %v410 = vunpack.c.l.b16 %v407
  %v411 = vpack.c.b16 %v410, %v410
  %v412 = vrot.slane %v411, 2
  %v415 = vsel %vm220, %v412, %v408
  %v417 = vunpack.c.l.bf16 %v415
  %418 = vrot.lane.b32.xlu0 %v400, 64
  %v419 = vpop.permute.xlu0 %418
  %v421 = vsel %vm230, %v403, %v419
  %v422 = vsel %vm211, %v421, 0.0
  %v423 = vadd.f32 %v417, %v203
  %v424 = vpack.c.bf16 %v422, %v422
  %v426 = vsel %vm108, %v424, 0
  %428 = vmatpush.bf16.msra.mxu0 0
  %429 = vmatpush.bf16.msra.mxu0 0
  %430 = vmatpush.bf16.msra.mxu0 0
  %431 = vmatpush.bf16.msra.mxu0 0
  %432 = vmatpush.bf16.msra.mxu0 %v254
  %433 = vmatpush.bf16.msra.mxu0 %v253
  %434 = vmatpush.bf16.msra.mxu0 %v252
  %435 = vmatpush.bf16.msra.mxu0 %v251
  %436 = vmatmul.bf16.gmra.mxu0 %v426
  %v437 = vpop.f32.mrf.mxu0
  %v438 = vadd.f32 0.0, %v437
  %v439 = vpop.f32.mrf.mxu0
  %440 = vdwg.mxu0
  %v441 = vadd.f32 %v423, %v438
  %v442 = vxor.u32 %v441, 2147483648
  %v443 = vmul.f32 %v442, 1.442695
  %v444 = vpow.pop %v443
  %v445 = vadd.f32 %v444, 1.0
  %v446 = vrcp.pop %v445
  %v447 = vmul.f32 %v445, %v446
  %v448 = vsub.f32 1.0, %v447
  %v449 = vmul.f32 %v446, %v448
  %v450 = vadd.f32 %v446, %v449
  %vm451 = vweird.f32 %v445
  %vm452 = vweird.f32 %v446
  %vm453 = vmor %vm451, %vm452
  %v454 = vsel %vm453, %v446, %v450
  %v455 = vand.u32 2147483647, %v445
  %vm456 = vcmp.eq.f32.partialorder %v455, 8.507059e+37
  %v457 = vand.u32 %v445, 2147483648
  %v458 = vor.u32 1.1754944e-38, %v457
  %v459 = vsel %vm456, %v458, %v454
  %v460 = vmul.f32 1.0, %v459
  %v461 = vtanh.pop %v441
  %v462 = vmul.f32 %v460, %v394
  %464 = vrot.lane.b32.xlu0 %v461, 64
  %v465 = vpop.permute.xlu0 %464
  %v467 = vmul.f32 %v460, %v465
  %469 = vrot.lane.b32.xlu0 %v467, 32
  %v470 = vpop.permute.xlu0 %469
  %v472 = vadd.f32 %v462, %v470
  %v473 = vtanh.pop %v472
  %475 = vrot.lane.b32.xlu0 %v473, 64
  %v476 = vpop.permute.xlu0 %475
  %v478 = vmul.f32 %v460, %v476
  %480 = vrot.lane.b32.xlu0 %v478, 32
  %v481 = vpop.permute.xlu0 %480
  %483 = vst.msk [vmem:[%s6 + $0x4] sm:$0x3] %vm321, %v481
  %484 = vst.msk [vmem:[%s58 + $0x8] sm:$0xc] %vm323, %v481
  %v485 = vld [vmem:[#allocation4] sm:$0x8]
  %v486 = vld [vmem:[#allocation5 + $0x4] sm:$0x1]
  %v488 = vunpack.c.l.b16 %v485
  %v489 = vpack.c.b16 %v488, %v488
  %v490 = vrot.slane %v489, 3
  %v492 = vunpack.c.l.b16 %v486
  %v493 = vpack.c.b16 %v492, %v492
  %v494 = vrot.slane %v493, 7
  %v497 = vsel %vm220, %v490, %v494
  %v499 = vunpack.c.l.bf16 %v497
  %500 = vrot.lane.b32.xlu0 %v478, 64
  %v501 = vpop.permute.xlu0 %500
  %v503 = vsel %vm230, %v481, %v501
  %v504 = vsel %vm211, %v503, 0.0
  %v505 = vadd.f32 %v499, %v203
  %v506 = vpack.c.bf16 %v504, %v504
  %v508 = vsel %vm108, %v506, 0
  %510 = vmatpush.bf16.msra.mxu0 0
  %511 = vmatpush.bf16.msra.mxu0 0
  %512 = vmatpush.bf16.msra.mxu0 0
  %513 = vmatpush.bf16.msra.mxu0 0
  %514 = vmatpush.bf16.msra.mxu0 %v254
  %515 = vmatpush.bf16.msra.mxu0 %v253
  %516 = vmatpush.bf16.msra.mxu0 %v252
  %517 = vmatpush.bf16.msra.mxu0 %v251
  %518 = vmatmul.bf16.gmra.mxu0 %v508
  %v519 = vpop.f32.mrf.mxu0
  %v520 = vadd.f32 0.0, %v519
  %v521 = vpop.f32.mrf.mxu0
  %522 = vdwg.mxu0
  %v523 = vadd.f32 %v505, %v520
  %v524 = vxor.u32 %v523, 2147483648
  %v525 = vmul.f32 %v524, 1.442695
  %v526 = vpow.pop %v525
  %v527 = vadd.f32 %v526, 1.0
  %v528 = vrcp.pop %v527
  %v529 = vmul.f32 %v527, %v528
  %v530 = vsub.f32 1.0, %v529
  %v531 = vmul.f32 %v528, %v530
  %v532 = vadd.f32 %v528, %v531
  %vm533 = vweird.f32 %v527
  %vm534 = vweird.f32 %v528
  %vm535 = vmor %vm533, %vm534
  %v536 = vsel %vm535, %v528, %v532
  %v537 = vand.u32 2147483647, %v527
  %vm538 = vcmp.eq.f32.partialorder %v537, 8.507059e+37
  %v539 = vand.u32 %v527, 2147483648
  %v540 = vor.u32 1.1754944e-38, %v539
  %v541 = vsel %vm538, %v540, %v536
  %v542 = vmul.f32 1.0, %v541
  %v543 = vtanh.pop %v523
  %v544 = vmul.f32 %v542, %v472
  %546 = vrot.lane.b32.xlu0 %v543, 64
  %v547 = vpop.permute.xlu0 %546
  %v549 = vmul.f32 %v542, %v547
  %551 = vrot.lane.b32.xlu0 %v549, 32
  %v552 = vpop.permute.xlu0 %551
  %v554 = vadd.f32 %v544, %v552
  %v555 = vtanh.pop %v554
  %557 = vrot.lane.b32.xlu0 %v555, 64
  %v558 = vpop.permute.xlu0 %557
  %v560 = vmul.f32 %v542, %v558
  %562 = vrot.lane.b32.xlu0 %v560, 32
  %v563 = vpop.permute.xlu0 %562
  %565 = vst.msk [vmem:[%s6 + $0x6] sm:$0x3] %vm321, %v563
  %566 = vst.msk [vmem:[%s58 + $0x6] sm:$0xc] %vm323, %v563
  %v567 = vld [vmem:[#allocation4 + $0x4] sm:$0x1]
  %v568 = vld [vmem:[#allocation5] sm:$0x8]
  %v570 = vunpack.c.l.b16 %v568
  %v571 = vpack.c.b16 %v570, %v570
  %v572 = vrot.slane %v571, 2
  %v575 = vsel %vm220, %v567, %v572
  %v577 = vunpack.c.l.bf16 %v575
  %578 = vrot.lane.b32.xlu0 %v560, 64
  %v579 = vpop.permute.xlu0 %578
  %v581 = vsel %vm230, %v563, %v579
  %v582 = vsel %vm211, %v581, 0.0
  %v583 = vadd.f32 %v577, %v203
  %v584 = vpack.c.bf16 %v582, %v582
  %v586 = vsel %vm108, %v584, 0
  %588 = vmatpush.bf16.msra.mxu0 0
  %589 = vmatpush.bf16.msra.mxu0 0
  %590 = vmatpush.bf16.msra.mxu0 0
  %591 = vmatpush.bf16.msra.mxu0 0
  %592 = vmatpush.bf16.msra.mxu0 %v254
  %593 = vmatpush.bf16.msra.mxu0 %v253
  %594 = vmatpush.bf16.msra.mxu0 %v252
  %595 = vmatpush.bf16.msra.mxu0 %v251
  %596 = vmatmul.bf16.gmra.mxu0 %v586
  %v597 = vpop.f32.mrf.mxu0
  %v598 = vadd.f32 0.0, %v597
  %v599 = vpop.f32.mrf.mxu0
  %600 = vdwg.mxu0
  %v601 = vadd.f32 %v583, %v598
  %v602 = vxor.u32 %v601, 2147483648
  %v603 = vmul.f32 %v602, 1.442695
  %v604 = vpow.pop %v603
  %v605 = vadd.f32 %v604, 1.0
  %v606 = vrcp.pop %v605
  %v607 = vmul.f32 %v605, %v606
  %v608 = vsub.f32 1.0, %v607
  %v609 = vmul.f32 %v606, %v608
  %v610 = vadd.f32 %v606, %v609
  %vm611 = vweird.f32 %v605
  %vm612 = vweird.f32 %v606
  %vm613 = vmor %vm611, %vm612
  %v614 = vsel %vm613, %v606, %v610
  %v615 = vand.u32 2147483647, %v605
  %vm616 = vcmp.eq.f32.partialorder %v615, 8.507059e+37
  %v617 = vand.u32 %v605, 2147483648
  %v618 = vor.u32 1.1754944e-38, %v617
  %v619 = vsel %vm616, %v618, %v614
  %v620 = vmul.f32 1.0, %v619
  %v621 = vtanh.pop %v601
  %v622 = vmul.f32 %v620, %v554
  %624 = vrot.lane.b32.xlu0 %v621, 64
  %v625 = vpop.permute.xlu0 %624
  %v627 = vmul.f32 %v620, %v625
  %629 = vrot.lane.b32.xlu0 %v627, 32
  %v630 = vpop.permute.xlu0 %629
  %v632 = vadd.f32 %v622, %v630
  %v633 = vtanh.pop %v632
  %635 = vrot.lane.b32.xlu0 %v633, 64
  %v636 = vpop.permute.xlu0 %635
  %v638 = vmul.f32 %v620, %v636
  %640 = vrot.lane.b32.xlu0 %v638, 32
  %v641 = vpop.permute.xlu0 %640
  %643 = vst.msk [vmem:[%s6 + $0x8] sm:$0x3] %vm321, %v641
  %644 = vst.msk [vmem:[%s58 + $0x4] sm:$0xc] %vm323, %v641
  %v645 = vld [vmem:[#allocation4 + $0x4] sm:$0x2]
  %v646 = vld [vmem:[#allocation5] sm:$0x4]
  %v648 = vunpack.c.l.b16 %v645
  %v649 = vpack.c.b16 %v648, %v648
  %v650 = vrot.slane %v649, 1
  %v652 = vunpack.c.l.b16 %v646
  %v653 = vpack.c.b16 %v652, %v652
  %v654 = vrot.slane %v653, 1
  %v657 = vsel %vm220, %v650, %v654
  %v659 = vunpack.c.l.bf16 %v657
  %660 = vrot.lane.b32.xlu0 %v638, 64
  %v661 = vpop.permute.xlu0 %660
  %v663 = vsel %vm230, %v641, %v661
  %v664 = vsel %vm211, %v663, 0.0
  %v665 = vadd.f32 %v659, %v203
  %v666 = vpack.c.bf16 %v664, %v664
  %v668 = vsel %vm108, %v666, 0
  %670 = vmatpush.bf16.msra.mxu0 0
  %671 = vmatpush.bf16.msra.mxu0 0
  %672 = vmatpush.bf16.msra.mxu0 0
  %673 = vmatpush.bf16.msra.mxu0 0
  %674 = vmatpush.bf16.msra.mxu0 %v254
  %675 = vmatpush.bf16.msra.mxu0 %v253
  %676 = vmatpush.bf16.msra.mxu0 %v252
  %677 = vmatpush.bf16.msra.mxu0 %v251
  %678 = vmatmul.bf16.gmra.mxu0 %v668
  %v679 = vpop.f32.mrf.mxu0
  %v680 = vadd.f32 0.0, %v679
  %v681 = vpop.f32.mrf.mxu0
  %682 = vdwg.mxu0
  %v683 = vadd.f32 %v665, %v680
  %v684 = vxor.u32 %v683, 2147483648
  %v685 = vmul.f32 %v684, 1.442695
  %v686 = vpow.pop %v685
  %v687 = vadd.f32 %v686, 1.0
  %v688 = vrcp.pop %v687
  %v689 = vmul.f32 %v687, %v688
  %v690 = vsub.f32 1.0, %v689
  %v691 = vmul.f32 %v688, %v690
  %v692 = vadd.f32 %v688, %v691
  %vm693 = vweird.f32 %v687
  %vm694 = vweird.f32 %v688
  %vm695 = vmor %vm693, %vm694
  %v696 = vsel %vm695, %v688, %v692
  %v697 = vand.u32 2147483647, %v687
  %vm698 = vcmp.eq.f32.partialorder %v697, 8.507059e+37
  %v699 = vand.u32 %v687, 2147483648
  %v700 = vor.u32 1.1754944e-38, %v699
  %v701 = vsel %vm698, %v700, %v696
  %v702 = vmul.f32 1.0, %v701
  %v703 = vtanh.pop %v683
  %v704 = vmul.f32 %v702, %v632
  %706 = vrot.lane.b32.xlu0 %v703, 64
  %v707 = vpop.permute.xlu0 %706
  %v709 = vmul.f32 %v702, %v707
  %711 = vrot.lane.b32.xlu0 %v709, 32
  %v712 = vpop.permute.xlu0 %711
  %v714 = vadd.f32 %v704, %v712
  %v715 = vtanh.pop %v714
  %717 = vrot.lane.b32.xlu0 %v715, 64
  %v718 = vpop.permute.xlu0 %717
  %v720 = vmul.f32 %v702, %v718
  %722 = vrot.lane.b32.xlu0 %v720, 32
  %v723 = vpop.permute.xlu0 %722
  %725 = vst.msk [vmem:[%s6 + $0xa] sm:$0x3] %vm321, %v723
  %726 = vst.msk [vmem:[%s58 + $0x2] sm:$0xc] %vm323, %v723
  %v727 = vld [vmem:[#allocation4 + $0x4] sm:$0x4]
  %v728 = vld [vmem:[#allocation5] sm:$0x2]
  %v730 = vunpack.c.l.b16 %v727
  %v731 = vpack.c.b16 %v730, %v730
  %v732 = vrot.slane %v731, 2
  %v735 = vsel %vm220, %v732, %v728
  %v737 = vunpack.c.l.bf16 %v735
  %738 = vrot.lane.b32.xlu0 %v720, 64
  %v739 = vpop.permute.xlu0 %738
  %v741 = vsel %vm230, %v723, %v739
  %v742 = vsel %vm211, %v741, 0.0
  %v743 = vadd.f32 %v737, %v203
  %v744 = vpack.c.bf16 %v742, %v742
  %v746 = vsel %vm108, %v744, 0
  %748 = vmatpush.bf16.msra.mxu0 0
  %749 = vmatpush.bf16.msra.mxu0 0
  %750 = vmatpush.bf16.msra.mxu0 0
  %751 = vmatpush.bf16.msra.mxu0 0
  %752 = vmatpush.bf16.msra.mxu0 %v254
  %753 = vmatpush.bf16.msra.mxu0 %v253
  %754 = vmatpush.bf16.msra.mxu0 %v252
  %755 = vmatpush.bf16.msra.mxu0 %v251
  %756 = vmatmul.bf16.gmra.mxu0 %v746
  %v757 = vpop.f32.mrf.mxu0
  %v758 = vadd.f32 0.0, %v757
  %v759 = vpop.f32.mrf.mxu0
  %760 = vdwg.mxu0
  %v761 = vadd.f32 %v743, %v758
  %v762 = vxor.u32 %v761, 2147483648
  %v763 = vmul.f32 %v762, 1.442695
  %v764 = vpow.pop %v763
  %v765 = vadd.f32 %v764, 1.0
  %v766 = vrcp.pop %v765
  %v767 = vmul.f32 %v765, %v766
  %v768 = vsub.f32 1.0, %v767
  %v769 = vmul.f32 %v766, %v768
  %v770 = vadd.f32 %v766, %v769
  %vm771 = vweird.f32 %v765
  %vm772 = vweird.f32 %v766
  %vm773 = vmor %vm771, %vm772
  %v774 = vsel %vm773, %v766, %v770
  %v775 = vand.u32 2147483647, %v765
  %vm776 = vcmp.eq.f32.partialorder %v775, 8.507059e+37
  %v777 = vand.u32 %v765, 2147483648
  %v778 = vor.u32 1.1754944e-38, %v777
  %v779 = vsel %vm776, %v778, %v774
  %v780 = vmul.f32 1.0, %v779
  %v781 = vtanh.pop %v761
  %v782 = vmul.f32 %v780, %v714
  %784 = vrot.lane.b32.xlu0 %v781, 64
  %v785 = vpop.permute.xlu0 %784
  %v787 = vmul.f32 %v780, %v785
  %789 = vrot.lane.b32.xlu0 %v787, 32
  %v790 = vpop.permute.xlu0 %789
  %v792 = vadd.f32 %v782, %v790
  %v793 = vtanh.pop %v792
  %795 = vrot.lane.b32.xlu0 %v793, 64
  %v796 = vpop.permute.xlu0 %795
  %v798 = vmul.f32 %v780, %v796
  %800 = vrot.lane.b32.xlu0 %v798, 32
  %v801 = vpop.permute.xlu0 %800
  %803 = vst.msk [vmem:[%s6 + $0xc] sm:$0x3] %vm321, %v801
  %804 = vst.msk [vmem:[%s58] sm:$0xc] %vm323, %v801
  %v805 = vld [vmem:[#allocation4 + $0x4] sm:$0x8]
  %v806 = vld [vmem:[#allocation5] sm:$0x1]
  %v808 = vunpack.c.l.b16 %v805
  %v809 = vpack.c.b16 %v808, %v808
  %v810 = vrot.slane %v809, 3
  %v812 = vunpack.c.l.b16 %v806
  %v813 = vpack.c.b16 %v812, %v812
  %v814 = vrot.slane %v813, 7
  %v817 = vsel %vm220, %v810, %v814
  %v819 = vunpack.c.l.bf16 %v817
  %820 = vrot.lane.b32.xlu0 %v798, 64
  %v821 = vpop.permute.xlu0 %820
  %v823 = vsel %vm230, %v801, %v821
  %v824 = vsel %vm211, %v823, 0.0
  %v825 = vadd.f32 %v819, %v203
  %v826 = vpack.c.bf16 %v824, %v824
  %v828 = vsel %vm108, %v826, 0
  %830 = vmatpush.bf16.msra.mxu0 0
  %831 = vmatpush.bf16.msra.mxu0 0
  %832 = vmatpush.bf16.msra.mxu0 0
  %833 = vmatpush.bf16.msra.mxu0 0
  %834 = vmatpush.bf16.msra.mxu0 %v254
  %835 = vmatpush.bf16.msra.mxu0 %v253
  %836 = vmatpush.bf16.msra.mxu0 %v252
  %837 = vmatpush.bf16.msra.mxu0 %v251
  %838 = vmatmul.bf16.gmra.mxu0 %v828
  %v839 = vpop.f32.mrf.mxu0
  %v840 = vadd.f32 0.0, %v839
  %v841 = vpop.f32.mrf.mxu0
  %842 = vdwg.mxu0
  %v843 = vadd.f32 %v825, %v840
  %v844 = vxor.u32 %v843, 2147483648
  %v845 = vmul.f32 %v844, 1.442695
  %v846 = vpow.pop %v845
  %v847 = vadd.f32 %v846, 1.0
  %v848 = vrcp.pop %v847
  %v849 = vmul.f32 %v847, %v848
  %v850 = vsub.f32 1.0, %v849
  %v851 = vmul.f32 %v848, %v850
  %v852 = vadd.f32 %v848, %v851
  %vm853 = vweird.f32 %v847
  %vm854 = vweird.f32 %v848
  %vm855 = vmor %vm853, %vm854
  %v856 = vsel %vm855, %v848, %v852
  %v857 = vand.u32 2147483647, %v847
  %vm858 = vcmp.eq.f32.partialorder %v857, 8.507059e+37
  %v859 = vand.u32 %v847, 2147483648
  %v860 = vor.u32 1.1754944e-38, %v859
  %v861 = vsel %vm858, %v860, %v856
  %v862 = vmul.f32 1.0, %v861
  %v863 = vtanh.pop %v843
  %v864 = vmul.f32 %v862, %v792
  %866 = vrot.lane.b32.xlu0 %v863, 64
  %v867 = vpop.permute.xlu0 %866
  %v869 = vmul.f32 %v862, %v867
  %871 = vrot.lane.b32.xlu0 %v869, 32
  %v872 = vpop.permute.xlu0 %871
  %v874 = vadd.f32 %v864, %v872
  %v875 = vtanh.pop %v874
  %877 = vrot.lane.b32.xlu0 %v875, 64
  %v878 = vpop.permute.xlu0 %877
  %v880 = vmul.f32 %v862, %v878
  %882 = vrot.lane.b32.xlu0 %v880, 32
  %v883 = vpop.permute.xlu0 %882
  %885 = vst.msk [vmem:[%s6 + $0xe] sm:$0x3] %vm321, %v883
  %886 = vst.msk [vmem:[%s58 - $0x2] sm:$0xc] %vm323, %v883
  %vm887 = vcmask 257024
  %888 = vst.msk [vmem:[#allocation2] sm:$0xf] %vm887, %v883
  %890 = vrot.lane.b32.xlu0 %v874, 96
  %v891 = vpop.permute.xlu0 %890
  %893 = vst.msk [vmem:[#allocation3] sm:$0xf] %vm887, %v891
  %s894 = ssub.s32 0, 0
  %s895 = smul.u32 2, %s894
  %p896 = scmp.lt.s32.totalorder %s895, 1
  %s897 = scalar_select %p896, %s895, 1
  %s898 = smul.addr %s897, 8
  %s899 = scalar_lea.vmem %s7, %s898
  // Predicated region
  $region30: #{speaker_encoder_forward.5} parent=0 // pred_check
    _
  $region31: #{speaker_encoder_forward.5} parent=0 // pred_check_branch
    %901 = sbr.rel (0) target = $region33
  $region32: #{speaker_encoder_forward.5} parent=0 // pred_region
    _
  $region33: #{speaker_encoder_forward.5} parent=0 // pred_fallthru
    _
  // Predicated region
  $region34: #{speaker_encoder_forward.5} parent=0 // pred_check
    _
  $region35: #{speaker_encoder_forward.5} parent=0 // pred_check_branch
    %903 = sbr.rel (0) target = $region37
  $region36: #{speaker_encoder_forward.5} parent=0 // pred_region
    %s904 = ssub.s32 0, 0
    %s905 = smul.u32 2, %s904
  $region37: #{speaker_encoder_forward.5} parent=0 // pred_fallthru
    _
  // Predicated region
  $region38: #{speaker_encoder_forward.5} parent=0 // pred_check
    _
  $region39: #{speaker_encoder_forward.5} parent=0 // pred_check_branch
    %907 = sbr.rel (0) target = $region41
  $region40: #{speaker_encoder_forward.5} parent=0 // pred_region
    _
  $region41: #{speaker_encoder_forward.5} parent=0 // pred_fallthru
    _
  // Predicated region
  $region42: #{speaker_encoder_forward.5} parent=0 // pred_check
    _
  $region43: #{speaker_encoder_forward.5} parent=0 // pred_check_branch
    %909 = sbr.rel (0) target = $region45
  $region44: #{speaker_encoder_forward.5} parent=0 // pred_region
    %s910 = ssub.s32 0, 0
    %s911 = smul.u32 2, %s910
    %p912 = scmp.lt.s32.totalorder %s911, 1
    %s913 = scalar_select %p912, %s911, 1
    %s914 = smul.addr %s913, 8
    %s915 = scalar_lea.vmem %s7, %s914
  $region45: #{speaker_encoder_forward.5} parent=0 // pred_fallthru
    _

</llo_original>
